<compile_context>
chip_gen: v5e
topology: v5e:2x2
jax: 0.10.0
libtpu: 0.0.40
codegen_flags: <defaults>
</compile_context>

<pallas_src>
import jax
import jax.numpy as jnp
from jax.experimental import pallas as pl
from jax.experimental.pallas import tpu as pltpu

_LANE = 128
_TN_MAX = 32768            # lane-tile cap: x/y/w double-buffered ~6 MiB of VMEM


def _cdiv(a, b):
    return -(-a // b)


def _round_up(a, m):
    return _cdiv(a, m) * m


# Moment-slab column layout (lanes of the (3, 128) accumulator / output):
#   [:, 0:3]   sum x_i * y_j     (unweighted cross moments; row=i, col=j)
#   [:, 3]     sum x_i
#   [:, 4]     sum y_i
#   [:, 5]     sum x_i^2
#   [:, 6]     sum y_i^2
#   [:, 7:10]  sum w * x_i * y_j (weighted cross moments)
#   [:, 10]    sum w * x_i
#   [:, 11]    sum w * y_i
#   [0, 12]    sum w
def _moments_body(x_ref, y_ref, w_ref, out_ref, acc_ref):
    k = pl.program_id(2)

    @pl.when(k == 0)
    def _():
        acc_ref[...] = jnp.zeros_like(acc_ref)

    x = x_ref[0]                                   # (3, TN)  lane-dense
    y = y_ref[0]                                   # (3, TN)

    # Unweighted raw moments (always needed: they feed the closed-form loss).
    for j in range(3):                             # 9 VPU mul + lane-reduce
        acc_ref[:, j:j + 1] += jnp.sum(x * y[j:j + 1, :], axis=1, keepdims=True)
    acc_ref[:, 3:4] += jnp.sum(x, axis=1, keepdims=True)
    acc_ref[:, 4:5] += jnp.sum(y, axis=1, keepdims=True)
    acc_ref[:, 5:6] += jnp.sum(x * x, axis=1, keepdims=True)
    acc_ref[:, 6:7] += jnp.sum(y * y, axis=1, keepdims=True)

    if w_ref is not None:
        w = w_ref[0]                               # (1, TN)
        wy = w * y                                 # (3, TN)
        for j in range(3):
            acc_ref[:, 7 + j:8 + j] += jnp.sum(x * wy[j:j + 1, :], axis=1,
                                               keepdims=True)
        acc_ref[:, 10:11] += jnp.sum(w * x, axis=1, keepdims=True)
        acc_ref[:, 11:12] += jnp.sum(wy, axis=1, keepdims=True)
        acc_ref[0:1, 12:13] += jnp.sum(w, axis=1, keepdims=True)

    @pl.when(k == pl.num_programs(2) - 1)
    def _():
        out_ref[0, 0] = acc_ref[...]               # one lane-dense store / batch


def _make_moments_kernel(weighted):
    if weighted:
        def kernel(x_ref, y_ref, w_ref, out_ref, acc_ref):
            _moments_body(x_ref, y_ref, w_ref, out_ref, acc_ref)
    else:
        def kernel(x_ref, y_ref, out_ref, acc_ref):
            _moments_body(x_ref, y_ref, None, out_ref, acc_ref)
    return kernel


@jax.jit
def kabsch_loss(x, y, weight=None):
    """Mean squared deviation after Kabsch alignment.

    x, y: (B, N, 3) float point clouds. weight: optional (N,) per-point weights
    used during alignment only (matches KabschLoss with a registered weight
    buffer). Returns a scalar.
    """
    x = x.astype(jnp.float32)
    y = y.astype(jnp.float32)
    b, n, _ = x.shape

    # Anchor on the first point (translation-invariant for every centered
    # quantity) so raw f32 moment accumulation cannot catastrophically cancel;
    # fused with the lane-dense transpose in a single XLA relayout pass.
    ax = x[:, 0:1, :]
    ay = y[:, 0:1, :]
    xt = jnp.swapaxes(x - ax, 1, 2)                # (B, 3, N)  N on lanes
    yt = jnp.swapaxes(y - ay, 1, 2)

    # Split the point axis when the batch alone cannot occupy both v7x TCs.
    splits = 2 if b == 1 else 1
    per_split = _cdiv(n, splits)
    tn = min(_TN_MAX, _round_up(per_split, _LANE))
    nk = _cdiv(per_split, tn)
    n_pad = splits * nk * tn

    if n_pad != n:
        # Padded points are exactly zero after the anchor shift -> contribute
        # nothing to any accumulated moment (weights are zero-padded too).
        pad = n_pad - n
        xt = jnp.pad(xt, ((0, 0), (0, 0), (0, pad)))
        yt = jnp.pad(yt, ((0, 0), (0, 0), (0, pad)))

    weighted = weight is not None
    args = [xt, yt]
    xy_map = lambda i, s, k: (i, 0, s * nk + k)
    in_specs = [pl.BlockSpec((1, 3, tn), xy_map),
                pl.BlockSpec((1, 3, tn), xy_map)]
    if weighted:
        wf = weight.astype(jnp.float32)
        # x^T diag(w) y / mean(w)  ==  x^T diag(w / mean(w)) y
        wn = (wf / jnp.mean(wf)).reshape(1, 1, n)
        if n_pad != n:
            wn = jnp.pad(wn, ((0, 0), (0, 0), (0, n_pad - n)))
        args.append(wn)
        in_specs.append(pl.BlockSpec((1, 1, tn), lambda i, s, k: (0, 0, s * nk + k)))

    moments = pl.pallas_call(
        _make_moments_kernel(weighted),
        out_shape=jax.ShapeDtypeStruct((b, splits, 3, _LANE), jnp.float32),
        grid_spec=pltpu.PrefetchScalarGridSpec(
            num_scalar_prefetch=0,
            grid=(b, splits, nk),
            in_specs=in_specs,
            out_specs=pl.BlockSpec((1, 1, 3, _LANE), lambda i, s, k: (i, s, 0, 0)),
            scratch_shapes=[pltpu.VMEM((3, _LANE), jnp.float32)],
        ),
        compiler_params=pltpu.CompilerParams(
            dimension_semantics=("parallel", "parallel", "arbitrary"),
            vmem_limit_bytes=32 * 1024 * 1024,
        ),
    )(*args)

    # ---- tiny per-batch epilogue on the packed moments (XLA) ---------------
    m = jnp.sum(moments, axis=1)                   # combine split partials
    nf = jnp.float32(n)

    mu = m[:, :, 0:3]                              # (B, 3, 3)
    sx = m[:, :, 3]                                # (B, 3)
    sy = m[:, :, 4]
    qx = m[:, :, 5]
    qy = m[:, :, 6]

    mx = sx / nf                                   # unweighted means (shifted frame)
    my = sy / nf
    cu = mu - jnp.einsum('bi,bj->bij', sx, sy) / nf        # centered unweighted cross-cov
    sxx = jnp.sum(qx, -1) - jnp.sum(sx * sx, -1) / nf      # sum |xc|^2
    syy = jnp.sum(qy, -1) - jnp.sum(sy * sy, -1) / nf      # sum |yc|^2

    if weighted:
        mw = m[:, :, 7:10]
        swx = m[:, :, 10]
        swy = m[:, :, 11]
        sw = m[:, 0, 12]
        # weighted cross term, centered with the UNWEIGHTED means (matches ref)
        c = (mw
             - jnp.einsum('bi,bj->bij', swx, my)
             - jnp.einsum('bi,bj->bij', mx, swy)
             + sw[:, None, None] * jnp.einsum('bi,bj->bij', mx, my))
    else:
        c = cu

    # TODO(synk): jnp.linalg.svd / det have no Pallas lowering; the (B,3,3)
    # Kabsch rotation is negligible data and stays in XLA.
    u, _, vh = jnp.linalg.svd(c)
    d = jnp.linalg.det(u) * jnp.linalg.det(vh)
    vh = vh.at[:, -1, :].multiply(d[:, None])
    r = u @ vh                                     # (B, 3, 3)

    # ||xc @ R - yc||^2 summed over points == sum|xc|^2 + sum|yc|^2 - 2 tr(R^T Cu)
    sse = sxx + syy - 2.0 * jnp.sum(r * cu, axis=(-2, -1))
    return jnp.sum(sse) / (b * n * 3)


def _reference_kabsch_loss(x, y, weight=None):
    """Pure-JAX mirror of the PyTorch KabschLoss.forward (batched (B, N, 3))."""
    xc = x - x.mean(-2, keepdims=True)
    yc = y - y.mean(-2, keepdims=True)
    if weight is not None:
        c = jnp.einsum('...ji,...j,...jk->...ik', xc, weight, yc) / weight.mean(-1)
    else:
        c = jnp.einsum('...ji,...jk->...ik', xc, yc)
    u, _, vh = jnp.linalg.svd(c)
    d = jnp.linalg.det(u) * jnp.linalg.det(vh)
    vh = vh.at[:, -1].multiply(d[..., None])
    r = u @ vh
    aligned = xc @ r
    return ((aligned - yc) ** 2).mean()


if __name__ == "__main__":
    key = jax.random.PRNGKey(0)
    k1, k2, k3, k4, k5, k6 = jax.random.split(key, 6)

    # case 1: batch=2, 16 points (single lane tile, both weighted / unweighted)
    batch, n_points = 2, 16
    x = jax.random.normal(k1, (batch, n_points, 3), dtype=jnp.float32)
    y = jax.random.normal(k2, (batch, n_points, 3), dtype=jnp.float32) + 0.5
    weight = jax.random.uniform(k3, (n_points,), dtype=jnp.float32) + 0.5

    out_unw = jax.block_until_ready(kabsch_loss(x, y))
    ref_unw = _reference_kabsch_loss(x, y)
    assert out_unw.shape == (), out_unw.shape
    assert jnp.allclose(out_unw, ref_unw, atol=1e-4, rtol=1e-3), (out_unw, ref_unw)

    out_w = jax.block_until_ready(kabsch_loss(x, y, weight))
    ref_w = _reference_kabsch_loss(x, y, weight)
    assert jnp.allclose(out_w, ref_w, atol=1e-4, rtol=1e-3), (out_w, ref_w)

    # case 2: batch=1, 300 points, offset centroid
    # (exercises the 2-way point-axis split, lane padding and the anchor path)
    n2 = 300
    x1 = jax.random.normal(k4, (1, n2, 3), dtype=jnp.float32) + 2.0
    y1 = jax.random.normal(k5, (1, n2, 3), dtype=jnp.float32) - 1.0
    w1 = jax.random.uniform(k6, (n2,), dtype=jnp.float32) + 0.1

    out1 = jax.block_until_ready(kabsch_loss(x1, y1, w1))
    ref1 = _reference_kabsch_loss(x1, y1, w1)
    assert jnp.allclose(out1, ref1, atol=1e-4, rtol=1e-3), (out1, ref1)

    print("KERNEL_OK")
</pallas_src>

<mosaic_0001>
module attributes {stable_mosaic.version = 11 : i64} {
  func.func @kernel(%arg0: i32, %arg1: i32, %arg2: i32, %arg3: memref<1x3x128xf32, #tpu.memory_space<vmem>>, %arg4: memref<1x3x128xf32, #tpu.memory_space<vmem>>, %arg5: memref<1x1x3x128xf32, #tpu.memory_space<vmem>>, %arg6: memref<3x128xf32, #tpu.memory_space<vmem>>) attributes {dimension_semantics = [#tpu.dimension_semantics<parallel>, #tpu.dimension_semantics<parallel>, #tpu.dimension_semantics<arbitrary>], iteration_bounds = array<i64: 2, 1, 1>, scalar_prefetch = 0 : i64, scratch_operands = 1 : i64, tpu.core_type = #tpu.core_type<tc>, window_params = [{transform_indices = @transform_0, window_bounds = array<i64: 1, 3, 128>}, {transform_indices = @transform_1, window_bounds = array<i64: 1, 3, 128>}, {transform_indices = @transform_2, window_bounds = array<i64: 1, 1, 3, 128>}]} {
    %c0_i32 = arith.constant 0 : i32
    %0 = arith.cmpi eq, %arg2, %c0_i32 : i32
    %1 = arith.extui %0 : i1 to i32
    %c0_i32_0 = arith.constant 0 : i32
    %2 = arith.cmpi ne, %1, %c0_i32_0 : i32
    scf.if %2 {
      %cst_36 = arith.constant 0.000000e+00 : f32
      %56 = vector.broadcast %cst_36 : f32 to vector<3x128xf32>
      %c0_37 = arith.constant 0 : index
      %c0_38 = arith.constant 0 : index
      %57 = vector.load %arg6[%c0_37, %c0_38] : memref<3x128xf32, #tpu.memory_space<vmem>>, vector<3x128xf32>
      tpu.vector_store %arg6[%c0_37, %c0_38], %56 {strides = array<i32>} : memref<3x128xf32, #tpu.memory_space<vmem>>, vector<3x128xf32>,
    } else {
    }
    %c0 = arith.constant 0 : index
    %c0_1 = arith.constant 0 : index
    %c0_2 = arith.constant 0 : index
    %3 = vector.load %arg3[%c0, %c0_1, %c0_2] : memref<1x3x128xf32, #tpu.memory_space<vmem>>, vector<1x3x128xf32>
    %4 = vector.shape_cast %3 : vector<1x3x128xf32> to vector<3x128xf32>
    %c0_3 = arith.constant 0 : index
    %c0_4 = arith.constant 0 : index
    %c0_5 = arith.constant 0 : index
    %5 = vector.load %arg4[%c0_3, %c0_4, %c0_5] : memref<1x3x128xf32, #tpu.memory_space<vmem>>, vector<1x3x128xf32>
    %6 = vector.shape_cast %5 : vector<1x3x128xf32> to vector<3x128xf32>
    %c0_6 = arith.constant 0 : index
    %c0_7 = arith.constant 0 : index
    %7 = vector.load %arg6[%c0_6, %c0_7] : memref<3x128xf32, #tpu.memory_space<vmem>>, vector<3x1xf32>
    %8 = vector.extract_strided_slice %6 {offsets = [0, 0], sizes = [1, 128], strides = [1, 1]} : vector<3x128xf32> to vector<1x128xf32>
    %9 = vector.broadcast %8 : vector<1x128xf32> to vector<3x128xf32>
    %10 = arith.mulf %4, %9 : vector<3x128xf32>
    %cst = arith.constant dense<0.000000e+00> : vector<3xf32>
    %11 = vector.multi_reduction <add>, %10, %cst [1] : vector<3x128xf32> to vector<3xf32>
    %12 = vector.shape_cast %11 : vector<3xf32> to vector<3x1xf32>
    %13 = arith.addf %7, %12 : vector<3x1xf32>
    %c0_8 = arith.constant 0 : index
    %c0_9 = arith.constant 0 : index
    %14 = vector.load %arg6[%c0_8, %c0_9] : memref<3x128xf32, #tpu.memory_space<vmem>>, vector<3x1xf32>
    tpu.vector_store %arg6[%c0_8, %c0_9], %13 {strides = array<i32>} : memref<3x128xf32, #tpu.memory_space<vmem>>, vector<3x1xf32>,
    %c0_10 = arith.constant 0 : index
    %c1 = arith.constant 1 : index
    %15 = vector.load %arg6[%c0_10, %c1] : memref<3x128xf32, #tpu.memory_space<vmem>>, vector<3x1xf32>
    %16 = vector.extract_strided_slice %6 {offsets = [1, 0], sizes = [1, 128], strides = [1, 1]} : vector<3x128xf32> to vector<1x128xf32>
    %17 = vector.broadcast %16 : vector<1x128xf32> to vector<3x128xf32>
    %18 = arith.mulf %4, %17 : vector<3x128xf32>
    %cst_11 = arith.constant dense<0.000000e+00> : vector<3xf32>
    %19 = vector.multi_reduction <add>, %18, %cst_11 [1] : vector<3x128xf32> to vector<3xf32>
    %20 = vector.shape_cast %19 : vector<3xf32> to vector<3x1xf32>
    %21 = arith.addf %15, %20 : vector<3x1xf32>
    %c0_12 = arith.constant 0 : index
    %c1_13 = arith.constant 1 : index
    %22 = vector.load %arg6[%c0_12, %c1_13] : memref<3x128xf32, #tpu.memory_space<vmem>>, vector<3x1xf32>
    tpu.vector_store %arg6[%c0_12, %c1_13], %21 {strides = array<i32>} : memref<3x128xf32, #tpu.memory_space<vmem>>, vector<3x1xf32>,
    %c0_14 = arith.constant 0 : index
    %c2 = arith.constant 2 : index
    %23 = vector.load %arg6[%c0_14, %c2] : memref<3x128xf32, #tpu.memory_space<vmem>>, vector<3x1xf32>
    %24 = vector.extract_strided_slice %6 {offsets = [2, 0], sizes = [1, 128], strides = [1, 1]} : vector<3x128xf32> to vector<1x128xf32>
    %25 = vector.broadcast %24 : vector<1x128xf32> to vector<3x128xf32>
    %26 = arith.mulf %4, %25 : vector<3x128xf32>
    %cst_15 = arith.constant dense<0.000000e+00> : vector<3xf32>
    %27 = vector.multi_reduction <add>, %26, %cst_15 [1] : vector<3x128xf32> to vector<3xf32>
    %28 = vector.shape_cast %27 : vector<3xf32> to vector<3x1xf32>
    %29 = arith.addf %23, %28 : vector<3x1xf32>
    %c0_16 = arith.constant 0 : index
    %c2_17 = arith.constant 2 : index
    %30 = vector.load %arg6[%c0_16, %c2_17] : memref<3x128xf32, #tpu.memory_space<vmem>>, vector<3x1xf32>
    tpu.vector_store %arg6[%c0_16, %c2_17], %29 {strides = array<i32>} : memref<3x128xf32, #tpu.memory_space<vmem>>, vector<3x1xf32>,
    %c0_18 = arith.constant 0 : index
    %c3 = arith.constant 3 : index
    %31 = vector.load %arg6[%c0_18, %c3] : memref<3x128xf32, #tpu.memory_space<vmem>>, vector<3x1xf32>
    %cst_19 = arith.constant dense<0.000000e+00> : vector<3xf32>
    %32 = vector.multi_reduction <add>, %4, %cst_19 [1] : vector<3x128xf32> to vector<3xf32>
    %33 = vector.shape_cast %32 : vector<3xf32> to vector<3x1xf32>
    %34 = arith.addf %31, %33 : vector<3x1xf32>
    %c0_20 = arith.constant 0 : index
    %c3_21 = arith.constant 3 : index
    %35 = vector.load %arg6[%c0_20, %c3_21] : memref<3x128xf32, #tpu.memory_space<vmem>>, vector<3x1xf32>
    tpu.vector_store %arg6[%c0_20, %c3_21], %34 {strides = array<i32>} : memref<3x128xf32, #tpu.memory_space<vmem>>, vector<3x1xf32>,
    %c0_22 = arith.constant 0 : index
    %c4 = arith.constant 4 : index
    %36 = vector.load %arg6[%c0_22, %c4] : memref<3x128xf32, #tpu.memory_space<vmem>>, vector<3x1xf32>
    %cst_23 = arith.constant dense<0.000000e+00> : vector<3xf32>
    %37 = vector.multi_reduction <add>, %6, %cst_23 [1] : vector<3x128xf32> to vector<3xf32>
    %38 = vector.shape_cast %37 : vector<3xf32> to vector<3x1xf32>
    %39 = arith.addf %36, %38 : vector<3x1xf32>
    %c0_24 = arith.constant 0 : index
    %c4_25 = arith.constant 4 : index
    %40 = vector.load %arg6[%c0_24, %c4_25] : memref<3x128xf32, #tpu.memory_space<vmem>>, vector<3x1xf32>
    tpu.vector_store %arg6[%c0_24, %c4_25], %39 {strides = array<i32>} : memref<3x128xf32, #tpu.memory_space<vmem>>, vector<3x1xf32>,
    %c0_26 = arith.constant 0 : index
    %c5 = arith.constant 5 : index
    %41 = vector.load %arg6[%c0_26, %c5] : memref<3x128xf32, #tpu.memory_space<vmem>>, vector<3x1xf32>
    %42 = arith.mulf %4, %4 : vector<3x128xf32>
    %cst_27 = arith.constant dense<0.000000e+00> : vector<3xf32>
    %43 = vector.multi_reduction <add>, %42, %cst_27 [1] : vector<3x128xf32> to vector<3xf32>
    %44 = vector.shape_cast %43 : vector<3xf32> to vector<3x1xf32>
    %45 = arith.addf %41, %44 : vector<3x1xf32>
    %c0_28 = arith.constant 0 : index
    %c5_29 = arith.constant 5 : index
    %46 = vector.load %arg6[%c0_28, %c5_29] : memref<3x128xf32, #tpu.memory_space<vmem>>, vector<3x1xf32>
    tpu.vector_store %arg6[%c0_28, %c5_29], %45 {strides = array<i32>} : memref<3x128xf32, #tpu.memory_space<vmem>>, vector<3x1xf32>,
    %c0_30 = arith.constant 0 : index
    %c6 = arith.constant 6 : index
    %47 = vector.load %arg6[%c0_30, %c6] : memref<3x128xf32, #tpu.memory_space<vmem>>, vector<3x1xf32>
    %48 = arith.mulf %6, %6 : vector<3x128xf32>
    %cst_31 = arith.constant dense<0.000000e+00> : vector<3xf32>
    %49 = vector.multi_reduction <add>, %48, %cst_31 [1] : vector<3x128xf32> to vector<3xf32>
    %50 = vector.shape_cast %49 : vector<3xf32> to vector<3x1xf32>
    %51 = arith.addf %47, %50 : vector<3x1xf32>
    %c0_32 = arith.constant 0 : index
    %c6_33 = arith.constant 6 : index
    %52 = vector.load %arg6[%c0_32, %c6_33] : memref<3x128xf32, #tpu.memory_space<vmem>>, vector<3x1xf32>
    tpu.vector_store %arg6[%c0_32, %c6_33], %51 {strides = array<i32>} : memref<3x128xf32, #tpu.memory_space<vmem>>, vector<3x1xf32>,
    %c0_i32_34 = arith.constant 0 : i32
    %53 = arith.cmpi eq, %arg2, %c0_i32_34 : i32
    %54 = arith.extui %53 : i1 to i32
    %c0_i32_35 = arith.constant 0 : i32
    %55 = arith.cmpi ne, %54, %c0_i32_35 : i32
    scf.if %55 {
      %c0_36 = arith.constant 0 : index
      %c0_37 = arith.constant 0 : index
      %56 = vector.load %arg6[%c0_36, %c0_37] : memref<3x128xf32, #tpu.memory_space<vmem>>, vector<3x128xf32>
      %c0_38 = arith.constant 0 : index
      %c0_39 = arith.constant 0 : index
      %c0_40 = arith.constant 0 : index
      %c0_41 = arith.constant 0 : index
      %57 = vector.load %arg5[%c0_38, %c0_39, %c0_40, %c0_41] : memref<1x1x3x128xf32, #tpu.memory_space<vmem>>, vector<1x1x3x128xf32>
      %58 = vector.shape_cast %57 : vector<1x1x3x128xf32> to vector<3x128xf32>
      %59 = vector.shape_cast %56 : vector<3x128xf32> to vector<1x1x3x128xf32>
      tpu.vector_store %arg5[%c0_38, %c0_39, %c0_40, %c0_41], %59 {strides = array<i32>} : memref<1x1x3x128xf32, #tpu.memory_space<vmem>>, vector<1x1x3x128xf32>,
    } else {
    }
    return
  }
  func.func @transform_0(%arg0: i32, %arg1: i32, %arg2: i32) -> (i32, i32, i32) {
    %c1_i32 = arith.constant 1 : i32
    %0 = arith.muli %arg1, %c1_i32 : i32
    %1 = arith.addi %0, %arg2 : i32
    %c0_i32 = arith.constant 0 : i32
    %c0_i32_0 = arith.constant 0 : i32
    return %arg0, %c0_i32, %1 : i32, i32, i32
  }
  func.func @transform_1(%arg0: i32, %arg1: i32, %arg2: i32) -> (i32, i32, i32) {
    %c1_i32 = arith.constant 1 : i32
    %0 = arith.muli %arg1, %c1_i32 : i32
    %1 = arith.addi %0, %arg2 : i32
    %c0_i32 = arith.constant 0 : i32
    %c0_i32_0 = arith.constant 0 : i32
    return %arg0, %c0_i32, %1 : i32, i32, i32
  }
  func.func @transform_2(%arg0: i32, %arg1: i32, %arg2: i32) -> (i32, i32, i32, i32) {
    %c0_i32 = arith.constant 0 : i32
    %c0_i32_0 = arith.constant 0 : i32
    %c0_i32_1 = arith.constant 0 : i32
    return %arg0, %arg1, %c0_i32, %c0_i32_0 : i32, i32, i32, i32
  }
}

</mosaic_0001>

<llo_original>
// kernel: custom-call.57
$region0: #{custom-call.57}
  %s0 = inlined_call_operand.vmem [shape: f32[2,6,3], index: 0, kind: input, shape index: {}]
  %s1 = inlined_call_operand.vmem [shape: f32[2,6,3], index: 1, kind: output, shape index: {0}]
  %s2 = inlined_call_operand.vmem [shape: f32[2,3], index: 2, kind: output, shape index: {1}]
  %3 = xla_tuple %s1, %s2
  $region1: #{custom-call.57} parent=0
    #allocation0 [shape = 'u8[8192]{0}', space=vmem, size = 0x2000, scoped, tag = 'operand span for operand 0']
    #allocation1 [shape = 'u8[8192]{0}', space=vmem, size = 0x2000, scoped, tag = 'operand span for operand 1']
    #allocation2 [shape = 'u8[4096]{0}', space=vmem, size = 0x1000, scoped, tag = 'operand span for operand 2']
    #allocation3 [shape = 'u8[2048]{0}', space=vmem, size = 0x800, scoped, tag = 'packed  for operand 2']
    loop: start=0, step=1, limit=4
    $region2: #{custom-call.57} parent=1 // loop_pre_header
      _
    $region3: #{custom-call.57} parent=1 // loop_header
      %s5 = sphi 0, %s9
      %p6 = scmp.ge.s32.totalorder %s5, 4
      %s12 = sphi 0, %s31
      %s13 = sphi 0, %s27
      %s14 = sphi 0, %s23
      %s15 = sphi 0, %s12
      %s16 = sphi 0, %s13
      %s17 = sphi 0, %s14
      %s18 = sphi 0, %s15
      %s19 = sphi 0, %s16
      %s20 = sphi 0, %s17
      %s46 = sphi 0, %s48
      %s49 = sphi 0, %s46
      %s50 = sphi 0, %s49
      %s66 = sphi 0, %s50
    $region4: #{custom-call.57} parent=1 // loop_header_branch
      %8 = sbr.rel (%p6) target = $region8
    $region5: #{custom-call.57} parent=1 // loop_body
      %s10 = ssub.s32 %s5, 1
      %s11 = ssub.s32 %s5, 2
      %s21 = sadd.s32 1, %s14
      %p22 = scmp.ge.s32.totalorder %s21, 1
      %s23 = scalar_select %p22, 0, %s21
      %s24 = sadd.s32 1, %s13
      %s25 = scalar_select %p22, %s24, %s13
      %p26 = scmp.ge.s32.totalorder %s25, 1
      %s27 = scalar_select %p26, 0, %s25
      %s28 = sadd.s32 1, %s12
      %s29 = scalar_select %p26, %s28, %s12
      %p30 = scmp.ge.s32.totalorder %s29, 2
      %s31 = scalar_select %p30, 0, %s29
      %p32 = scmp.lt.s32.totalorder %s12, 0
      %s33 = ssub.s32 0, %s12
      %s34 = scalar_select %p32, %s33, %s12
      %s35 = sshrl.u32 %s34, 3
      %s36 = ssub.s32 0, %s35
      %s37 = scalar_select %p32, %s36, %s35
      %p38 = scmp.lt.s32.totalorder %s31, 0
      %s39 = ssub.s32 0, %s31
      %s40 = scalar_select %p38, %s39, %s31
      %s41 = sshrl.u32 %s40, 3
      %s42 = ssub.s32 0, %s41
      %s43 = scalar_select %p38, %s42, %s41
      %s44 = ssub.s32 %s37, %s43
      %p45 = scmp.eq.s32.totalorder %s44, 0
      %s47 = sadd.s32 %s46, 1
      %s48 = scalar_select %p45, %s46, %s47
      %p51 = pneg %p45
      %p52 = scmp.eq.s32.totalorder %s5, 1
      %p53 = por %p51, %p52
      %p54 = scmp.ne.s32.totalorder %s46, %s49
      %p55 = scmp.eq.s32.totalorder %s5, 0
      %p56 = por %p54, %p55
      %p57 = scmp.ne.s32.totalorder %s46, %s49
      %p58 = scmp.eq.s32.totalorder %s10, 1
      %p59 = por %p57, %p58
      %p60 = scmp.ne.s32.totalorder %s49, %s50
      %p61 = scmp.eq.s32.totalorder %s10, 0
      %p62 = por %p60, %p61
      %p63 = scmp.ne.s32.totalorder %s49, %s50
      %p64 = scmp.eq.s32.totalorder %s11, 1
      %p65 = por %p63, %p64
      %p67 = scmp.ne.s32.totalorder %s50, %s66
      %p68 = scmp.eq.s32.totalorder %s11, 0
      %p69 = por %p67, %p68
      %p70 = scmp.le.s32.totalorder 1, %s5
      %p71 = scmp.lt.s32.totalorder %s5, 3
      %p72 = pnand %p70, %p71
      %p73 = pneg %p72
      // Predicated region
      $region9: #{custom-call.57} parent=5 // pred_check
        _
      $region10: #{custom-call.57} parent=5 // pred_check_branch
        %75 = sbr.rel (%p72) target = $region12
      $region11: #{custom-call.57} parent=5 // pred_region
        %s76 = ssub.s32 %s5, 1
      $region12: #{custom-call.57} parent=5 // pred_fallthru
        _
      %p77 = scmp.lt.s32.totalorder %s5, 2
      // Predicated region
      $region13: #{custom-call.57} parent=5 // pred_check
        %p78 = pneg %p77
      $region14: #{custom-call.57} parent=5 // pred_check_branch
        %80 = sbr.rel (%p78) target = $region16
      $region15: #{custom-call.57} parent=5 // pred_region
        %s81 = sand.u32 %s5, 1
        %s82 = sand.u32 %s5, 1
        %s83 = smul.addr %s82, 8
        %s84 = scalar_lea.vmem [#allocation0], %s83
        %s85 = sadd.s32 %s14, %s13
        %s86 = sadd.s32 %s85, %s12
        %s87 = smul.addr %s86, 8
        %s88 = scalar_lea.vmem %s0, %s87
        // Predicated region
        $region17: #{custom-call.57} parent=15 // pred_check
          _
        $region18: #{custom-call.57} parent=15 // pred_check_branch
          %90 = sbr.rel (0) target = $region20
        $region19: #{custom-call.57} parent=15 // pred_region
          // Predicated region
          $region21: #{custom-call.57} parent=19 // pred_check
            _
          $region22: #{custom-call.57} parent=19 // pred_check_branch
            %92 = sbr.rel (0) target = $region24
          $region23: #{custom-call.57} parent=19 // pred_region
            // Predicated region
            $region36: #{custom-call.57} parent=23 // pred_check
              _
            $region37: #{custom-call.57} parent=23 // pred_check_branch
              %108 = sbr.rel (0) target = $region39
            $region38: #{custom-call.57} parent=23 // pred_region
              loop: start=0, step=1, limit=1
              $region40: #{custom-call.57} parent=38 // loop_pre_header
                _
              $region41: #{custom-call.57} parent=38 // loop_header
                %s110 = sphi 0, %s114
                %p111 = scmp.ge.s32.totalorder %s110, 1
                %s115 = sphi %s88, %s88
                %s116 = sphi %s84, %s84
              $region42: #{custom-call.57} parent=38 // loop_header_branch
                %113 = sbr.rel (%p111) target = $region46
              $region43: #{custom-call.57} parent=38 // loop_body
                %v117 = vld [vmem:[%s115] sm:$0xff]
                %118 = vst [vmem:[%s116] sm:$0xff] %v117
              $region44: #{custom-call.57} parent=38 // loop_footer
                %s114 = sadd.s32 1, %s110
              $region45: #{custom-call.57} parent=38 // loop_footer_branch
                %109 = sbr.rel target = $region41
              $region46: #{custom-call.57} parent=38 // loop_exit
                _
            $region39: #{custom-call.57} parent=23 // pred_fallthru
              _
            // Predicated region
            $region47: #{custom-call.57} parent=23 // pred_check
              _
            $region48: #{custom-call.57} parent=23 // pred_check_branch
              %120 = sbr.rel target = $region50
            $region49: #{custom-call.57} parent=23 // pred_region
              _
            $region50: #{custom-call.57} parent=23 // pred_fallthru
              _
          $region24: #{custom-call.57} parent=19 // pred_fallthru
            _
          // Predicated region
          $region25: #{custom-call.57} parent=19 // pred_check
            _
          $region26: #{custom-call.57} parent=19 // pred_check_branch
            %94 = sbr.rel target = $region28
          $region27: #{custom-call.57} parent=19 // pred_region
            %s96 = ssub.s32 256, 1
            loop: start=0, step=1, limit=1
            $region29: #{custom-call.57} parent=27 // loop_pre_header
              _
            $region30: #{custom-call.57} parent=27 // loop_header
              %s98 = sphi 0, %s102
              %p99 = scmp.ge.s32.totalorder %s98, 1
              %s103 = sphi %s88, %s88
              %s104 = sphi %s84, %s84
            $region31: #{custom-call.57} parent=27 // loop_header_branch
              %101 = sbr.rel (%p99) target = $region35
            $region32: #{custom-call.57} parent=27 // loop_body
              %v105 = vld [vmem:[%s103] sm:%s96]
              %106 = vst [vmem:[%s104] sm:%s96] %v105
            $region33: #{custom-call.57} parent=27 // loop_footer
              %s102 = sadd.s32 1, %s98
            $region34: #{custom-call.57} parent=27 // loop_footer_branch
              %97 = sbr.rel target = $region30
            $region35: #{custom-call.57} parent=27 // loop_exit
              _
          $region28: #{custom-call.57} parent=19 // pred_fallthru
            _
        $region20: #{custom-call.57} parent=15 // pred_fallthru
          _
        %121 = vnop
      $region16: #{custom-call.57} parent=5 // pred_fallthru
        _
      %p122 = scmp.le.s32.totalorder 1, %s5
      %p123 = scmp.lt.s32.totalorder %s5, 3
      %p124 = pnand %p122, %p123
      %p125 = pneg %p124
      // Predicated region
      $region51: #{custom-call.57} parent=5 // pred_check
        _
      $region52: #{custom-call.57} parent=5 // pred_check_branch
        %127 = sbr.rel (%p124) target = $region54
      $region53: #{custom-call.57} parent=5 // pred_region
        #allocation4 [shape = 'f32[6,128]{1,0}', space=vmem, size = 0x1000, scoped, tag = 'scratch for Householder reflectors']
        %s128 = ssub.s32 %s5, 1
        %s129 = sand.u32 %s10, 1
        %s130 = sand.u32 %s10, 1
        %s131 = smul.addr %s130, 8
        %s132 = scalar_lea.vmem [#allocation0], %s131
        %s133 = sand.u32 %s10, 1
        %s134 = sand.u32 %s10, 1
        %s135 = smul.addr %s134, 8
        %s136 = scalar_lea.vmem [#allocation0], %s135
        %s137 = sand.u32 %s10, 1
        %s138 = sand.u32 %s10, 1
        %s139 = smul.addr %s138, 8
        %s140 = scalar_lea.vmem [#allocation1], %s139
        %p141 = pneg %p62
        %p142 = pneg %p59
        %s143 = sand.u32 %s49, 1
        %s144 = sand.u32 %s49, 1
        %s145 = smul.addr %s144, 2
        %s146 = scalar_lea.vmem [#allocation3], %s145
        %p147 = scmp.lt.s32.totalorder %s15, 0
        %s148 = ssub.s32 0, %s15
        %s149 = scalar_select %p147, %s148, %s15
        %s150 = sshrl.u32 %s149, 3
        %s151 = ssub.s32 0, %s150
        %s152 = scalar_select %p147, %s151, %s150
        %s153 = sand.u32 %s15, 7
        %s154 = scalar_lea.vmem [#allocation2], %s153
        %v155 = vld [vmem:[%s132] sm:$0xff]
        %156 = vst [vmem:[%s140] sm:$0xff] %v155
        %157 = vst [vmem:[%s154] sm:$0x1] 0.0
        loop: start=0, step=1, limit=3
        $region55: #{custom-call.57} parent=53 // loop_pre_header
          _
        $region56: #{custom-call.57} parent=53 // loop_header
          %s159 = sphi 0, %s163
          %p160 = scmp.ge.s32.totalorder %s159, 3
        $region57: #{custom-call.57} parent=53 // loop_header_branch
          %162 = sbr.rel (%p160) target = $region61
        $region58: #{custom-call.57} parent=53 // loop_body
          %v164 = vld [vmem:[%s140] sm:$0xff]
          %v165 = vlaneseq
          %v166 = vshrl.u32 %v165, 7
          %v168 = vstv %s159
          %vm169 = vcmp.gt.s32.totalorder %v166, %v168
          %vm170 = vcmp.lt.s32.totalorder %v166, 6
          %vm171 = vmand %vm169, %vm170
          %v172 = vsel %vm171, %v164, 0.0
          %v173 = vmul.f32 %v172, %v172
          %v174 = vrot.slane %v173, 4
          %v175 = vadd.f32 %v173, %v174
          %v176 = vrot.slane %v175, 2
          %v177 = vadd.f32 %v175, %v176
          %v178 = vrot.slane %v177, 1
          %v179 = vadd.f32 %v177, %v178
          %v180 = vrsqrt.pop %v179
          %v181 = vmul.f32 %v180, %v179
          %v182 = vmul.f32 %v181, %v180
          %v183 = vmul.f32 0.5, %v182
          %v184 = vsub.f32 1.5, %v183
          %v185 = vmul.f32 %v180, %v184
          %v186 = vmul.f32 %v179, %v185
          %vm187 = vcmp.eq.f32.partialorder %v179, inf
          %v188 = vsel %vm187, %v179, %v186
          %vm189 = vcmp.eq.f32.partialorder %v179, 0.0
          %v190 = vand.u32 %v179, 2147483648
          %v191 = vsel %vm189, %v190, %v188
          %vm192 = vcmp.eq.f32.partialorder %v179, 0.0
          %s193 = sshrl.u32 %s159, 3
          %s194 = sand.u32 %s159, 7
          %s195 = smul.addr %s193, 8
          %s196 = sadd.s32 %s194, %s195
          %s197 = scalar_lea.vmem %s140, %s196 [#allocation1]
          %v198 = vld [vmem:[%s197] ss:$0 sm:$0xff]
          %v199 = vand.u32 2147483647, %v198
          %v200 = vmax.f32 %v199, 0.0
          %v201 = vand.u32 2147483647, %v191
          %v202 = vmax.f32 %v200, %v201
          %v203 = vrcp.pop %v202
          %v204 = vmul.f32 %v202, %v203
          %v205 = vsub.f32 1.0, %v204
          %v206 = vmul.f32 %v203, %v205
          %v207 = vadd.f32 %v203, %v206
          %vm208 = vweird.f32 %v202
          %vm209 = vweird.f32 %v203
          %vm210 = vmor %vm208, %vm209
          %v211 = vsel %vm210, %v203, %v207
          %v212 = vand.u32 2147483647, %v202
          %vm213 = vcmp.eq.f32.partialorder %v212, 8.507059e+37
          %v214 = vand.u32 %v202, 2147483648
          %v215 = vor.u32 1.1754944e-38, %v214
          %v216 = vsel %vm213, %v215, %v211
          %v217 = vmul.f32 %v199, %v216
          %v218 = vmul.f32 %v217, %v217
          %v219 = vrcp.pop %v202
          %v220 = vmul.f32 %v202, %v219
          %v221 = vsub.f32 1.0, %v220
          %v222 = vmul.f32 %v219, %v221
          %v223 = vadd.f32 %v219, %v222
          %vm224 = vweird.f32 %v202
          %vm225 = vweird.f32 %v219
          %vm226 = vmor %vm224, %vm225
          %v227 = vsel %vm226, %v219, %v223
          %v228 = vand.u32 2147483647, %v202
          %vm229 = vcmp.eq.f32.partialorder %v228, 8.507059e+37
          %v230 = vand.u32 %v202, 2147483648
          %v231 = vor.u32 1.1754944e-38, %v230
          %v232 = vsel %vm229, %v231, %v227
          %v233 = vmul.f32 0.0, %v232
          %v234 = vmul.f32 %v233, %v233
          %v235 = vadd.f32 %v218, %v234
          %v236 = vrcp.pop %v202
          %v237 = vmul.f32 %v202, %v236
          %v238 = vsub.f32 1.0, %v237
          %v239 = vmul.f32 %v236, %v238
          %v240 = vadd.f32 %v236, %v239
          %vm241 = vweird.f32 %v202
          %vm242 = vweird.f32 %v236
          %vm243 = vmor %vm241, %vm242
          %v244 = vsel %vm243, %v236, %v240
          %v245 = vand.u32 2147483647, %v202
          %vm246 = vcmp.eq.f32.partialorder %v245, 8.507059e+37
          %v247 = vand.u32 %v202, 2147483648
          %v248 = vor.u32 1.1754944e-38, %v247
          %v249 = vsel %vm246, %v248, %v244
          %v250 = vmul.f32 %v201, %v249
          %v251 = vmul.f32 %v250, %v250
          %v252 = vadd.f32 %v235, %v251
          %vm253 = vcmp.eq.f32.partialorder %v202, 0.0
          %v254 = vrsqrt.pop %v252
          %v255 = vmul.f32 %v254, %v252
          %v256 = vmul.f32 %v255, %v254
          %v257 = vmul.f32 0.5, %v256
          %v258 = vsub.f32 1.5, %v257
          %v259 = vmul.f32 %v254, %v258
          %v260 = vmul.f32 %v252, %v259
          %vm261 = vcmp.eq.f32.partialorder %v252, inf
          %v262 = vsel %vm261, %v252, %v260
          %vm263 = vcmp.eq.f32.partialorder %v252, 0.0
          %v264 = vand.u32 %v252, 2147483648
          %v265 = vsel %vm263, %v264, %v262
          %v266 = vmul.f32 %v202, %v265
          %v267 = vsel %vm253, 0.0, %v266
          %vm268 = vcmp.lt.f32.partialorder %v198, 0.0
          %v269 = vxor.u32 %v267, 2147483648
          %v270 = vsel %vm268, %v267, %v269
          %v271 = vsub.f32 %v270, %v198
          %v272 = vrcp.pop %v270
          %v273 = vmul.f32 %v270, %v272
          %v274 = vsub.f32 1.0, %v273
          %v275 = vmul.f32 %v272, %v274
          %v276 = vadd.f32 %v272, %v275
          %vm277 = vweird.f32 %v270
          %vm278 = vweird.f32 %v272
          %vm279 = vmor %vm277, %vm278
          %v280 = vsel %vm279, %v272, %v276
          %v281 = vand.u32 2147483647, %v270
          %vm282 = vcmp.eq.f32.partialorder %v281, 8.507059e+37
          %v283 = vand.u32 %v270, 2147483648
          %v284 = vor.u32 1.1754944e-38, %v283
          %v285 = vsel %vm282, %v284, %v280
          %v286 = vmul.f32 %v271, %v285
          %v287 = vsel %vm192, %v198, %v270
          %v288 = vsel %vm192, 0.0, %v286
          %v289 = vsub.f32 %v198, %v287
          %s290 = smov %s140
          %v291 = vlaneseq
          %v292 = vshrl.u32 %v291, 7
          %v293 = vmov %v292
          %v294 = vld [vmem:[%s290] sm:$0xff]
          %v296 = vstv %s159
          %vm297 = vcmp.gt.s32.totalorder %v293, %v296
          %vm298 = vcmp.lt.s32.totalorder %v293, 6
          %vm299 = vmand %vm297, %vm298
          %v300 = vsel %vm299, %v294, 0.0
          %v301 = vrcp.pop %v289
          %v302 = vmul.f32 %v289, %v301
          %v303 = vsub.f32 1.0, %v302
          %v304 = vmul.f32 %v301, %v303
          %v305 = vadd.f32 %v301, %v304
          %vm306 = vweird.f32 %v289
          %vm307 = vweird.f32 %v301
          %vm308 = vmor %vm306, %vm307
          %v309 = vsel %vm308, %v301, %v305
          %v310 = vand.u32 2147483647, %v289
          %vm311 = vcmp.eq.f32.partialorder %v310, 8.507059e+37
          %v312 = vand.u32 %v289, 2147483648
          %v313 = vor.u32 1.1754944e-38, %v312
          %v314 = vsel %vm311, %v313, %v309
          %v315 = vmul.f32 %v300, %v314
          %v316 = vsel %vm192, 0.0, %v315
          %v317 = vstv %s159
          %v318 = vlaneseq
          %v319 = vand.u32 %v318, 127
          %vm320 = vcmp.eq.s32.totalorder %v319, %v317
          %v321 = vsel %vm320, %v316, 0.0
          %322 = vadd.xlane.f32.xlu0 %v321
          %v323 = vpop.xlane.xlu0 %322
          %324 = vst [vmem:[#allocation4] sm:$0xff] %v323
          %s325 = scalar_lea.vmem [#allocation4], %s159
          %326 = vst [vmem:[%s325] sm:$0x1] 1.0
          %v327 = vstv %s159
          %v328 = vlaneseq
          %v329 = vand.u32 %v328, 127
          %vm330 = vcmp.eq.s32.totalorder %v329, %v327
          %v331 = vsel %vm330, %v288, 0.0
          %332 = vadd.xlane.f32.xlu0 %v331
          %v333 = vpop.xlane.xlu0 %332
          %v334 = vstv %s159
          %v335 = vlaneseq
          %v336 = vand.u32 %v335, 127
          %vm337 = vcmp.eq.s32.totalorder %v336, %v334
          %v338 = vld [vmem:[%s154] ss:$0 sm:$0xff]
          %v339 = vsel %vm337, %v333, %v338
          %340 = vst [vmem:[%s154] sm:$0x1] %v339
          %s341 = smov %s140
          %s342 = smov [#allocation4]
          %v343 = vlaneseq
          %v344 = vshrl.u32 %v343, 7
          %v345 = vmov %v344
          %v347 = vld [vmem:[%s342] sm:$0xff]
          %v348 = vld [vmem:[%s341] sm:$0xff]
          %v349 = vmul.f32 %v347, %v348
          %vm350 = vcmp.lt.s32.totalorder %v345, 6
          %v351 = vsel %vm350, %v349, 0.0
          %v352 = vrot.slane %v351, 4
          %v353 = vadd.f32 %v351, %v352
          %v354 = vrot.slane %v353, 2
          %v355 = vadd.f32 %v353, %v354
          %v356 = vrot.slane %v355, 1
          %v357 = vadd.f32 %v355, %v356
          %s358 = smov %s341
          %s359 = smov %s342
          %v360 = vlaneseq
          %v361 = vshrl.u32 %v360, 7
          %v362 = vmov %v361
          %v363 = vmul.f32 %v357, %v333
          %v365 = vlaneseq
          %v366 = vand.u32 %v365, 127
          %v367 = vld [vmem:[%s359] sm:$0xff]
          %v368 = vmul.f32 %v367, %v363
          %v369 = vld [vmem:[%s358] sm:$0xff]
          %v370 = vstv %s159
          %vm371 = vcmp.gt.s32.totalorder %v366, %v370
          %v372 = vsub.f32 %v369, %v368
          %v373 = vsel %vm371, %v372, %v369
          %v374 = vstv %s159
          %v375 = vlaneseq
          %v376 = vand.u32 %v375, 127
          %vm377 = vcmp.eq.s32.totalorder %v376, %v374
          %v378 = vstv %s159
          %vm379 = vcmp.ge.s32.totalorder %v362, %v378
          %vm380 = vmand %vm377, %vm379
          %v381 = vsel %vm380, %v367, %v373
          %382 = vst [vmem:[%s358] sm:$0xff] %v381
          %s383 = scalar_lea.vmem %s358, %s159
          %v384 = vld [vmem:[%s383] ss:$0 sm:$0xff]
          %v385 = vstv %s159
          %v386 = vlaneseq
          %v387 = vand.u32 %v386, 127
          %vm388 = vcmp.eq.s32.totalorder %v387, %v385
          %v389 = vsel %vm388, %v287, %v384
          %390 = vst [vmem:[%s383] sm:$0x1] %v389
        $region59: #{custom-call.57} parent=53 // loop_footer
          %s163 = sadd.s32 1, %s159
        $region60: #{custom-call.57} parent=53 // loop_footer_branch
          %158 = sbr.rel target = $region56
        $region61: #{custom-call.57} parent=53 // loop_exit
          _
        %s392 = ssub.s32 4, 1
        %v393 = vld [vmem:[#allocation2] sm:%s392]
        %s395 = ssub.s32 4, 1
        %396 = vst [vmem:[%s146] sm:%s395] %v393
        %s397 = sand.u32 %s10, 1
        %s398 = sand.u32 %s10, 1
        %s399 = smul.addr %s398, 8
        %s400 = scalar_lea.vmem [#allocation1], %s399
        %s401 = sand.u32 %s49, 1
        %s402 = sand.u32 %s49, 1
        %s403 = smul.addr %s402, 2
        %s404 = scalar_lea.vmem [#allocation3], %s403
        %s405 = sadd.s32 %s17, %s16
        %s406 = sadd.s32 %s405, %s15
        %s407 = smul.addr %s406, 8
        %s408 = scalar_lea.vmem %s1, %s407
        // Predicated region
        $region62: #{custom-call.57} parent=53 // pred_check
          _
        $region63: #{custom-call.57} parent=53 // pred_check_branch
          %410 = sbr.rel (0) target = $region65
        $region64: #{custom-call.57} parent=53 // pred_region
          // Predicated region
          $region66: #{custom-call.57} parent=64 // pred_check
            _
          $region67: #{custom-call.57} parent=64 // pred_check_branch
            %412 = sbr.rel (0) target = $region69
          $region68: #{custom-call.57} parent=64 // pred_region
            // Predicated region
            $region81: #{custom-call.57} parent=68 // pred_check
              _
            $region82: #{custom-call.57} parent=68 // pred_check_branch
              %428 = sbr.rel (0) target = $region84
            $region83: #{custom-call.57} parent=68 // pred_region
              loop: start=0, step=1, limit=1
              $region85: #{custom-call.57} parent=83 // loop_pre_header
                _
              $region86: #{custom-call.57} parent=83 // loop_header
                %s430 = sphi 0, %s434
                %p431 = scmp.ge.s32.totalorder %s430, 1
                %s435 = sphi %s400, %s400
                %s436 = sphi %s408, %s408
              $region87: #{custom-call.57} parent=83 // loop_header_branch
                %433 = sbr.rel (%p431) target = $region91
              $region88: #{custom-call.57} parent=83 // loop_body
                %v437 = vld [vmem:[%s435] sm:$0xff]
                %438 = vst [vmem:[%s436] sm:$0xff] %v437
              $region89: #{custom-call.57} parent=83 // loop_footer
                %s434 = sadd.s32 1, %s430
              $region90: #{custom-call.57} parent=83 // loop_footer_branch
                %429 = sbr.rel target = $region86
              $region91: #{custom-call.57} parent=83 // loop_exit
                _
            $region84: #{custom-call.57} parent=68 // pred_fallthru
              _
            // Predicated region
            $region92: #{custom-call.57} parent=68 // pred_check
              _
            $region93: #{custom-call.57} parent=68 // pred_check_branch
              %440 = sbr.rel target = $region95
            $region94: #{custom-call.57} parent=68 // pred_region
              _
            $region95: #{custom-call.57} parent=68 // pred_fallthru
              _
          $region69: #{custom-call.57} parent=64 // pred_fallthru
            _
          // Predicated region
          $region70: #{custom-call.57} parent=64 // pred_check
            _
          $region71: #{custom-call.57} parent=64 // pred_check_branch
            %414 = sbr.rel target = $region73
          $region72: #{custom-call.57} parent=64 // pred_region
            %s416 = ssub.s32 256, 1
            loop: start=0, step=1, limit=1
            $region74: #{custom-call.57} parent=72 // loop_pre_header
              _
            $region75: #{custom-call.57} parent=72 // loop_header
              %s418 = sphi 0, %s422
              %p419 = scmp.ge.s32.totalorder %s418, 1
              %s423 = sphi %s400, %s400
              %s424 = sphi %s408, %s408
            $region76: #{custom-call.57} parent=72 // loop_header_branch
              %421 = sbr.rel (%p419) target = $region80
            $region77: #{custom-call.57} parent=72 // loop_body
              %v425 = vld [vmem:[%s423] sm:%s416]
              %426 = vst [vmem:[%s424] sm:%s416] %v425
            $region78: #{custom-call.57} parent=72 // loop_footer
              %s422 = sadd.s32 1, %s418
            $region79: #{custom-call.57} parent=72 // loop_footer_branch
              %417 = sbr.rel target = $region75
            $region80: #{custom-call.57} parent=72 // loop_exit
              _
          $region73: #{custom-call.57} parent=64 // pred_fallthru
            _
        $region65: #{custom-call.57} parent=53 // pred_fallthru
          _
        %441 = vnop
        // Predicated region
        $region96: #{custom-call.57} parent=53 // pred_check
          %p442 = pneg %p59
        $region97: #{custom-call.57} parent=53 // pred_check_branch
          %444 = sbr.rel (%p442) target = $region99
        $region98: #{custom-call.57} parent=53 // pred_region
          %p445 = scmp.lt.s32.totalorder %s15, 0
          %s446 = ssub.s32 0, %s15
          %s447 = scalar_select %p445, %s446, %s15
          %s448 = sshrl.u32 %s447, 3
          %s449 = ssub.s32 0, %s448
          %s450 = scalar_select %p445, %s449, %s448
          %s451 = smul.addr %s450, 2
          %s452 = scalar_lea.vmem %s2, %s451
          // Predicated region
          $region100: #{custom-call.57} parent=98 // pred_check
            _
          $region101: #{custom-call.57} parent=98 // pred_check_branch
            %454 = sbr.rel (0) target = $region103
          $region102: #{custom-call.57} parent=98 // pred_region
            // Predicated region
            $region104: #{custom-call.57} parent=102 // pred_check
              _
            $region105: #{custom-call.57} parent=102 // pred_check_branch
              %456 = sbr.rel target = $region107
            $region106: #{custom-call.57} parent=102 // pred_region
              // Predicated region
              $region119: #{custom-call.57} parent=106 // pred_check
                _
              $region120: #{custom-call.57} parent=106 // pred_check_branch
                %472 = sbr.rel (0) target = $region122
              $region121: #{custom-call.57} parent=106 // pred_region
                %s474 = ssub.s32 4, 1
                loop: start=0, step=1, limit=1
                $region123: #{custom-call.57} parent=121 // loop_pre_header
                  _
                $region124: #{custom-call.57} parent=121 // loop_header
                  %s476 = sphi 0, %s480
                  %p477 = scmp.ge.s32.totalorder %s476, 1
                  %s481 = sphi %s404, %s404
                  %s482 = sphi %s452, %s452
                $region125: #{custom-call.57} parent=121 // loop_header_branch
                  %479 = sbr.rel (%p477) target = $region129
                $region126: #{custom-call.57} parent=121 // loop_body
                  %v483 = vld [vmem:[%s481] sm:%s474]
                  %484 = vst [vmem:[%s482] sm:%s474] %v483
                $region127: #{custom-call.57} parent=121 // loop_footer
                  %s480 = sadd.s32 1, %s476
                $region128: #{custom-call.57} parent=121 // loop_footer_branch
                  %475 = sbr.rel target = $region124
                $region129: #{custom-call.57} parent=121 // loop_exit
                  _
              $region122: #{custom-call.57} parent=106 // pred_fallthru
                _
            $region107: #{custom-call.57} parent=102 // pred_fallthru
              _
            // Predicated region
            $region108: #{custom-call.57} parent=102 // pred_check
              _
            $region109: #{custom-call.57} parent=102 // pred_check_branch
              %458 = sbr.rel (0) target = $region111
            $region110: #{custom-call.57} parent=102 // pred_region
              %s460 = ssub.s32 4, 1
              loop: start=0, step=1, limit=1
              $region112: #{custom-call.57} parent=110 // loop_pre_header
                _
              $region113: #{custom-call.57} parent=110 // loop_header
                %s462 = sphi 0, %s466
                %p463 = scmp.ge.s32.totalorder %s462, 1
                %s467 = sphi %s404, %s404
                %s468 = sphi %s452, %s452
              $region114: #{custom-call.57} parent=110 // loop_header_branch
                %465 = sbr.rel (%p463) target = $region118
              $region115: #{custom-call.57} parent=110 // loop_body
                %v469 = vld [vmem:[%s467] sm:%s460]
                %470 = vst [vmem:[%s468] sm:%s460] %v469
              $region116: #{custom-call.57} parent=110 // loop_footer
                %s466 = sadd.s32 1, %s462
              $region117: #{custom-call.57} parent=110 // loop_footer_branch
                %461 = sbr.rel target = $region113
              $region118: #{custom-call.57} parent=110 // loop_exit
                _
            $region111: #{custom-call.57} parent=102 // pred_fallthru
              _
          $region103: #{custom-call.57} parent=98 // pred_fallthru
            _
          %485 = vnop
        $region99: #{custom-call.57} parent=53 // pred_fallthru
          _
      $region54: #{custom-call.57} parent=5 // pred_fallthru
        _
      %p486 = scmp.le.s32.totalorder 2, %s5
      // Predicated region
      $region130: #{custom-call.57} parent=5 // pred_check
        %p487 = pneg %p486
      $region131: #{custom-call.57} parent=5 // pred_check_branch
        %489 = sbr.rel (%p487) target = $region133
      $region132: #{custom-call.57} parent=5 // pred_region
        %s490 = ssub.s32 %s5, 2
        %s491 = sand.u32 %s11, 1
        %s492 = sand.u32 %s11, 1
        %s493 = smul.addr %s492, 8
        %s494 = scalar_lea.vmem [#allocation1], %s493
        // Predicated region
        $region134: #{custom-call.57} parent=132 // pred_check
          %p495 = pneg %p65
        $region135: #{custom-call.57} parent=132 // pred_check_branch
          %497 = sbr.rel (%p495) target = $region137
        $region136: #{custom-call.57} parent=132 // pred_region
          %s498 = sand.u32 %s50, 1
          %s499 = sand.u32 %s50, 1
          %s500 = smul.addr %s499, 2
          %s501 = scalar_lea.vmem [#allocation3], %s500
        $region137: #{custom-call.57} parent=132 // pred_fallthru
          _
      $region133: #{custom-call.57} parent=5 // pred_fallthru
        _
    $region6: #{custom-call.57} parent=1 // loop_footer
      %s9 = sadd.s32 1, %s5
    $region7: #{custom-call.57} parent=1 // loop_footer_branch
      %4 = sbr.rel target = $region3
    $region8: #{custom-call.57} parent=1 // loop_exit
      _

// kernel: custom-call.58
$region0: #{custom-call.58}
  %s0 = inlined_call_operand.vmem [shape: f32[2,3,3], index: 0, kind: input, shape index: {}]
  %s1 = inlined_call_operand.vmem [shape: f32[2,3,3], index: 1, kind: output, shape index: {}]
  $region1: #{custom-call.58} parent=0
    #allocation0 [shape = 'u8[4096]{0}', space=vmem, size = 0x1000, scoped, tag = 'operand span for operand 0']
    #allocation1 [shape = 'u8[4096]{0}', space=vmem, size = 0x1000, scoped, tag = 'packed  for operand 0']
    #allocation2 [shape = 'u8[4096]{0}', space=vmem, size = 0x1000, scoped, tag = 'operand span for operand 1']
    #allocation3 [shape = 'u8[4096]{0}', space=vmem, size = 0x1000, scoped, tag = 'packed  for operand 1']
    loop: start=0, step=1, limit=4
    $region2: #{custom-call.58} parent=1 // loop_pre_header
      _
    $region3: #{custom-call.58} parent=1 // loop_header
      %s3 = sphi 0, %s7
      %p4 = scmp.ge.s32.totalorder %s3, 4
    $region4: #{custom-call.58} parent=1 // loop_header_branch
      %6 = sbr.rel (%p4) target = $region8
    $region5: #{custom-call.58} parent=1 // loop_body
      %s8 = ssub.s32 %s3, 1
      %s9 = ssub.s32 %s3, 2
      %s10 = sadd.s32 %s3, 1
      %p11 = scmp.le.s32.totalorder 1, %s3
      %p12 = scmp.lt.s32.totalorder %s3, 3
      %p13 = pnand %p11, %p12
      %p14 = pneg %p13
      // Predicated region
      $region9: #{custom-call.58} parent=5 // pred_check
        _
      $region10: #{custom-call.58} parent=5 // pred_check_branch
        %16 = sbr.rel (%p13) target = $region12
      $region11: #{custom-call.58} parent=5 // pred_region
        %s17 = ssub.s32 %s3, 1
      $region12: #{custom-call.58} parent=5 // pred_fallthru
        _
      %p18 = scmp.lt.s32.totalorder %s3, 2
      // Predicated region
      $region13: #{custom-call.58} parent=5 // pred_check
        %p19 = pneg %p18
      $region14: #{custom-call.58} parent=5 // pred_check_branch
        %21 = sbr.rel (%p19) target = $region16
      $region15: #{custom-call.58} parent=5 // pred_region
        %s22 = sand.u32 %s3, 1
        %s23 = sand.u32 %s3, 1
        %s24 = smul.addr %s23, 4
        %s25 = scalar_lea.vmem [#allocation1], %s24
        %s26 = smul.addr %s3, 4
        %s27 = scalar_lea.vmem %s0, %s26
        // Predicated region
        $region17: #{custom-call.58} parent=15 // pred_check
          _
        $region18: #{custom-call.58} parent=15 // pred_check_branch
          %29 = sbr.rel (0) target = $region20
        $region19: #{custom-call.58} parent=15 // pred_region
          // Predicated region
          $region21: #{custom-call.58} parent=19 // pred_check
            _
          $region22: #{custom-call.58} parent=19 // pred_check_branch
            %31 = sbr.rel target = $region24
          $region23: #{custom-call.58} parent=19 // pred_region
            // Predicated region
            $region36: #{custom-call.58} parent=23 // pred_check
              _
            $region37: #{custom-call.58} parent=23 // pred_check_branch
              %47 = sbr.rel (0) target = $region39
            $region38: #{custom-call.58} parent=23 // pred_region
              %s49 = ssub.s32 16, 1
              loop: start=0, step=1, limit=1
              $region40: #{custom-call.58} parent=38 // loop_pre_header
                _
              $region41: #{custom-call.58} parent=38 // loop_header
                %s51 = sphi 0, %s55
                %p52 = scmp.ge.s32.totalorder %s51, 1
                %s56 = sphi %s27, %s27
                %s57 = sphi %s25, %s25
              $region42: #{custom-call.58} parent=38 // loop_header_branch
                %54 = sbr.rel (%p52) target = $region46
              $region43: #{custom-call.58} parent=38 // loop_body
                %v58 = vld [vmem:[%s56] sm:%s49]
                %59 = vst [vmem:[%s57] sm:%s49] %v58
              $region44: #{custom-call.58} parent=38 // loop_footer
                %s55 = sadd.s32 1, %s51
              $region45: #{custom-call.58} parent=38 // loop_footer_branch
                %50 = sbr.rel target = $region41
              $region46: #{custom-call.58} parent=38 // loop_exit
                _
            $region39: #{custom-call.58} parent=23 // pred_fallthru
              _
          $region24: #{custom-call.58} parent=19 // pred_fallthru
            _
          // Predicated region
          $region25: #{custom-call.58} parent=19 // pred_check
            _
          $region26: #{custom-call.58} parent=19 // pred_check_branch
            %33 = sbr.rel (0) target = $region28
          $region27: #{custom-call.58} parent=19 // pred_region
            %s35 = ssub.s32 16, 1
            loop: start=0, step=1, limit=1
            $region29: #{custom-call.58} parent=27 // loop_pre_header
              _
            $region30: #{custom-call.58} parent=27 // loop_header
              %s37 = sphi 0, %s41
              %p38 = scmp.ge.s32.totalorder %s37, 1
              %s42 = sphi %s27, %s27
              %s43 = sphi %s25, %s25
            $region31: #{custom-call.58} parent=27 // loop_header_branch
              %40 = sbr.rel (%p38) target = $region35
            $region32: #{custom-call.58} parent=27 // loop_body
              %v44 = vld [vmem:[%s42] sm:%s35]
              %45 = vst [vmem:[%s43] sm:%s35] %v44
            $region33: #{custom-call.58} parent=27 // loop_footer
              %s41 = sadd.s32 1, %s37
            $region34: #{custom-call.58} parent=27 // loop_footer_branch
              %36 = sbr.rel target = $region30
            $region35: #{custom-call.58} parent=27 // loop_exit
              _
          $region28: #{custom-call.58} parent=19 // pred_fallthru
            _
        $region20: #{custom-call.58} parent=15 // pred_fallthru
          _
        %60 = vnop
      $region16: #{custom-call.58} parent=5 // pred_fallthru
        _
      %p61 = scmp.le.s32.totalorder 1, %s3
      %p62 = scmp.lt.s32.totalorder %s3, 3
      %p63 = pnand %p61, %p62
      %p64 = pneg %p63
      // Predicated region
      $region47: #{custom-call.58} parent=5 // pred_check
        _
      $region48: #{custom-call.58} parent=5 // pred_check_branch
        %66 = sbr.rel (%p63) target = $region50
      $region49: #{custom-call.58} parent=5 // pred_region
        %s67 = ssub.s32 %s3, 1
        %s68 = sand.u32 %s8, 1
        %s69 = sand.u32 %s8, 1
        %s70 = smul.addr %s69, 4
        %s71 = scalar_lea.vmem [#allocation1], %s70
        %s72 = sand.u32 %s8, 1
        %s73 = sand.u32 %s8, 1
        %s74 = smul.addr %s73, 4
        %s75 = scalar_lea.vmem [#allocation1], %s74
        %s76 = sand.u32 %s8, 1
        %s77 = sand.u32 %s8, 1
        %s78 = smul.addr %s77, 4
        %s79 = scalar_lea.vmem [#allocation3], %s78
        %s81 = ssub.s32 16, 1
        %v82 = vld [vmem:[%s75] sm:%s81]
        %83 = vst [vmem:[#allocation0] sm:%s81] %v82
        %v84 = vlaneseq
        %v85 = vand.u32 %v84, 127
        %v86 = vlaneseq
        %v87 = vshrl.u32 %v86, 7
        %vm89 = vcmp.eq.s32.totalorder %v85, %v87
        %v90 = vld [vmem:[#allocation0] sm:$0xff]
        %v91 = vlaneseq
        %v92 = vand.u32 %v91, 127
        %vm93 = vcmp.eq.s32.totalorder %v92, 0
        %v94 = vsel %vm93, %v90, 1.0
        %v95 = vsel %vm89, %v94, 0.0
        %s96 = scalar_lea.vmem [#allocation0], 1
        %v97 = vld [vmem:[%s96] ss:$0 sm:$0xff]
        %vm98 = vcmask 23552
        %v99 = vsel %vm98, %v97, 0.0
        %v100 = vlaneseq
        %v101 = vand.u32 %v100, 127
        %vm102 = vcmp.eq.s32.totalorder %v101, 1
        %v103 = vmul.f32 %v99, %v95
        %104 = vadd.xlane.f32.xlu0 %v103
        %v105 = vpop.xlane.xlu0 %104
        %v106 = vsel %vm102, %v105, %v95
        %s107 = scalar_lea.vmem [#allocation0], 2
        %v108 = vld [vmem:[%s107] ss:$0 sm:$0xff]
        %vm109 = vcmask 23552
        %v110 = vsel %vm109, %v108, 0.0
        %v111 = vlaneseq
        %v112 = vand.u32 %v111, 127
        %vm113 = vcmp.eq.s32.totalorder %v112, 2
        %v114 = vmul.f32 %v110, %v106
        %115 = vadd.xlane.f32.xlu0 %v114
        %v116 = vpop.xlane.xlu0 %115
        %v117 = vsel %vm113, %v116, %v106
        %118 = vst [vmem:[#allocation2] sm:$0xff] %v117
        %s120 = ssub.s32 16, 1
        %v121 = vld [vmem:[#allocation2] sm:%s120]
        %s123 = ssub.s32 16, 1
        %124 = vst [vmem:[%s79] sm:%s123] %v121
        %s125 = sand.u32 %s8, 1
        %s126 = sand.u32 %s8, 1
        %s127 = smul.addr %s126, 4
        %s128 = scalar_lea.vmem [#allocation3], %s127
        %s129 = smul.addr %s8, 4
        %s130 = scalar_lea.vmem %s1, %s129
        // Predicated region
        $region51: #{custom-call.58} parent=49 // pred_check
          _
        $region52: #{custom-call.58} parent=49 // pred_check_branch
          %132 = sbr.rel (0) target = $region54
        $region53: #{custom-call.58} parent=49 // pred_region
          // Predicated region
          $region55: #{custom-call.58} parent=53 // pred_check
            _
          $region56: #{custom-call.58} parent=53 // pred_check_branch
            %134 = sbr.rel target = $region58
          $region57: #{custom-call.58} parent=53 // pred_region
            // Predicated region
            $region70: #{custom-call.58} parent=57 // pred_check
              _
            $region71: #{custom-call.58} parent=57 // pred_check_branch
              %150 = sbr.rel (0) target = $region73
            $region72: #{custom-call.58} parent=57 // pred_region
              %s152 = ssub.s32 16, 1
              loop: start=0, step=1, limit=1
              $region74: #{custom-call.58} parent=72 // loop_pre_header
                _
              $region75: #{custom-call.58} parent=72 // loop_header
                %s154 = sphi 0, %s158
                %p155 = scmp.ge.s32.totalorder %s154, 1
                %s159 = sphi %s128, %s128
                %s160 = sphi %s130, %s130
              $region76: #{custom-call.58} parent=72 // loop_header_branch
                %157 = sbr.rel (%p155) target = $region80
              $region77: #{custom-call.58} parent=72 // loop_body
                %v161 = vld [vmem:[%s159] sm:%s152]
                %162 = vst [vmem:[%s160] sm:%s152] %v161
              $region78: #{custom-call.58} parent=72 // loop_footer
                %s158 = sadd.s32 1, %s154
              $region79: #{custom-call.58} parent=72 // loop_footer_branch
                %153 = sbr.rel target = $region75
              $region80: #{custom-call.58} parent=72 // loop_exit
                _
            $region73: #{custom-call.58} parent=57 // pred_fallthru
              _
          $region58: #{custom-call.58} parent=53 // pred_fallthru
            _
          // Predicated region
          $region59: #{custom-call.58} parent=53 // pred_check
            _
          $region60: #{custom-call.58} parent=53 // pred_check_branch
            %136 = sbr.rel (0) target = $region62
          $region61: #{custom-call.58} parent=53 // pred_region
            %s138 = ssub.s32 16, 1
            loop: start=0, step=1, limit=1
            $region63: #{custom-call.58} parent=61 // loop_pre_header
              _
            $region64: #{custom-call.58} parent=61 // loop_header
              %s140 = sphi 0, %s144
              %p141 = scmp.ge.s32.totalorder %s140, 1
              %s145 = sphi %s128, %s128
              %s146 = sphi %s130, %s130
            $region65: #{custom-call.58} parent=61 // loop_header_branch
              %143 = sbr.rel (%p141) target = $region69
            $region66: #{custom-call.58} parent=61 // loop_body
              %v147 = vld [vmem:[%s145] sm:%s138]
              %148 = vst [vmem:[%s146] sm:%s138] %v147
            $region67: #{custom-call.58} parent=61 // loop_footer
              %s144 = sadd.s32 1, %s140
            $region68: #{custom-call.58} parent=61 // loop_footer_branch
              %139 = sbr.rel target = $region64
            $region69: #{custom-call.58} parent=61 // loop_exit
              _
          $region62: #{custom-call.58} parent=53 // pred_fallthru
            _
        $region54: #{custom-call.58} parent=49 // pred_fallthru
          _
        %163 = vnop
      $region50: #{custom-call.58} parent=5 // pred_fallthru
        _
      %p164 = scmp.le.s32.totalorder 2, %s3
      // Predicated region
      $region81: #{custom-call.58} parent=5 // pred_check
        %p165 = pneg %p164
      $region82: #{custom-call.58} parent=5 // pred_check_branch
        %167 = sbr.rel (%p165) target = $region84
      $region83: #{custom-call.58} parent=5 // pred_region
        %s168 = ssub.s32 %s3, 2
        %s169 = sand.u32 %s9, 1
        %s170 = sand.u32 %s9, 1
        %s171 = smul.addr %s170, 4
        %s172 = scalar_lea.vmem [#allocation3], %s171
      $region84: #{custom-call.58} parent=5 // pred_fallthru
        _
    $region6: #{custom-call.58} parent=1 // loop_footer
      %s7 = sadd.s32 1, %s3
    $region7: #{custom-call.58} parent=1 // loop_footer_branch
      %2 = sbr.rel target = $region3
    $region8: #{custom-call.58} parent=1 // loop_exit
      _

// kernel: custom-call.50
$region0: #{custom-call.50}
  %s0 = inlined_call_operand.hbm [shape: pred[2], index: 0, kind: output, shape index: {}]

// kernel: custom-call.55
$region0: #{custom-call.55}
  %s0 = inlined_call_operand.vmem [shape: f32[2,3,3], index: 0, kind: input, shape index: {}]
  %s1 = inlined_call_operand.vmem [shape: f32[2,3,3], index: 1, kind: output, shape index: {}]
  $region1: #{custom-call.55} parent=0
    #allocation0 [shape = 'u8[4096]{0}', space=vmem, size = 0x1000, scoped, tag = 'operand span for operand 0']
    #allocation1 [shape = 'u8[4096]{0}', space=vmem, size = 0x1000, scoped, tag = 'packed  for operand 0']
    #allocation2 [shape = 'u8[4096]{0}', space=vmem, size = 0x1000, scoped, tag = 'operand span for operand 1']
    #allocation3 [shape = 'u8[4096]{0}', space=vmem, size = 0x1000, scoped, tag = 'packed  for operand 1']
    loop: start=0, step=1, limit=4
    $region2: #{custom-call.55} parent=1 // loop_pre_header
      _
    $region3: #{custom-call.55} parent=1 // loop_header
      %s3 = sphi 0, %s7
      %p4 = scmp.ge.s32.totalorder %s3, 4
      %s10 = sphi 0, %s29
      %s11 = sphi 0, %s25
      %s12 = sphi 0, %s21
      %s13 = sphi 0, %s10
      %s14 = sphi 0, %s11
      %s15 = sphi 0, %s12
      %s16 = sphi 0, %s13
      %s17 = sphi 0, %s14
      %s18 = sphi 0, %s15
    $region4: #{custom-call.55} parent=1 // loop_header_branch
      %6 = sbr.rel (%p4) target = $region8
    $region5: #{custom-call.55} parent=1 // loop_body
      %s8 = ssub.s32 %s3, 1
      %s9 = ssub.s32 %s3, 2
      %s19 = sadd.s32 1, %s12
      %p20 = scmp.ge.s32.totalorder %s19, 1
      %s21 = scalar_select %p20, 0, %s19
      %s22 = sadd.s32 1, %s11
      %s23 = scalar_select %p20, %s22, %s11
      %p24 = scmp.ge.s32.totalorder %s23, 1
      %s25 = scalar_select %p24, 0, %s23
      %s26 = sadd.s32 1, %s10
      %s27 = scalar_select %p24, %s26, %s10
      %p28 = scmp.ge.s32.totalorder %s27, 2
      %s29 = scalar_select %p28, 0, %s27
      %p30 = scmp.le.s32.totalorder 1, %s3
      %p31 = scmp.lt.s32.totalorder %s3, 3
      %p32 = pnand %p30, %p31
      %p33 = pneg %p32
      // Predicated region
      $region9: #{custom-call.55} parent=5 // pred_check
        _
      $region10: #{custom-call.55} parent=5 // pred_check_branch
        %35 = sbr.rel (%p32) target = $region12
      $region11: #{custom-call.55} parent=5 // pred_region
        %s36 = ssub.s32 %s3, 1
      $region12: #{custom-call.55} parent=5 // pred_fallthru
        _
      %p37 = scmp.lt.s32.totalorder %s3, 2
      // Predicated region
      $region13: #{custom-call.55} parent=5 // pred_check
        %p38 = pneg %p37
      $region14: #{custom-call.55} parent=5 // pred_check_branch
        %40 = sbr.rel (%p38) target = $region16
      $region15: #{custom-call.55} parent=5 // pred_region
        %s41 = sand.u32 %s3, 1
        %s42 = sand.u32 %s3, 1
        %s43 = smul.addr %s42, 4
        %s44 = scalar_lea.vmem [#allocation1], %s43
        %s45 = sadd.s32 %s12, %s11
        %s46 = sadd.s32 %s45, %s10
        %s47 = smul.addr %s46, 4
        %s48 = scalar_lea.vmem %s0, %s47
        // Predicated region
        $region17: #{custom-call.55} parent=15 // pred_check
          _
        $region18: #{custom-call.55} parent=15 // pred_check_branch
          %50 = sbr.rel (0) target = $region20
        $region19: #{custom-call.55} parent=15 // pred_region
          // Predicated region
          $region21: #{custom-call.55} parent=19 // pred_check
            _
          $region22: #{custom-call.55} parent=19 // pred_check_branch
            %52 = sbr.rel target = $region24
          $region23: #{custom-call.55} parent=19 // pred_region
            // Predicated region
            $region36: #{custom-call.55} parent=23 // pred_check
              _
            $region37: #{custom-call.55} parent=23 // pred_check_branch
              %68 = sbr.rel (0) target = $region39
            $region38: #{custom-call.55} parent=23 // pred_region
              %s70 = ssub.s32 16, 1
              loop: start=0, step=1, limit=1
              $region40: #{custom-call.55} parent=38 // loop_pre_header
                _
              $region41: #{custom-call.55} parent=38 // loop_header
                %s72 = sphi 0, %s76
                %p73 = scmp.ge.s32.totalorder %s72, 1
                %s77 = sphi %s48, %s48
                %s78 = sphi %s44, %s44
              $region42: #{custom-call.55} parent=38 // loop_header_branch
                %75 = sbr.rel (%p73) target = $region46
              $region43: #{custom-call.55} parent=38 // loop_body
                %v79 = vld [vmem:[%s77] sm:%s70]
                %80 = vst [vmem:[%s78] sm:%s70] %v79
              $region44: #{custom-call.55} parent=38 // loop_footer
                %s76 = sadd.s32 1, %s72
              $region45: #{custom-call.55} parent=38 // loop_footer_branch
                %71 = sbr.rel target = $region41
              $region46: #{custom-call.55} parent=38 // loop_exit
                _
            $region39: #{custom-call.55} parent=23 // pred_fallthru
              _
          $region24: #{custom-call.55} parent=19 // pred_fallthru
            _
          // Predicated region
          $region25: #{custom-call.55} parent=19 // pred_check
            _
          $region26: #{custom-call.55} parent=19 // pred_check_branch
            %54 = sbr.rel (0) target = $region28
          $region27: #{custom-call.55} parent=19 // pred_region
            %s56 = ssub.s32 16, 1
            loop: start=0, step=1, limit=1
            $region29: #{custom-call.55} parent=27 // loop_pre_header
              _
            $region30: #{custom-call.55} parent=27 // loop_header
              %s58 = sphi 0, %s62
              %p59 = scmp.ge.s32.totalorder %s58, 1
              %s63 = sphi %s48, %s48
              %s64 = sphi %s44, %s44
            $region31: #{custom-call.55} parent=27 // loop_header_branch
              %61 = sbr.rel (%p59) target = $region35
            $region32: #{custom-call.55} parent=27 // loop_body
              %v65 = vld [vmem:[%s63] sm:%s56]
              %66 = vst [vmem:[%s64] sm:%s56] %v65
            $region33: #{custom-call.55} parent=27 // loop_footer
              %s62 = sadd.s32 1, %s58
            $region34: #{custom-call.55} parent=27 // loop_footer_branch
              %57 = sbr.rel target = $region30
            $region35: #{custom-call.55} parent=27 // loop_exit
              _
          $region28: #{custom-call.55} parent=19 // pred_fallthru
            _
        $region20: #{custom-call.55} parent=15 // pred_fallthru
          _
        %81 = vnop
      $region16: #{custom-call.55} parent=5 // pred_fallthru
        _
      %p82 = scmp.le.s32.totalorder 1, %s3
      %p83 = scmp.lt.s32.totalorder %s3, 3
      %p84 = pnand %p82, %p83
      %p85 = pneg %p84
      // Predicated region
      $region47: #{custom-call.55} parent=5 // pred_check
        _
      $region48: #{custom-call.55} parent=5 // pred_check_branch
        %87 = sbr.rel (%p84) target = $region50
      $region49: #{custom-call.55} parent=5 // pred_region
        %s88 = ssub.s32 %s3, 1
        %s89 = sand.u32 %s8, 1
        %s90 = sand.u32 %s8, 1
        %s91 = smul.addr %s90, 4
        %s92 = scalar_lea.vmem [#allocation1], %s91
        %s93 = sand.u32 %s8, 1
        %s94 = sand.u32 %s8, 1
        %s95 = smul.addr %s94, 4
        %s96 = scalar_lea.vmem [#allocation1], %s95
        %s97 = sand.u32 %s8, 1
        %s98 = sand.u32 %s8, 1
        %s99 = smul.addr %s98, 4
        %s100 = scalar_lea.vmem [#allocation3], %s99
        %s102 = ssub.s32 16, 1
        %v103 = vld [vmem:[%s96] sm:%s102]
        %104 = vst [vmem:[#allocation0] sm:%s102] %v103
        %105 = vst [vmem:[#allocation2] sm:$0xff] 0.0
        %vm106 = vcmask 7168
        %v107 = vld [vmem:[#allocation2] ss:$0 sm:$0xff]
        %v108 = vld [vmem:[#allocation0] ss:$0 sm:$0xff]
        %v109 = vmul.f32 %v107, %v107
        %110 = vadd.xlane.f32.xlu0 %v109
        %v111 = vpop.xlane.xlu0 %110
        %v112 = vsub.f32 %v108, %v111
        %v113 = vrsqrt.pop %v112
        %v114 = vmul.f32 %v113, %v112
        %v115 = vmul.f32 %v114, %v113
        %v116 = vmul.f32 0.5, %v115
        %v117 = vsub.f32 1.5, %v116
        %v118 = vmul.f32 %v113, %v117
        %vm119 = vweird.f32 %v112
        %vm120 = vweird.f32 %v113
        %vm121 = vmor %vm119, %vm120
        %v122 = vsel %vm121, %v113, %v118
        %v123 = vld [vmem:[#allocation0] sm:$0xff]
        %v124 = vld [vmem:[#allocation2] sm:$0xff]
        %v125 = vmul.f32 %v124, %v107
        %126 = vadd.xlane.f32.xlu0 %v125
        %v127 = vpop.xlane.xlu0 %126
        %v128 = vsub.f32 %v123, %v127
        %v129 = vmul.f32 %v128, %v122
        %v130 = vsel %vm106, %v129, 0.0
        %v131 = vadd.f32 %v124, %v130
        %132 = vst [vmem:[#allocation2] sm:$0xff] %v131
        %vm133 = vcmask 15368
        %s134 = scalar_lea.vmem [#allocation2], 1
        %v135 = vld [vmem:[%s134] ss:$0 sm:$0xff]
        %s136 = scalar_lea.vmem [#allocation0], 1
        %v137 = vld [vmem:[%s136] ss:$0 sm:$0xff]
        %v138 = vmul.f32 %v135, %v135
        %139 = vadd.xlane.f32.xlu0 %v138
        %v140 = vpop.xlane.xlu0 %139
        %v141 = vsub.f32 %v137, %v140
        %v142 = vrsqrt.pop %v141
        %v143 = vmul.f32 %v142, %v141
        %v144 = vmul.f32 %v143, %v142
        %v145 = vmul.f32 0.5, %v144
        %v146 = vsub.f32 1.5, %v145
        %v147 = vmul.f32 %v142, %v146
        %vm148 = vweird.f32 %v141
        %vm149 = vweird.f32 %v142
        %vm150 = vmor %vm148, %vm149
        %v151 = vsel %vm150, %v142, %v147
        %v152 = vld [vmem:[#allocation0] sm:$0xff]
        %v153 = vld [vmem:[#allocation2] sm:$0xff]
        %v154 = vmul.f32 %v153, %v135
        %155 = vadd.xlane.f32.xlu0 %v154
        %v156 = vpop.xlane.xlu0 %155
        %v157 = vsub.f32 %v152, %v156
        %v158 = vmul.f32 %v157, %v151
        %vm159 = vcmask 1047553
        %vm160 = vmand %vm133, %vm159
        %v161 = vsel %vm160, %v158, 0.0
        %v162 = vadd.f32 %v153, %v161
        %163 = vst [vmem:[#allocation2] sm:$0xff] %v162
        %vm164 = vcmask 23568
        %s165 = scalar_lea.vmem [#allocation2], 2
        %v166 = vld [vmem:[%s165] ss:$0 sm:$0xff]
        %s167 = scalar_lea.vmem [#allocation0], 2
        %v168 = vld [vmem:[%s167] ss:$0 sm:$0xff]
        %v169 = vmul.f32 %v166, %v166
        %170 = vadd.xlane.f32.xlu0 %v169
        %v171 = vpop.xlane.xlu0 %170
        %v172 = vsub.f32 %v168, %v171
        %v173 = vrsqrt.pop %v172
        %v174 = vmul.f32 %v173, %v172
        %v175 = vmul.f32 %v174, %v173
        %v176 = vmul.f32 0.5, %v175
        %v177 = vsub.f32 1.5, %v176
        %v178 = vmul.f32 %v173, %v177
        %vm179 = vweird.f32 %v172
        %vm180 = vweird.f32 %v173
        %vm181 = vmor %vm179, %vm180
        %v182 = vsel %vm181, %v173, %v178
        %v183 = vld [vmem:[#allocation0] sm:$0xff]
        %v184 = vld [vmem:[#allocation2] sm:$0xff]
        %v185 = vmul.f32 %v184, %v166
        %186 = vadd.xlane.f32.xlu0 %v185
        %v187 = vpop.xlane.xlu0 %186
        %v188 = vsub.f32 %v183, %v187
        %v189 = vmul.f32 %v188, %v182
        %vm190 = vcmask 1047554
        %vm191 = vmand %vm164, %vm190
        %v192 = vsel %vm191, %v189, 0.0
        %v193 = vadd.f32 %v184, %v192
        %194 = vst [vmem:[#allocation2] sm:$0xff] %v193
        %s196 = ssub.s32 16, 1
        %v197 = vld [vmem:[#allocation2] sm:%s196]
        %s199 = ssub.s32 16, 1
        %200 = vst [vmem:[%s100] sm:%s199] %v197
        %s201 = sand.u32 %s8, 1
        %s202 = sand.u32 %s8, 1
        %s203 = smul.addr %s202, 4
        %s204 = scalar_lea.vmem [#allocation3], %s203
        %s205 = sadd.s32 %s15, %s14
        %s206 = sadd.s32 %s205, %s13
        %s207 = smul.addr %s206, 4
        %s208 = scalar_lea.vmem %s1, %s207
        // Predicated region
        $region51: #{custom-call.55} parent=49 // pred_check
          _
        $region52: #{custom-call.55} parent=49 // pred_check_branch
          %210 = sbr.rel (0) target = $region54
        $region53: #{custom-call.55} parent=49 // pred_region
          // Predicated region
          $region55: #{custom-call.55} parent=53 // pred_check
            _
          $region56: #{custom-call.55} parent=53 // pred_check_branch
            %212 = sbr.rel target = $region58
          $region57: #{custom-call.55} parent=53 // pred_region
            // Predicated region
            $region70: #{custom-call.55} parent=57 // pred_check
              _
            $region71: #{custom-call.55} parent=57 // pred_check_branch
              %228 = sbr.rel (0) target = $region73
            $region72: #{custom-call.55} parent=57 // pred_region
              %s230 = ssub.s32 16, 1
              loop: start=0, step=1, limit=1
              $region74: #{custom-call.55} parent=72 // loop_pre_header
                _
              $region75: #{custom-call.55} parent=72 // loop_header
                %s232 = sphi 0, %s236
                %p233 = scmp.ge.s32.totalorder %s232, 1
                %s237 = sphi %s204, %s204
                %s238 = sphi %s208, %s208
              $region76: #{custom-call.55} parent=72 // loop_header_branch
                %235 = sbr.rel (%p233) target = $region80
              $region77: #{custom-call.55} parent=72 // loop_body
                %v239 = vld [vmem:[%s237] sm:%s230]
                %240 = vst [vmem:[%s238] sm:%s230] %v239
              $region78: #{custom-call.55} parent=72 // loop_footer
                %s236 = sadd.s32 1, %s232
              $region79: #{custom-call.55} parent=72 // loop_footer_branch
                %231 = sbr.rel target = $region75
              $region80: #{custom-call.55} parent=72 // loop_exit
                _
            $region73: #{custom-call.55} parent=57 // pred_fallthru
              _
          $region58: #{custom-call.55} parent=53 // pred_fallthru
            _
          // Predicated region
          $region59: #{custom-call.55} parent=53 // pred_check
            _
          $region60: #{custom-call.55} parent=53 // pred_check_branch
            %214 = sbr.rel (0) target = $region62
          $region61: #{custom-call.55} parent=53 // pred_region
            %s216 = ssub.s32 16, 1
            loop: start=0, step=1, limit=1
            $region63: #{custom-call.55} parent=61 // loop_pre_header
              _
            $region64: #{custom-call.55} parent=61 // loop_header
              %s218 = sphi 0, %s222
              %p219 = scmp.ge.s32.totalorder %s218, 1
              %s223 = sphi %s204, %s204
              %s224 = sphi %s208, %s208
            $region65: #{custom-call.55} parent=61 // loop_header_branch
              %221 = sbr.rel (%p219) target = $region69
            $region66: #{custom-call.55} parent=61 // loop_body
              %v225 = vld [vmem:[%s223] sm:%s216]
              %226 = vst [vmem:[%s224] sm:%s216] %v225
            $region67: #{custom-call.55} parent=61 // loop_footer
              %s222 = sadd.s32 1, %s218
            $region68: #{custom-call.55} parent=61 // loop_footer_branch
              %217 = sbr.rel target = $region64
            $region69: #{custom-call.55} parent=61 // loop_exit
              _
          $region62: #{custom-call.55} parent=53 // pred_fallthru
            _
        $region54: #{custom-call.55} parent=49 // pred_fallthru
          _
        %241 = vnop
      $region50: #{custom-call.55} parent=5 // pred_fallthru
        _
      %p242 = scmp.le.s32.totalorder 2, %s3
      // Predicated region
      $region81: #{custom-call.55} parent=5 // pred_check
        %p243 = pneg %p242
      $region82: #{custom-call.55} parent=5 // pred_check_branch
        %245 = sbr.rel (%p243) target = $region84
      $region83: #{custom-call.55} parent=5 // pred_region
        %s246 = ssub.s32 %s3, 2
        %s247 = sand.u32 %s9, 1
        %s248 = sand.u32 %s9, 1
        %s249 = smul.addr %s248, 4
        %s250 = scalar_lea.vmem [#allocation3], %s249
      $region84: #{custom-call.55} parent=5 // pred_fallthru
        _
    $region6: #{custom-call.55} parent=1 // loop_footer
      %s7 = sadd.s32 1, %s3
    $region7: #{custom-call.55} parent=1 // loop_footer_branch
      %2 = sbr.rel target = $region3
    $region8: #{custom-call.55} parent=1 // loop_exit
      _

// kernel: kabsch_loss.1
$region0: #{kabsch_loss.1}
  #allocation0 [shape = 'u32[]', space=smem, size = 0x4, offset = 0x4, fixed_abs, tag = 'smem constant byte address 0x4 - core index']
  #allocation1 [shape = 'u32[72,128]{1,0:T(1,128)}', space=vmem, size = 0x9000, scoped, tag = 'internal scratch']
  #allocation2 [shape = 'f32[3,128]{1,0:T(4,128)}', space=vmem, size = 0x800, scoped, tag = 'scratch operand']
  %s0 = inlined_call_operand.vmem [shape: f32[2,3,128], index: 0, kind: input, shape index: {}]
  %s1 = inlined_call_operand.vmem [shape: f32[2,3,128], index: 1, kind: input, shape index: {}]
  %s2 = inlined_call_operand.vmem [shape: f32[2,1,3,128], index: 2, kind: output, shape index: {}]
  %s3 = sld [smem:[#allocation0]]
  $region49: #{kabsch_loss.1} parent=0
    _
  %s5 = ssub.s32 1, %s3
  %s6 = scalar_select 0, %s5, %s3
  loop: start=0, step=1, limit=4
  $region2: #{kabsch_loss.1} parent=0 // loop_pre_header
    _
  $region3: #{kabsch_loss.1} parent=0 // loop_header
    %s8 = sphi 0, %s12
    %p9 = scmp.ge.s32.totalorder %s8, 4
    %s15 = sphi 0, %s34
    %s16 = sphi 0, %s30
    %s17 = sphi 0, %s26
    %s18 = sphi 0, %s15
    %s19 = sphi 0, %s16
    %s20 = sphi 0, %s17
    %s21 = sphi 0, %s18
    %s22 = sphi 0, %s19
    %s23 = sphi 0, %s20
    %s41 = sphi 0, %s43
    %s44 = sphi 0, %s41
    %s45 = sphi 0, %s44
    %s61 = sphi 0, %s45
    %s71 = sphi 0, %s73
    %s74 = sphi 0, %s71
    %s75 = sphi 0, %s74
    %s91 = sphi 0, %s75
    %s99 = sphi 0, %s101
    %s102 = sphi 0, %s99
    %s103 = sphi 0, %s102
    %s119 = sphi 0, %s103
  $region4: #{kabsch_loss.1} parent=0 // loop_header_branch
    %11 = sbr.rel (%p9) target = $region8
  $region5: #{kabsch_loss.1} parent=0 // loop_body
    %s13 = ssub.s32 %s8, 1
    %s14 = ssub.s32 %s8, 2
    %s24 = sadd.s32 1, %s17
    %p25 = scmp.ge.s32.totalorder %s24, 1
    %s26 = scalar_select %p25, 0, %s24
    %s27 = sadd.s32 1, %s16
    %s28 = scalar_select %p25, %s27, %s16
    %p29 = scmp.ge.s32.totalorder %s28, 1
    %s30 = scalar_select %p29, 0, %s28
    %s31 = sadd.s32 1, %s15
    %s32 = scalar_select %p29, %s31, %s15
    %p33 = scmp.ge.s32.totalorder %s32, 2
    %s34 = scalar_select %p33, 0, %s32
    %s35 = sadd.s32 %s16, %s17
    %s36 = sadd.s32 %s30, %s26
    %s37 = ssub.s32 %s15, %s34
    %s38 = ssub.s32 %s35, %s36
    %s39 = sor.u32 %s37, %s38
    %p40 = scmp.eq.s32.totalorder %s39, 0
    %s42 = sadd.s32 %s41, 1
    %s43 = scalar_select %p40, %s41, %s42
    %p46 = pneg %p40
    %p47 = scmp.eq.s32.totalorder %s8, 1
    %p48 = por %p46, %p47
    %p49 = scmp.ne.s32.totalorder %s41, %s44
    %p50 = scmp.eq.s32.totalorder %s8, 0
    %p51 = por %p49, %p50
    %p52 = scmp.ne.s32.totalorder %s41, %s44
    %p53 = scmp.eq.s32.totalorder %s13, 1
    %p54 = por %p52, %p53
    %p55 = scmp.ne.s32.totalorder %s44, %s45
    %p56 = scmp.eq.s32.totalorder %s13, 0
    %p57 = por %p55, %p56
    %p58 = scmp.ne.s32.totalorder %s44, %s45
    %p59 = scmp.eq.s32.totalorder %s14, 1
    %p60 = por %p58, %p59
    %p62 = scmp.ne.s32.totalorder %s45, %s61
    %p63 = scmp.eq.s32.totalorder %s14, 0
    %p64 = por %p62, %p63
    %s65 = sadd.s32 %s16, %s17
    %s66 = sadd.s32 %s30, %s26
    %s67 = ssub.s32 %s15, %s34
    %s68 = ssub.s32 %s65, %s66
    %s69 = sor.u32 %s67, %s68
    %p70 = scmp.eq.s32.totalorder %s69, 0
    %s72 = sadd.s32 %s71, 1
    %s73 = scalar_select %p70, %s71, %s72
    %p76 = pneg %p70
    %p77 = scmp.eq.s32.totalorder %s8, 1
    %p78 = por %p76, %p77
    %p79 = scmp.ne.s32.totalorder %s71, %s74
    %p80 = scmp.eq.s32.totalorder %s8, 0
    %p81 = por %p79, %p80
    %p82 = scmp.ne.s32.totalorder %s71, %s74
    %p83 = scmp.eq.s32.totalorder %s13, 1
    %p84 = por %p82, %p83
    %p85 = scmp.ne.s32.totalorder %s74, %s75
    %p86 = scmp.eq.s32.totalorder %s13, 0
    %p87 = por %p85, %p86
    %p88 = scmp.ne.s32.totalorder %s74, %s75
    %p89 = scmp.eq.s32.totalorder %s14, 1
    %p90 = por %p88, %p89
    %p92 = scmp.ne.s32.totalorder %s75, %s91
    %p93 = scmp.eq.s32.totalorder %s14, 0
    %p94 = por %p92, %p93
    %s95 = ssub.s32 %s15, %s34
    %s96 = ssub.s32 %s16, %s30
    %s97 = sor.u32 %s95, %s96
    %p98 = scmp.eq.s32.totalorder %s97, 0
    %s100 = sadd.s32 %s99, 1
    %s101 = scalar_select %p98, %s99, %s100
    %p104 = pneg %p98
    %p105 = scmp.eq.s32.totalorder %s8, 1
    %p106 = por %p104, %p105
    %p107 = scmp.ne.s32.totalorder %s99, %s102
    %p108 = scmp.eq.s32.totalorder %s8, 0
    %p109 = por %p107, %p108
    %p110 = scmp.ne.s32.totalorder %s99, %s102
    %p111 = scmp.eq.s32.totalorder %s13, 1
    %p112 = por %p110, %p111
    %p113 = scmp.ne.s32.totalorder %s102, %s103
    %p114 = scmp.eq.s32.totalorder %s13, 0
    %p115 = por %p113, %p114
    %p116 = scmp.ne.s32.totalorder %s102, %s103
    %p117 = scmp.eq.s32.totalorder %s14, 1
    %p118 = por %p116, %p117
    %p120 = scmp.ne.s32.totalorder %s103, %s119
    %p121 = scmp.eq.s32.totalorder %s14, 0
    %p122 = por %p120, %p121
    %p123 = scmp.le.s32.totalorder 1, %s8
    %p124 = scmp.lt.s32.totalorder %s8, 3
    %p125 = pnand %p123, %p124
    %p126 = pneg %p125
    // Predicated region
    $region9: #{kabsch_loss.1} parent=5 // pred_check
      _
    $region10: #{kabsch_loss.1} parent=5 // pred_check_branch
      %128 = sbr.rel (%p125) target = $region12
    $region11: #{kabsch_loss.1} parent=5 // pred_region
      %s129 = ssub.s32 %s8, 1
    $region12: #{kabsch_loss.1} parent=5 // pred_fallthru
      _
    %p130 = scmp.lt.s32.totalorder %s8, 2
    // Predicated region
    $region13: #{kabsch_loss.1} parent=5 // pred_check
      %p131 = pneg %p130
    $region14: #{kabsch_loss.1} parent=5 // pred_check_branch
      %133 = sbr.rel (%p131) target = $region16
    $region15: #{kabsch_loss.1} parent=5 // pred_region
      // Predicated region
      $region17: #{kabsch_loss.1} parent=15 // pred_check
        %p134 = pneg %p51
      $region18: #{kabsch_loss.1} parent=15 // pred_check_branch
        %136 = sbr.rel (%p134) target = $region20
      $region19: #{kabsch_loss.1} parent=15 // pred_region
        %s137 = sadd.s32 %s16, %s17
        %p138 = scmp.lt.s32.totalorder %s15, 1
        %s139 = scalar_select %p138, %s15, 1
        %p140 = scmp.lt.s32.totalorder %s137, 0
        %s141 = scalar_select %p140, %s137, 0
        %s142 = sadd.s32 %s141, %s139
        %s143 = smul.addr %s142, 4
        %s144 = scalar_lea.vmem %s0, %s143
        %s145 = sadd.s32 %s16, %s17
      $region20: #{kabsch_loss.1} parent=15 // pred_fallthru
        _
      // Predicated region
      $region21: #{kabsch_loss.1} parent=15 // pred_check
        %p146 = pneg %p81
      $region22: #{kabsch_loss.1} parent=15 // pred_check_branch
        %148 = sbr.rel (%p146) target = $region24
      $region23: #{kabsch_loss.1} parent=15 // pred_region
        %s149 = sadd.s32 %s16, %s17
        %p150 = scmp.lt.s32.totalorder %s15, 1
        %s151 = scalar_select %p150, %s15, 1
        %p152 = scmp.lt.s32.totalorder %s149, 0
        %s153 = scalar_select %p152, %s149, 0
        %s154 = sadd.s32 %s153, %s151
        %s155 = smul.addr %s154, 4
        %s156 = scalar_lea.vmem %s1, %s155
        %s157 = sadd.s32 %s16, %s17
      $region24: #{kabsch_loss.1} parent=15 // pred_fallthru
        _
    $region16: #{kabsch_loss.1} parent=5 // pred_fallthru
      _
    %p158 = scmp.le.s32.totalorder 1, %s8
    %p159 = scmp.lt.s32.totalorder %s8, 3
    %p160 = pnand %p158, %p159
    %p161 = pneg %p160
    // Predicated region
    $region25: #{kabsch_loss.1} parent=5 // pred_check
      _
    $region26: #{kabsch_loss.1} parent=5 // pred_check_branch
      %163 = sbr.rel (%p160) target = $region28
    $region27: #{kabsch_loss.1} parent=5 // pred_region
      %s164 = ssub.s32 %s8, 1
      %s165 = sadd.s32 %s19, %s20
      %p166 = scmp.lt.s32.totalorder %s18, 1
      %s167 = scalar_select %p166, %s18, 1
      %p168 = scmp.lt.s32.totalorder %s165, 0
      %s169 = scalar_select %p168, %s165, 0
      %s170 = sadd.s32 %s169, %s167
      %s171 = smul.addr %s170, 4
      %s172 = scalar_lea.vmem %s0, %s171
      %p173 = pneg %p57
      %p174 = pneg %p54
      %s175 = sadd.s32 %s19, %s20
      %p176 = scmp.lt.s32.totalorder %s18, 1
      %s177 = scalar_select %p176, %s18, 1
      %p178 = scmp.lt.s32.totalorder %s175, 0
      %s179 = scalar_select %p178, %s175, 0
      %s180 = sadd.s32 %s179, %s177
      %s181 = smul.addr %s180, 4
      %s182 = scalar_lea.vmem %s1, %s181
      %p183 = pneg %p87
      %p184 = pneg %p84
      %p185 = pneg %p115
      %p186 = pneg %p112
      %p187 = scmp.lt.s32.totalorder %s18, 1
      %s188 = scalar_select %p187, %s18, 1
      %p189 = scmp.lt.s32.totalorder %s19, 0
      %s190 = scalar_select %p189, %s19, 0
      %s191 = sadd.s32 %s190, %s188
      %s192 = smul.addr %s191, 4
      %s193 = scalar_lea.vmem %s2, %s192
      %s194 = sadd.s32 %s19, %s20
      %p195 = scmp.lt.s32.totalorder %s18, 1
      %s196 = scalar_select %p195, %s18, 1
      %p197 = scmp.lt.s32.totalorder %s194, 0
      %s198 = scalar_select %p197, %s194, 0
      %s199 = sadd.s32 %s198, %s196
      %s200 = smul.addr %s199, 4
      %s201 = scalar_lea.vmem %s0, %s200
      %s202 = sadd.s32 %s19, %s20
      %s203 = sadd.s32 %s19, %s20
      %p204 = scmp.lt.s32.totalorder %s18, 1
      %s205 = scalar_select %p204, %s18, 1
      %p206 = scmp.lt.s32.totalorder %s203, 0
      %s207 = scalar_select %p206, %s203, 0
      %s208 = sadd.s32 %s207, %s205
      %s209 = smul.addr %s208, 4
      %s210 = scalar_lea.vmem %s1, %s209
      %s211 = sadd.s32 %s19, %s20
      %p212 = scmp.lt.s32.totalorder %s18, 1
      %s213 = scalar_select %p212, %s18, 1
      %p214 = scmp.lt.s32.totalorder %s19, 0
      %s215 = scalar_select %p214, %s19, 0
      %s216 = sadd.s32 %s215, %s213
      %s217 = smul.addr %s216, 4
      %s218 = scalar_lea.vmem %s2, %s217
      %p219 = scmp.eq.s32.totalorder %s20, 0
      // Predicated region
      $region29: #{kabsch_loss.1} parent=27 // pred_check
        %p220 = pneg %p219
      $region30: #{kabsch_loss.1} parent=27 // pred_check_branch
        %222 = sbr.rel (%p220) target = $region32
      $region31: #{kabsch_loss.1} parent=27 // pred_region
        %223 = vst [vmem:[#allocation2] sm:$0x7] 0.0
      $region32: #{kabsch_loss.1} parent=27 // pred_fallthru
        _
      %v224 = vld [vmem:[%s201] sm:$0x7]
      %v225 = vld [vmem:[%s210] sm:$0x7]
      %v226 = vld [vmem:[#allocation2] sm:$0x7]
      %v227 = vperm.slane %v225, 0
      %v228 = vmul.f32 %v224, %v227
      %vm229 = vcmask 1042432
      %v230 = vsel %vm229, %v228, 0.0
      %231 = vadd.xlane.f32.xlu0 %v230
      %v232 = vpop.xlane.xlu0 %231
      %v233 = vadd.f32 %v226, %v232
      %vm234 = vcmask 2048
      %235 = vst.msk [vmem:[#allocation2] sm:$0x7] %vm234, %v233
      %v236 = vld [vmem:[#allocation2] sm:$0x7]
      %v237 = vperm.slane %v225, 1
      %v238 = vmul.f32 %v224, %v237
      %v239 = vsel %vm229, %v238, 0.0
      %240 = vadd.xlane.f32.xlu0 %v239
      %v241 = vpop.xlane.xlu0 %240
      %v242 = vadd.f32 %v236, %v241
      %vm243 = vcmask 10248
      %244 = vst.msk [vmem:[#allocation2] sm:$0x7] %vm243, %v242
      %v245 = vld [vmem:[#allocation2] sm:$0x7]
      %v246 = vperm.slane %v225, 2
      %v247 = vmul.f32 %v224, %v246
      %v248 = vsel %vm229, %v247, 0.0
      %249 = vadd.xlane.f32.xlu0 %v248
      %v250 = vpop.xlane.xlu0 %249
      %v251 = vadd.f32 %v245, %v250
      %vm252 = vcmask 18448
      %253 = vst.msk [vmem:[#allocation2] sm:$0x7] %vm252, %v251
      %v254 = vld [vmem:[#allocation2] sm:$0x7]
      %v255 = vsel %vm229, %v224, 0.0
      %256 = vadd.xlane.f32.xlu0 %v255
      %v257 = vpop.xlane.xlu0 %256
      %v258 = vadd.f32 %v254, %v257
      %vm259 = vcmask 26648
      %260 = vst.msk [vmem:[#allocation2] sm:$0x7] %vm259, %v258
      %v261 = vld [vmem:[#allocation2] sm:$0x7]
      %v262 = vsel %vm229, %v225, 0.0
      %263 = vadd.xlane.f32.xlu0 %v262
      %v264 = vpop.xlane.xlu0 %263
      %v265 = vadd.f32 %v261, %v264
      %vm266 = vcmask 34848
      %267 = vst.msk [vmem:[#allocation2] sm:$0x7] %vm266, %v265
      %v268 = vld [vmem:[#allocation2] sm:$0x7]
      %v269 = vmul.f32 %v224, %v224
      %v270 = vsel %vm229, %v269, 0.0
      %271 = vadd.xlane.f32.xlu0 %v270
      %v272 = vpop.xlane.xlu0 %271
      %v273 = vadd.f32 %v268, %v272
      %vm274 = vcmask 43048
      %275 = vst.msk [vmem:[#allocation2] sm:$0x7] %vm274, %v273
      %v276 = vld [vmem:[#allocation2] sm:$0x7]
      %v277 = vmul.f32 %v225, %v225
      %v278 = vsel %vm229, %v277, 0.0
      %279 = vadd.xlane.f32.xlu0 %v278
      %v280 = vpop.xlane.xlu0 %279
      %v281 = vadd.f32 %v276, %v280
      %vm282 = vcmask 51248
      %283 = vst.msk [vmem:[#allocation2] sm:$0x7] %vm282, %v281
      // Predicated region
      $region33: #{kabsch_loss.1} parent=27 // pred_check
        %p284 = pneg %p219
      $region34: #{kabsch_loss.1} parent=27 // pred_check_branch
        %286 = sbr.rel (%p284) target = $region36
      $region35: #{kabsch_loss.1} parent=27 // pred_region
        %v287 = vld [vmem:[#allocation2] sm:$0x7]
        %288 = vst [vmem:[%s218] sm:$0x7] %v287
      $region36: #{kabsch_loss.1} parent=27 // pred_fallthru
        _
      %p289 = scmp.lt.s32.totalorder %s18, 1
      %s290 = scalar_select %p289, %s18, 1
      %p291 = scmp.lt.s32.totalorder %s19, 0
      %s292 = scalar_select %p291, %s19, 0
      %s293 = sadd.s32 %s292, %s290
      %s294 = smul.addr %s293, 4
      %s295 = scalar_lea.vmem %s2, %s294
      // Predicated region
      $region37: #{kabsch_loss.1} parent=27 // pred_check
        %p296 = pneg %p112
      $region38: #{kabsch_loss.1} parent=27 // pred_check_branch
        %298 = sbr.rel (%p296) target = $region40
      $region39: #{kabsch_loss.1} parent=27 // pred_region
        _
      $region40: #{kabsch_loss.1} parent=27 // pred_fallthru
        _
    $region28: #{kabsch_loss.1} parent=5 // pred_fallthru
      _
    %p299 = scmp.le.s32.totalorder 2, %s8
    // Predicated region
    $region41: #{kabsch_loss.1} parent=5 // pred_check
      %p300 = pneg %p299
    $region42: #{kabsch_loss.1} parent=5 // pred_check_branch
      %302 = sbr.rel (%p300) target = $region44
    $region43: #{kabsch_loss.1} parent=5 // pred_region
      %s303 = ssub.s32 %s8, 2
      // Predicated region
      $region45: #{kabsch_loss.1} parent=43 // pred_check
        %p304 = pneg %p118
      $region46: #{kabsch_loss.1} parent=43 // pred_check_branch
        %306 = sbr.rel (%p304) target = $region48
      $region47: #{kabsch_loss.1} parent=43 // pred_region
        %p307 = scmp.lt.s32.totalorder %s21, 1
        %s308 = scalar_select %p307, %s21, 1
        %p309 = scmp.lt.s32.totalorder %s22, 0
        %s310 = scalar_select %p309, %s22, 0
        %s311 = sadd.s32 %s310, %s308
        %s312 = smul.addr %s311, 4
        %s313 = scalar_lea.vmem %s2, %s312
      $region48: #{kabsch_loss.1} parent=43 // pred_fallthru
        _
    $region44: #{kabsch_loss.1} parent=5 // pred_fallthru
      _
  $region6: #{kabsch_loss.1} parent=0 // loop_footer
    %s12 = sadd.s32 1, %s8
  $region7: #{kabsch_loss.1} parent=0 // loop_footer_branch
    %7 = sbr.rel target = $region3
  $region8: #{kabsch_loss.1} parent=0 // loop_exit
    _

// kernel: custom-call.56
$region0: #{custom-call.56}
  %s0 = inlined_call_operand.vmem [shape: f32[2,1,3,3], index: 0, kind: input, shape index: {}]
  %s1 = inlined_call_operand.vmem [shape: f32[2,1,3,3], index: 1, kind: output, shape index: {}]
  $region1: #{custom-call.56} parent=0
    #allocation0 [shape = 'u8[4096]{0}', space=vmem, size = 0x1000, scoped, tag = 'operand span for operand 0']
    #allocation1 [shape = 'u8[4096]{0}', space=vmem, size = 0x1000, scoped, tag = 'packed  for operand 0']
    #allocation2 [shape = 'u8[4096]{0}', space=vmem, size = 0x1000, scoped, tag = 'operand span for operand 1']
    #allocation3 [shape = 'u8[4096]{0}', space=vmem, size = 0x1000, scoped, tag = 'packed  for operand 1']
    loop: start=0, step=1, limit=4
    $region2: #{custom-call.56} parent=1 // loop_pre_header
      _
    $region3: #{custom-call.56} parent=1 // loop_header
      %s3 = sphi 0, %s7
      %p4 = scmp.ge.s32.totalorder %s3, 4
      %s10 = sphi 0, %s36
      %s11 = sphi 0, %s32
      %s12 = sphi 0, %s28
      %s13 = sphi 0, %s24
      %s14 = sphi 0, %s10
      %s15 = sphi 0, %s11
      %s16 = sphi 0, %s12
      %s17 = sphi 0, %s13
      %s18 = sphi 0, %s14
      %s19 = sphi 0, %s15
      %s20 = sphi 0, %s16
      %s21 = sphi 0, %s17
    $region4: #{custom-call.56} parent=1 // loop_header_branch
      %6 = sbr.rel (%p4) target = $region8
    $region5: #{custom-call.56} parent=1 // loop_body
      %s8 = ssub.s32 %s3, 1
      %s9 = ssub.s32 %s3, 2
      %s22 = sadd.s32 1, %s13
      %p23 = scmp.ge.s32.totalorder %s22, 1
      %s24 = scalar_select %p23, 0, %s22
      %s25 = sadd.s32 1, %s12
      %s26 = scalar_select %p23, %s25, %s12
      %p27 = scmp.ge.s32.totalorder %s26, 1
      %s28 = scalar_select %p27, 0, %s26
      %s29 = sadd.s32 1, %s11
      %s30 = scalar_select %p27, %s29, %s11
      %p31 = scmp.ge.s32.totalorder %s30, 1
      %s32 = scalar_select %p31, 0, %s30
      %s33 = sadd.s32 1, %s10
      %s34 = scalar_select %p31, %s33, %s10
      %p35 = scmp.ge.s32.totalorder %s34, 2
      %s36 = scalar_select %p35, 0, %s34
      %p37 = scmp.le.s32.totalorder 1, %s3
      %p38 = scmp.lt.s32.totalorder %s3, 3
      %p39 = pnand %p37, %p38
      %p40 = pneg %p39
      // Predicated region
      $region9: #{custom-call.56} parent=5 // pred_check
        _
      $region10: #{custom-call.56} parent=5 // pred_check_branch
        %42 = sbr.rel (%p39) target = $region12
      $region11: #{custom-call.56} parent=5 // pred_region
        %s43 = ssub.s32 %s3, 1
      $region12: #{custom-call.56} parent=5 // pred_fallthru
        _
      %p44 = scmp.lt.s32.totalorder %s3, 2
      // Predicated region
      $region13: #{custom-call.56} parent=5 // pred_check
        %p45 = pneg %p44
      $region14: #{custom-call.56} parent=5 // pred_check_branch
        %47 = sbr.rel (%p45) target = $region16
      $region15: #{custom-call.56} parent=5 // pred_region
        %s48 = sand.u32 %s3, 1
        %s49 = sand.u32 %s3, 1
        %s50 = smul.addr %s49, 4
        %s51 = scalar_lea.vmem [#allocation1], %s50
        %s52 = sadd.s32 %s13, %s12
        %s53 = sadd.s32 %s52, %s11
        %s54 = sadd.s32 %s53, %s10
        %s55 = smul.addr %s54, 4
        %s56 = scalar_lea.vmem %s0, %s55
        // Predicated region
        $region17: #{custom-call.56} parent=15 // pred_check
          _
        $region18: #{custom-call.56} parent=15 // pred_check_branch
          %58 = sbr.rel (0) target = $region20
        $region19: #{custom-call.56} parent=15 // pred_region
          // Predicated region
          $region21: #{custom-call.56} parent=19 // pred_check
            _
          $region22: #{custom-call.56} parent=19 // pred_check_branch
            %60 = sbr.rel target = $region24
          $region23: #{custom-call.56} parent=19 // pred_region
            // Predicated region
            $region36: #{custom-call.56} parent=23 // pred_check
              _
            $region37: #{custom-call.56} parent=23 // pred_check_branch
              %76 = sbr.rel (0) target = $region39
            $region38: #{custom-call.56} parent=23 // pred_region
              %s78 = ssub.s32 16, 1
              loop: start=0, step=1, limit=1
              $region40: #{custom-call.56} parent=38 // loop_pre_header
                _
              $region41: #{custom-call.56} parent=38 // loop_header
                %s80 = sphi 0, %s84
                %p81 = scmp.ge.s32.totalorder %s80, 1
                %s85 = sphi %s56, %s56
                %s86 = sphi %s51, %s51
              $region42: #{custom-call.56} parent=38 // loop_header_branch
                %83 = sbr.rel (%p81) target = $region46
              $region43: #{custom-call.56} parent=38 // loop_body
                %v87 = vld [vmem:[%s85] sm:%s78]
                %88 = vst [vmem:[%s86] sm:%s78] %v87
              $region44: #{custom-call.56} parent=38 // loop_footer
                %s84 = sadd.s32 1, %s80
              $region45: #{custom-call.56} parent=38 // loop_footer_branch
                %79 = sbr.rel target = $region41
              $region46: #{custom-call.56} parent=38 // loop_exit
                _
            $region39: #{custom-call.56} parent=23 // pred_fallthru
              _
          $region24: #{custom-call.56} parent=19 // pred_fallthru
            _
          // Predicated region
          $region25: #{custom-call.56} parent=19 // pred_check
            _
          $region26: #{custom-call.56} parent=19 // pred_check_branch
            %62 = sbr.rel (0) target = $region28
          $region27: #{custom-call.56} parent=19 // pred_region
            %s64 = ssub.s32 16, 1
            loop: start=0, step=1, limit=1
            $region29: #{custom-call.56} parent=27 // loop_pre_header
              _
            $region30: #{custom-call.56} parent=27 // loop_header
              %s66 = sphi 0, %s70
              %p67 = scmp.ge.s32.totalorder %s66, 1
              %s71 = sphi %s56, %s56
              %s72 = sphi %s51, %s51
            $region31: #{custom-call.56} parent=27 // loop_header_branch
              %69 = sbr.rel (%p67) target = $region35
            $region32: #{custom-call.56} parent=27 // loop_body
              %v73 = vld [vmem:[%s71] sm:%s64]
              %74 = vst [vmem:[%s72] sm:%s64] %v73
            $region33: #{custom-call.56} parent=27 // loop_footer
              %s70 = sadd.s32 1, %s66
            $region34: #{custom-call.56} parent=27 // loop_footer_branch
              %65 = sbr.rel target = $region30
            $region35: #{custom-call.56} parent=27 // loop_exit
              _
          $region28: #{custom-call.56} parent=19 // pred_fallthru
            _
        $region20: #{custom-call.56} parent=15 // pred_fallthru
          _
        %89 = vnop
      $region16: #{custom-call.56} parent=5 // pred_fallthru
        _
      %p90 = scmp.le.s32.totalorder 1, %s3
      %p91 = scmp.lt.s32.totalorder %s3, 3
      %p92 = pnand %p90, %p91
      %p93 = pneg %p92
      // Predicated region
      $region47: #{custom-call.56} parent=5 // pred_check
        _
      $region48: #{custom-call.56} parent=5 // pred_check_branch
        %95 = sbr.rel (%p92) target = $region50
      $region49: #{custom-call.56} parent=5 // pred_region
        #allocation4 [shape = 'f32[3,3]{1,0}', space=vmem, size = 0x1000, scoped, tag = 'rescaled input a']
        %s96 = ssub.s32 %s3, 1
        %s97 = sand.u32 %s8, 1
        %s98 = sand.u32 %s8, 1
        %s99 = smul.addr %s98, 4
        %s100 = scalar_lea.vmem [#allocation1], %s99
        %s101 = sand.u32 %s8, 1
        %s102 = sand.u32 %s8, 1
        %s103 = smul.addr %s102, 4
        %s104 = scalar_lea.vmem [#allocation1], %s103
        %s105 = sand.u32 %s8, 1
        %s106 = sand.u32 %s8, 1
        %s107 = smul.addr %s106, 4
        %s108 = scalar_lea.vmem [#allocation3], %s107
        %s110 = ssub.s32 16, 1
        %v111 = vld [vmem:[%s104] sm:%s110]
        %112 = vst [vmem:[#allocation0] sm:%s110] %v111
        %v113 = vlaneseq
        %v114 = vand.u32 %v113, 127
        %vm115 = vcmp.lt.s32.totalorder %v114, 3
        %v116 = vlaneseq
        %v117 = vshrl.u32 %v116, 7
        %vm119 = vcmp.eq.s32.totalorder %v117, %v114
        %v120 = vld [vmem:[#allocation0] sm:$0xff]
        %v121 = vsel %vm119, %v120, 0.0
        %122 = vadd.xlane.f32.xlu0 %v121
        %v123 = vpop.xlane.xlu0 %122
        %vm124 = vcmp.ge.s32.totalorder %v117, %v114
        %vm125 = vmand %vm124, %vm115
        %v126 = vsel %vm125, %v120, 0.0
        %v127 = vrcp.pop %v123
        %v128 = vmul.f32 %v123, %v127
        %v129 = vsub.f32 1.0, %v128
        %v130 = vmul.f32 %v127, %v129
        %v131 = vadd.f32 %v127, %v130
        %vm132 = vweird.f32 %v123
        %vm133 = vweird.f32 %v127
        %vm134 = vmor %vm132, %vm133
        %v135 = vsel %vm134, %v127, %v131
        %v136 = vand.u32 2147483647, %v123
        %vm137 = vcmp.eq.f32.partialorder %v136, 8.507059e+37
        %v138 = vand.u32 %v123, 2147483648
        %v139 = vor.u32 1.1754944e-38, %v138
        %v140 = vsel %vm137, %v139, %v135
        %v141 = vmul.f32 %v126, %v140
        %142 = vst [vmem:[#allocation4] sm:$0xff] %v141
        %v143 = vlaneseq
        %v144 = vand.u32 %v143, 127
        %v145 = vlaneseq
        %v146 = vshrl.u32 %v145, 7
        %vm148 = vcmp.eq.s32.totalorder %v144, %v146
        %v149 = vlaneseq
        %v150 = vand.u32 %v149, 127
        %vm151 = vcmp.eq.s32.totalorder %v150, 0
        %v152 = vsel %vm151, 1.0, -1.0
        %v153 = vsel %vm148, %v152, 0.0
        %s154 = scalar_lea.vmem [#allocation4], 1
        %v155 = vld [vmem:[%s154] ss:$0 sm:$0xff]
        %v156 = vxor.u32 %v155, 2147483648
        %v157 = vlaneseq
        %v158 = vand.u32 %v157, 127
        %vm159 = vcmp.eq.s32.totalorder %v158, 1
        %v160 = vmul.f32 %v156, %v153
        %161 = vadd.xlane.f32.xlu0 %v160
        %v162 = vpop.xlane.xlu0 %161
        %v163 = vsel %vm159, %v162, %v153
        %s164 = scalar_lea.vmem [#allocation4], 2
        %v165 = vld [vmem:[%s164] ss:$0 sm:$0xff]
        %v166 = vxor.u32 %v165, 2147483648
        %v167 = vlaneseq
        %v168 = vand.u32 %v167, 127
        %vm169 = vcmp.eq.s32.totalorder %v168, 2
        %v170 = vmul.f32 %v166, %v163
        %171 = vadd.xlane.f32.xlu0 %v170
        %v172 = vpop.xlane.xlu0 %171
        %v173 = vsel %vm169, %v172, %v163
        %v174 = vrcp.pop %v123
        %v175 = vmul.f32 %v123, %v174
        %v176 = vsub.f32 1.0, %v175
        %v177 = vmul.f32 %v174, %v176
        %v178 = vadd.f32 %v174, %v177
        %vm179 = vweird.f32 %v123
        %vm180 = vweird.f32 %v174
        %vm181 = vmor %vm179, %vm180
        %v182 = vsel %vm181, %v174, %v178
        %v183 = vand.u32 2147483647, %v123
        %vm184 = vcmp.eq.f32.partialorder %v183, 8.507059e+37
        %v185 = vand.u32 %v123, 2147483648
        %v186 = vor.u32 1.1754944e-38, %v185
        %v187 = vsel %vm184, %v186, %v182
        %v188 = vmul.f32 %v173, %v187
        %vm189 = vweird.f32 %v123
        %v190 = vsel %vm189, %v173, %v188
        %191 = vst [vmem:[#allocation2] sm:$0xff] %v190
        %s193 = ssub.s32 16, 1
        %v194 = vld [vmem:[#allocation2] sm:%s193]
        %s196 = ssub.s32 16, 1
        %197 = vst [vmem:[%s108] sm:%s196] %v194
        %s198 = sand.u32 %s8, 1
        %s199 = sand.u32 %s8, 1
        %s200 = smul.addr %s199, 4
        %s201 = scalar_lea.vmem [#allocation3], %s200
        %s202 = sadd.s32 %s17, %s16
        %s203 = sadd.s32 %s202, %s15
        %s204 = sadd.s32 %s203, %s14
        %s205 = smul.addr %s204, 4
        %s206 = scalar_lea.vmem %s1, %s205
        // Predicated region
        $region51: #{custom-call.56} parent=49 // pred_check
          _
        $region52: #{custom-call.56} parent=49 // pred_check_branch
          %208 = sbr.rel (0) target = $region54
        $region53: #{custom-call.56} parent=49 // pred_region
          // Predicated region
          $region55: #{custom-call.56} parent=53 // pred_check
            _
          $region56: #{custom-call.56} parent=53 // pred_check_branch
            %210 = sbr.rel target = $region58
          $region57: #{custom-call.56} parent=53 // pred_region
            // Predicated region
            $region70: #{custom-call.56} parent=57 // pred_check
              _
            $region71: #{custom-call.56} parent=57 // pred_check_branch
              %226 = sbr.rel (0) target = $region73
            $region72: #{custom-call.56} parent=57 // pred_region
              %s228 = ssub.s32 16, 1
              loop: start=0, step=1, limit=1
              $region74: #{custom-call.56} parent=72 // loop_pre_header
                _
              $region75: #{custom-call.56} parent=72 // loop_header
                %s230 = sphi 0, %s234
                %p231 = scmp.ge.s32.totalorder %s230, 1
                %s235 = sphi %s201, %s201
                %s236 = sphi %s206, %s206
              $region76: #{custom-call.56} parent=72 // loop_header_branch
                %233 = sbr.rel (%p231) target = $region80
              $region77: #{custom-call.56} parent=72 // loop_body
                %v237 = vld [vmem:[%s235] sm:%s228]
                %238 = vst [vmem:[%s236] sm:%s228] %v237
              $region78: #{custom-call.56} parent=72 // loop_footer
                %s234 = sadd.s32 1, %s230
              $region79: #{custom-call.56} parent=72 // loop_footer_branch
                %229 = sbr.rel target = $region75
              $region80: #{custom-call.56} parent=72 // loop_exit
                _
            $region73: #{custom-call.56} parent=57 // pred_fallthru
              _
          $region58: #{custom-call.56} parent=53 // pred_fallthru
            _
          // Predicated region
          $region59: #{custom-call.56} parent=53 // pred_check
            _
          $region60: #{custom-call.56} parent=53 // pred_check_branch
            %212 = sbr.rel (0) target = $region62
          $region61: #{custom-call.56} parent=53 // pred_region
            %s214 = ssub.s32 16, 1
            loop: start=0, step=1, limit=1
            $region63: #{custom-call.56} parent=61 // loop_pre_header
              _
            $region64: #{custom-call.56} parent=61 // loop_header
              %s216 = sphi 0, %s220
              %p217 = scmp.ge.s32.totalorder %s216, 1
              %s221 = sphi %s201, %s201
              %s222 = sphi %s206, %s206
            $region65: #{custom-call.56} parent=61 // loop_header_branch
              %219 = sbr.rel (%p217) target = $region69
            $region66: #{custom-call.56} parent=61 // loop_body
              %v223 = vld [vmem:[%s221] sm:%s214]
              %224 = vst [vmem:[%s222] sm:%s214] %v223
            $region67: #{custom-call.56} parent=61 // loop_footer
              %s220 = sadd.s32 1, %s216
            $region68: #{custom-call.56} parent=61 // loop_footer_branch
              %215 = sbr.rel target = $region64
            $region69: #{custom-call.56} parent=61 // loop_exit
              _
          $region62: #{custom-call.56} parent=53 // pred_fallthru
            _
        $region54: #{custom-call.56} parent=49 // pred_fallthru
          _
        %239 = vnop
      $region50: #{custom-call.56} parent=5 // pred_fallthru
        _
      %p240 = scmp.le.s32.totalorder 2, %s3
      // Predicated region
      $region81: #{custom-call.56} parent=5 // pred_check
        %p241 = pneg %p240
      $region82: #{custom-call.56} parent=5 // pred_check_branch
        %243 = sbr.rel (%p241) target = $region84
      $region83: #{custom-call.56} parent=5 // pred_region
        %s244 = ssub.s32 %s3, 2
        %s245 = sand.u32 %s9, 1
        %s246 = sand.u32 %s9, 1
        %s247 = smul.addr %s246, 4
        %s248 = scalar_lea.vmem [#allocation3], %s247
      $region84: #{custom-call.56} parent=5 // pred_fallthru
        _
    $region6: #{custom-call.56} parent=1 // loop_footer
      %s7 = sadd.s32 1, %s3
    $region7: #{custom-call.56} parent=1 // loop_footer_branch
      %2 = sbr.rel target = $region3
    $region8: #{custom-call.56} parent=1 // loop_exit
      _

// kernel: reverse
$region0: #{reverse}
  %s0 = inlined_call_operand.vmem [shape: f32[2,3], index: 0, kind: input, shape index: {}]
  %s1 = inlined_call_operand.vmem [shape: f32[2,3], index: 1, kind: output, shape index: {}]
  %v2 = vlaneseq
  %v3 = vsub.s32 2, %v2
  %4 = vset.pattern.permute.xlu0 %v3
  $region1: #{reverse} parent=0
    #allocation0 [shape = 'u8[4096]{0}', space=vmem, size = 0x1000, scoped, tag = 'operand span for operand 0']
    #allocation1 [shape = 'u8[1024]{0}', space=vmem, size = 0x400, scoped, tag = 'packed  for operand 0']
    #allocation2 [shape = 'u8[4096]{0}', space=vmem, size = 0x1000, scoped, tag = 'operand span for operand 1']
    #allocation3 [shape = 'u8[1024]{0}', space=vmem, size = 0x400, scoped, tag = 'packed  for operand 1']
    // Predicated region
    $region2: #{reverse} parent=1 // pred_check
      _
    $region3: #{reverse} parent=1 // pred_check_branch
      %6 = sbr.rel (0) target = $region5
    $region4: #{reverse} parent=1 // pred_region
      // Predicated region
      $region6: #{reverse} parent=4 // pred_check
        _
      $region7: #{reverse} parent=4 // pred_check_branch
        %8 = sbr.rel target = $region9
      $region8: #{reverse} parent=4 // pred_region
        // Predicated region
        $region21: #{reverse} parent=8 // pred_check
          _
        $region22: #{reverse} parent=8 // pred_check_branch
          %24 = sbr.rel (0) target = $region24
        $region23: #{reverse} parent=8 // pred_region
          %s26 = ssub.s32 4, 1
          loop: start=0, step=1, limit=1
          $region25: #{reverse} parent=23 // loop_pre_header
            _
          $region26: #{reverse} parent=23 // loop_header
            %s28 = sphi 0, %s32
            %p29 = scmp.ge.s32.totalorder %s28, 1
            %s33 = sphi %s0, %s0
            %s34 = sphi [#allocation1], [#allocation1]
          $region27: #{reverse} parent=23 // loop_header_branch
            %31 = sbr.rel (%p29) target = $region31
          $region28: #{reverse} parent=23 // loop_body
            %v35 = vld [vmem:[%s33] sm:%s26]
            %36 = vst [vmem:[%s34] sm:%s26] %v35
          $region29: #{reverse} parent=23 // loop_footer
            %s32 = sadd.s32 1, %s28
          $region30: #{reverse} parent=23 // loop_footer_branch
            %27 = sbr.rel target = $region26
          $region31: #{reverse} parent=23 // loop_exit
            _
        $region24: #{reverse} parent=8 // pred_fallthru
          _
      $region9: #{reverse} parent=4 // pred_fallthru
        _
      // Predicated region
      $region10: #{reverse} parent=4 // pred_check
        _
      $region11: #{reverse} parent=4 // pred_check_branch
        %10 = sbr.rel (0) target = $region13
      $region12: #{reverse} parent=4 // pred_region
        %s12 = ssub.s32 4, 1
        loop: start=0, step=1, limit=1
        $region14: #{reverse} parent=12 // loop_pre_header
          _
        $region15: #{reverse} parent=12 // loop_header
          %s14 = sphi 0, %s18
          %p15 = scmp.ge.s32.totalorder %s14, 1
          %s19 = sphi %s0, %s0
          %s20 = sphi [#allocation1], [#allocation1]
        $region16: #{reverse} parent=12 // loop_header_branch
          %17 = sbr.rel (%p15) target = $region20
        $region17: #{reverse} parent=12 // loop_body
          %v21 = vld [vmem:[%s19] sm:%s12]
          %22 = vst [vmem:[%s20] sm:%s12] %v21
        $region18: #{reverse} parent=12 // loop_footer
          %s18 = sadd.s32 1, %s14
        $region19: #{reverse} parent=12 // loop_footer_branch
          %13 = sbr.rel target = $region15
        $region20: #{reverse} parent=12 // loop_exit
          _
      $region13: #{reverse} parent=4 // pred_fallthru
        _
    $region5: #{reverse} parent=1 // pred_fallthru
      _
    %37 = vnop
    %s39 = ssub.s32 4, 1
    %v40 = vld [vmem:[#allocation1] sm:%s39]
    %41 = vst [vmem:[#allocation0] sm:%s39] %v40
    %v42 = vld [vmem:[#allocation0] sm:$0xff]
    %43 = vperm.xlu0 %4, %v42
    %v44 = vpop.permute.xlu0 %43
    %45 = vst [vmem:[#allocation2] sm:$0xff] %v44
    %s47 = ssub.s32 4, 1
    %v48 = vld [vmem:[#allocation2] sm:%s47]
    %s50 = ssub.s32 4, 1
    %51 = vst [vmem:[#allocation3] sm:%s50] %v48
    // Predicated region
    $region32: #{reverse} parent=1 // pred_check
      _
    $region33: #{reverse} parent=1 // pred_check_branch
      %53 = sbr.rel (0) target = $region35
    $region34: #{reverse} parent=1 // pred_region
      // Predicated region
      $region36: #{reverse} parent=34 // pred_check
        _
      $region37: #{reverse} parent=34 // pred_check_branch
        %55 = sbr.rel target = $region39
      $region38: #{reverse} parent=34 // pred_region
        // Predicated region
        $region51: #{reverse} parent=38 // pred_check
          _
        $region52: #{reverse} parent=38 // pred_check_branch
          %71 = sbr.rel (0) target = $region54
        $region53: #{reverse} parent=38 // pred_region
          %s73 = ssub.s32 4, 1
          loop: start=0, step=1, limit=1
          $region55: #{reverse} parent=53 // loop_pre_header
            _
          $region56: #{reverse} parent=53 // loop_header
            %s75 = sphi 0, %s79
            %p76 = scmp.ge.s32.totalorder %s75, 1
            %s80 = sphi [#allocation3], [#allocation3]
            %s81 = sphi %s1, %s1
          $region57: #{reverse} parent=53 // loop_header_branch
            %78 = sbr.rel (%p76) target = $region61
          $region58: #{reverse} parent=53 // loop_body
            %v82 = vld [vmem:[%s80] sm:%s73]
            %83 = vst [vmem:[%s81] sm:%s73] %v82
          $region59: #{reverse} parent=53 // loop_footer
            %s79 = sadd.s32 1, %s75
          $region60: #{reverse} parent=53 // loop_footer_branch
            %74 = sbr.rel target = $region56
          $region61: #{reverse} parent=53 // loop_exit
            _
        $region54: #{reverse} parent=38 // pred_fallthru
          _
      $region39: #{reverse} parent=34 // pred_fallthru
        _
      // Predicated region
      $region40: #{reverse} parent=34 // pred_check
        _
      $region41: #{reverse} parent=34 // pred_check_branch
        %57 = sbr.rel (0) target = $region43
      $region42: #{reverse} parent=34 // pred_region
        %s59 = ssub.s32 4, 1
        loop: start=0, step=1, limit=1
        $region44: #{reverse} parent=42 // loop_pre_header
          _
        $region45: #{reverse} parent=42 // loop_header
          %s61 = sphi 0, %s65
          %p62 = scmp.ge.s32.totalorder %s61, 1
          %s66 = sphi [#allocation3], [#allocation3]
          %s67 = sphi %s1, %s1
        $region46: #{reverse} parent=42 // loop_header_branch
          %64 = sbr.rel (%p62) target = $region50
        $region47: #{reverse} parent=42 // loop_body
          %v68 = vld [vmem:[%s66] sm:%s59]
          %69 = vst [vmem:[%s67] sm:%s59] %v68
        $region48: #{reverse} parent=42 // loop_footer
          %s65 = sadd.s32 1, %s61
        $region49: #{reverse} parent=42 // loop_footer_branch
          %60 = sbr.rel target = $region45
        $region50: #{reverse} parent=42 // loop_exit
          _
      $region43: #{reverse} parent=34 // pred_fallthru
        _
    $region35: #{reverse} parent=1 // pred_fallthru
      _
    %84 = vnop

// kernel: custom-call.22
$region0: #{custom-call.22}
  %s0 = inlined_call_operand.vmem [shape: f32[2,2,2], index: 0, kind: input, shape index: {}]
  %s1 = inlined_call_operand.vmem [shape: f32[2,2,2], index: 1, kind: input, shape index: {}]
  %s2 = inlined_call_operand.vmem [shape: f32[2,2,2], index: 2, kind: input, shape index: {}]
  %s3 = inlined_call_operand.vmem [shape: f32[2,2,2], index: 3, kind: input, shape index: {}]
  %s4 = inlined_call_operand.vmem [shape: f32[2,2], index: 4, kind: output, shape index: {0}]
  %s5 = inlined_call_operand.vmem [shape: f32[2,2], index: 5, kind: output, shape index: {1}]
  %s6 = inlined_call_operand.vmem [shape: f32[2,2,2], index: 6, kind: output, shape index: {2}]
  %s7 = inlined_call_operand.vmem [shape: f32[2,2,2], index: 7, kind: output, shape index: {3}]
  %s8 = inlined_call_operand.vmem [shape: f32[2,2,2], index: 8, kind: output, shape index: {4}]
  %s9 = inlined_call_operand.vmem [shape: f32[2,2,2], index: 9, kind: output, shape index: {5}]
  %10 = xla_tuple %s4, %s5, %s6, %s7, %s8, %s9
  $region1: #{custom-call.22} parent=0
    #allocation0 [shape = 'u8[4096]{0}', space=vmem, size = 0x1000, scoped, tag = 'operand span for operand 0']
    #allocation1 [shape = 'u8[2048]{0}', space=vmem, size = 0x800, scoped, tag = 'packed  for operand 0']
    #allocation2 [shape = 'u8[4096]{0}', space=vmem, size = 0x1000, scoped, tag = 'operand span for operand 1']
    #allocation3 [shape = 'u8[2048]{0}', space=vmem, size = 0x800, scoped, tag = 'packed  for operand 1']
    #allocation4 [shape = 'u8[4096]{0}', space=vmem, size = 0x1000, scoped, tag = 'operand span for operand 2']
    #allocation5 [shape = 'u8[2048]{0}', space=vmem, size = 0x800, scoped, tag = 'packed  for operand 2']
    #allocation6 [shape = 'u8[4096]{0}', space=vmem, size = 0x1000, scoped, tag = 'operand span for operand 3']
    #allocation7 [shape = 'u8[2048]{0}', space=vmem, size = 0x800, scoped, tag = 'packed  for operand 3']
    #allocation8 [shape = 'u8[4096]{0}', space=vmem, size = 0x1000, scoped, tag = 'operand span for operand 4']
    #allocation9 [shape = 'u8[2048]{0}', space=vmem, size = 0x800, scoped, tag = 'packed  for operand 4']
    #allocation10 [shape = 'u8[4096]{0}', space=vmem, size = 0x1000, scoped, tag = 'operand span for operand 5']
    #allocation11 [shape = 'u8[2048]{0}', space=vmem, size = 0x800, scoped, tag = 'packed  for operand 5']
    #allocation12 [shape = 'u8[4096]{0}', space=vmem, size = 0x1000, scoped, tag = 'operand span for operand 6']
    #allocation13 [shape = 'u8[2048]{0}', space=vmem, size = 0x800, scoped, tag = 'packed  for operand 6']
    #allocation14 [shape = 'u8[4096]{0}', space=vmem, size = 0x1000, scoped, tag = 'operand span for operand 7']
    #allocation15 [shape = 'u8[2048]{0}', space=vmem, size = 0x800, scoped, tag = 'packed  for operand 7']
    #allocation16 [shape = 'u8[4096]{0}', space=vmem, size = 0x1000, scoped, tag = 'operand span for operand 8']
    #allocation17 [shape = 'u8[2048]{0}', space=vmem, size = 0x800, scoped, tag = 'packed  for operand 8']
    #allocation18 [shape = 'u8[4096]{0}', space=vmem, size = 0x1000, scoped, tag = 'operand span for operand 9']
    #allocation19 [shape = 'u8[2048]{0}', space=vmem, size = 0x800, scoped, tag = 'packed  for operand 9']
    loop: start=0, step=1, limit=4
    $region2: #{custom-call.22} parent=1 // loop_pre_header
      _
    $region3: #{custom-call.22} parent=1 // loop_header
      %s12 = sphi 0, %s16
      %p13 = scmp.ge.s32.totalorder %s12, 4
      %s24 = sphi 0, %s26
      %s27 = sphi 0, %s24
      %s28 = sphi 0, %s27
      %s44 = sphi 0, %s28
      %s52 = sphi 0, %s54
      %s55 = sphi 0, %s52
      %s56 = sphi 0, %s55
      %s72 = sphi 0, %s56
    $region4: #{custom-call.22} parent=1 // loop_header_branch
      %15 = sbr.rel (%p13) target = $region8
    $region5: #{custom-call.22} parent=1 // loop_body
      %s17 = ssub.s32 %s12, 1
      %s18 = ssub.s32 %s12, 2
      %s19 = sadd.s32 %s12, 1
      %s20 = sshrl.u32 %s12, 3
      %s21 = sshrl.u32 %s19, 3
      %s22 = ssub.s32 %s20, %s21
      %p23 = scmp.eq.s32.totalorder %s22, 0
      %s25 = sadd.s32 %s24, 1
      %s26 = scalar_select %p23, %s24, %s25
      %p29 = pneg %p23
      %p30 = scmp.eq.s32.totalorder %s12, 1
      %p31 = por %p29, %p30
      %p32 = scmp.ne.s32.totalorder %s24, %s27
      %p33 = scmp.eq.s32.totalorder %s12, 0
      %p34 = por %p32, %p33
      %p35 = scmp.ne.s32.totalorder %s24, %s27
      %p36 = scmp.eq.s32.totalorder %s17, 1
      %p37 = por %p35, %p36
      %p38 = scmp.ne.s32.totalorder %s27, %s28
      %p39 = scmp.eq.s32.totalorder %s17, 0
      %p40 = por %p38, %p39
      %p41 = scmp.ne.s32.totalorder %s27, %s28
      %p42 = scmp.eq.s32.totalorder %s18, 1
      %p43 = por %p41, %p42
      %p45 = scmp.ne.s32.totalorder %s28, %s44
      %p46 = scmp.eq.s32.totalorder %s18, 0
      %p47 = por %p45, %p46
      %s48 = sshrl.u32 %s12, 3
      %s49 = sshrl.u32 %s19, 3
      %s50 = ssub.s32 %s48, %s49
      %p51 = scmp.eq.s32.totalorder %s50, 0
      %s53 = sadd.s32 %s52, 1
      %s54 = scalar_select %p51, %s52, %s53
      %p57 = pneg %p51
      %p58 = scmp.eq.s32.totalorder %s12, 1
      %p59 = por %p57, %p58
      %p60 = scmp.ne.s32.totalorder %s52, %s55
      %p61 = scmp.eq.s32.totalorder %s12, 0
      %p62 = por %p60, %p61
      %p63 = scmp.ne.s32.totalorder %s52, %s55
      %p64 = scmp.eq.s32.totalorder %s17, 1
      %p65 = por %p63, %p64
      %p66 = scmp.ne.s32.totalorder %s55, %s56
      %p67 = scmp.eq.s32.totalorder %s17, 0
      %p68 = por %p66, %p67
      %p69 = scmp.ne.s32.totalorder %s55, %s56
      %p70 = scmp.eq.s32.totalorder %s18, 1
      %p71 = por %p69, %p70
      %p73 = scmp.ne.s32.totalorder %s56, %s72
      %p74 = scmp.eq.s32.totalorder %s18, 0
      %p75 = por %p73, %p74
      %p76 = scmp.le.s32.totalorder 1, %s12
      %p77 = scmp.lt.s32.totalorder %s12, 3
      %p78 = pnand %p76, %p77
      %p79 = pneg %p78
      // Predicated region
      $region9: #{custom-call.22} parent=5 // pred_check
        _
      $region10: #{custom-call.22} parent=5 // pred_check_branch
        %81 = sbr.rel (%p78) target = $region12
      $region11: #{custom-call.22} parent=5 // pred_region
        %s82 = ssub.s32 %s12, 1
      $region12: #{custom-call.22} parent=5 // pred_fallthru
        _
      %p83 = scmp.lt.s32.totalorder %s12, 2
      // Predicated region
      $region13: #{custom-call.22} parent=5 // pred_check
        %p84 = pneg %p83
      $region14: #{custom-call.22} parent=5 // pred_check_branch
        %86 = sbr.rel (%p84) target = $region16
      $region15: #{custom-call.22} parent=5 // pred_region
        %s87 = sand.u32 %s12, 1
        %s88 = sand.u32 %s12, 1
        %s89 = smul.addr %s88, 2
        %s90 = scalar_lea.vmem [#allocation1], %s89
        %s91 = smul.addr %s12, 2
        %s92 = scalar_lea.vmem %s0, %s91
        // Predicated region
        $region17: #{custom-call.22} parent=15 // pred_check
          _
        $region18: #{custom-call.22} parent=15 // pred_check_branch
          %94 = sbr.rel (0) target = $region20
        $region19: #{custom-call.22} parent=15 // pred_region
          // Predicated region
          $region21: #{custom-call.22} parent=19 // pred_check
            _
          $region22: #{custom-call.22} parent=19 // pred_check_branch
            %96 = sbr.rel target = $region24
          $region23: #{custom-call.22} parent=19 // pred_region
            // Predicated region
            $region36: #{custom-call.22} parent=23 // pred_check
              _
            $region37: #{custom-call.22} parent=23 // pred_check_branch
              %112 = sbr.rel (0) target = $region39
            $region38: #{custom-call.22} parent=23 // pred_region
              %s114 = ssub.s32 4, 1
              loop: start=0, step=1, limit=1
              $region40: #{custom-call.22} parent=38 // loop_pre_header
                _
              $region41: #{custom-call.22} parent=38 // loop_header
                %s116 = sphi 0, %s120
                %p117 = scmp.ge.s32.totalorder %s116, 1
                %s121 = sphi %s92, %s92
                %s122 = sphi %s90, %s90
              $region42: #{custom-call.22} parent=38 // loop_header_branch
                %119 = sbr.rel (%p117) target = $region46
              $region43: #{custom-call.22} parent=38 // loop_body
                %v123 = vld [vmem:[%s121] sm:%s114]
                %124 = vst [vmem:[%s122] sm:%s114] %v123
              $region44: #{custom-call.22} parent=38 // loop_footer
                %s120 = sadd.s32 1, %s116
              $region45: #{custom-call.22} parent=38 // loop_footer_branch
                %115 = sbr.rel target = $region41
              $region46: #{custom-call.22} parent=38 // loop_exit
                _
            $region39: #{custom-call.22} parent=23 // pred_fallthru
              _
          $region24: #{custom-call.22} parent=19 // pred_fallthru
            _
          // Predicated region
          $region25: #{custom-call.22} parent=19 // pred_check
            _
          $region26: #{custom-call.22} parent=19 // pred_check_branch
            %98 = sbr.rel (0) target = $region28
          $region27: #{custom-call.22} parent=19 // pred_region
            %s100 = ssub.s32 4, 1
            loop: start=0, step=1, limit=1
            $region29: #{custom-call.22} parent=27 // loop_pre_header
              _
            $region30: #{custom-call.22} parent=27 // loop_header
              %s102 = sphi 0, %s106
              %p103 = scmp.ge.s32.totalorder %s102, 1
              %s107 = sphi %s92, %s92
              %s108 = sphi %s90, %s90
            $region31: #{custom-call.22} parent=27 // loop_header_branch
              %105 = sbr.rel (%p103) target = $region35
            $region32: #{custom-call.22} parent=27 // loop_body
              %v109 = vld [vmem:[%s107] sm:%s100]
              %110 = vst [vmem:[%s108] sm:%s100] %v109
            $region33: #{custom-call.22} parent=27 // loop_footer
              %s106 = sadd.s32 1, %s102
            $region34: #{custom-call.22} parent=27 // loop_footer_branch
              %101 = sbr.rel target = $region30
            $region35: #{custom-call.22} parent=27 // loop_exit
              _
          $region28: #{custom-call.22} parent=19 // pred_fallthru
            _
        $region20: #{custom-call.22} parent=15 // pred_fallthru
          _
        %125 = vnop
        %s126 = sand.u32 %s12, 1
        %s127 = sand.u32 %s12, 1
        %s128 = smul.addr %s127, 2
        %s129 = scalar_lea.vmem [#allocation3], %s128
        %s130 = smul.addr %s12, 2
        %s131 = scalar_lea.vmem %s1, %s130
        // Predicated region
        $region47: #{custom-call.22} parent=15 // pred_check
          _
        $region48: #{custom-call.22} parent=15 // pred_check_branch
          %133 = sbr.rel (0) target = $region50
        $region49: #{custom-call.22} parent=15 // pred_region
          // Predicated region
          $region51: #{custom-call.22} parent=49 // pred_check
            _
          $region52: #{custom-call.22} parent=49 // pred_check_branch
            %135 = sbr.rel target = $region54
          $region53: #{custom-call.22} parent=49 // pred_region
            // Predicated region
            $region66: #{custom-call.22} parent=53 // pred_check
              _
            $region67: #{custom-call.22} parent=53 // pred_check_branch
              %151 = sbr.rel (0) target = $region69
            $region68: #{custom-call.22} parent=53 // pred_region
              %s153 = ssub.s32 4, 1
              loop: start=0, step=1, limit=1
              $region70: #{custom-call.22} parent=68 // loop_pre_header
                _
              $region71: #{custom-call.22} parent=68 // loop_header
                %s155 = sphi 0, %s159
                %p156 = scmp.ge.s32.totalorder %s155, 1
                %s160 = sphi %s131, %s131
                %s161 = sphi %s129, %s129
              $region72: #{custom-call.22} parent=68 // loop_header_branch
                %158 = sbr.rel (%p156) target = $region76
              $region73: #{custom-call.22} parent=68 // loop_body
                %v162 = vld [vmem:[%s160] sm:%s153]
                %163 = vst [vmem:[%s161] sm:%s153] %v162
              $region74: #{custom-call.22} parent=68 // loop_footer
                %s159 = sadd.s32 1, %s155
              $region75: #{custom-call.22} parent=68 // loop_footer_branch
                %154 = sbr.rel target = $region71
              $region76: #{custom-call.22} parent=68 // loop_exit
                _
            $region69: #{custom-call.22} parent=53 // pred_fallthru
              _
          $region54: #{custom-call.22} parent=49 // pred_fallthru
            _
          // Predicated region
          $region55: #{custom-call.22} parent=49 // pred_check
            _
          $region56: #{custom-call.22} parent=49 // pred_check_branch
            %137 = sbr.rel (0) target = $region58
          $region57: #{custom-call.22} parent=49 // pred_region
            %s139 = ssub.s32 4, 1
            loop: start=0, step=1, limit=1
            $region59: #{custom-call.22} parent=57 // loop_pre_header
              _
            $region60: #{custom-call.22} parent=57 // loop_header
              %s141 = sphi 0, %s145
              %p142 = scmp.ge.s32.totalorder %s141, 1
              %s146 = sphi %s131, %s131
              %s147 = sphi %s129, %s129
            $region61: #{custom-call.22} parent=57 // loop_header_branch
              %144 = sbr.rel (%p142) target = $region65
            $region62: #{custom-call.22} parent=57 // loop_body
              %v148 = vld [vmem:[%s146] sm:%s139]
              %149 = vst [vmem:[%s147] sm:%s139] %v148
            $region63: #{custom-call.22} parent=57 // loop_footer
              %s145 = sadd.s32 1, %s141
            $region64: #{custom-call.22} parent=57 // loop_footer_branch
              %140 = sbr.rel target = $region60
            $region65: #{custom-call.22} parent=57 // loop_exit
              _
          $region58: #{custom-call.22} parent=49 // pred_fallthru
            _
        $region50: #{custom-call.22} parent=15 // pred_fallthru
          _
        %164 = vnop
        %s165 = sand.u32 %s12, 1
        %s166 = sand.u32 %s12, 1
        %s167 = smul.addr %s166, 2
        %s168 = scalar_lea.vmem [#allocation5], %s167
        %s169 = smul.addr %s12, 2
        %s170 = scalar_lea.vmem %s2, %s169
        // Predicated region
        $region77: #{custom-call.22} parent=15 // pred_check
          _
        $region78: #{custom-call.22} parent=15 // pred_check_branch
          %172 = sbr.rel (0) target = $region80
        $region79: #{custom-call.22} parent=15 // pred_region
          // Predicated region
          $region81: #{custom-call.22} parent=79 // pred_check
            _
          $region82: #{custom-call.22} parent=79 // pred_check_branch
            %174 = sbr.rel target = $region84
          $region83: #{custom-call.22} parent=79 // pred_region
            // Predicated region
            $region96: #{custom-call.22} parent=83 // pred_check
              _
            $region97: #{custom-call.22} parent=83 // pred_check_branch
              %190 = sbr.rel (0) target = $region99
            $region98: #{custom-call.22} parent=83 // pred_region
              %s192 = ssub.s32 4, 1
              loop: start=0, step=1, limit=1
              $region100: #{custom-call.22} parent=98 // loop_pre_header
                _
              $region101: #{custom-call.22} parent=98 // loop_header
                %s194 = sphi 0, %s198
                %p195 = scmp.ge.s32.totalorder %s194, 1
                %s199 = sphi %s170, %s170
                %s200 = sphi %s168, %s168
              $region102: #{custom-call.22} parent=98 // loop_header_branch
                %197 = sbr.rel (%p195) target = $region106
              $region103: #{custom-call.22} parent=98 // loop_body
                %v201 = vld [vmem:[%s199] sm:%s192]
                %202 = vst [vmem:[%s200] sm:%s192] %v201
              $region104: #{custom-call.22} parent=98 // loop_footer
                %s198 = sadd.s32 1, %s194
              $region105: #{custom-call.22} parent=98 // loop_footer_branch
                %193 = sbr.rel target = $region101
              $region106: #{custom-call.22} parent=98 // loop_exit
                _
            $region99: #{custom-call.22} parent=83 // pred_fallthru
              _
          $region84: #{custom-call.22} parent=79 // pred_fallthru
            _
          // Predicated region
          $region85: #{custom-call.22} parent=79 // pred_check
            _
          $region86: #{custom-call.22} parent=79 // pred_check_branch
            %176 = sbr.rel (0) target = $region88
          $region87: #{custom-call.22} parent=79 // pred_region
            %s178 = ssub.s32 4, 1
            loop: start=0, step=1, limit=1
            $region89: #{custom-call.22} parent=87 // loop_pre_header
              _
            $region90: #{custom-call.22} parent=87 // loop_header
              %s180 = sphi 0, %s184
              %p181 = scmp.ge.s32.totalorder %s180, 1
              %s185 = sphi %s170, %s170
              %s186 = sphi %s168, %s168
            $region91: #{custom-call.22} parent=87 // loop_header_branch
              %183 = sbr.rel (%p181) target = $region95
            $region92: #{custom-call.22} parent=87 // loop_body
              %v187 = vld [vmem:[%s185] sm:%s178]
              %188 = vst [vmem:[%s186] sm:%s178] %v187
            $region93: #{custom-call.22} parent=87 // loop_footer
              %s184 = sadd.s32 1, %s180
            $region94: #{custom-call.22} parent=87 // loop_footer_branch
              %179 = sbr.rel target = $region90
            $region95: #{custom-call.22} parent=87 // loop_exit
              _
          $region88: #{custom-call.22} parent=79 // pred_fallthru
            _
        $region80: #{custom-call.22} parent=15 // pred_fallthru
          _
        %203 = vnop
        %s204 = sand.u32 %s12, 1
        %s205 = sand.u32 %s12, 1
        %s206 = smul.addr %s205, 2
        %s207 = scalar_lea.vmem [#allocation7], %s206
        %s208 = smul.addr %s12, 2
        %s209 = scalar_lea.vmem %s3, %s208
        // Predicated region
        $region107: #{custom-call.22} parent=15 // pred_check
          _
        $region108: #{custom-call.22} parent=15 // pred_check_branch
          %211 = sbr.rel (0) target = $region110
        $region109: #{custom-call.22} parent=15 // pred_region
          // Predicated region
          $region111: #{custom-call.22} parent=109 // pred_check
            _
          $region112: #{custom-call.22} parent=109 // pred_check_branch
            %213 = sbr.rel target = $region114
          $region113: #{custom-call.22} parent=109 // pred_region
            // Predicated region
            $region126: #{custom-call.22} parent=113 // pred_check
              _
            $region127: #{custom-call.22} parent=113 // pred_check_branch
              %229 = sbr.rel (0) target = $region129
            $region128: #{custom-call.22} parent=113 // pred_region
              %s231 = ssub.s32 4, 1
              loop: start=0, step=1, limit=1
              $region130: #{custom-call.22} parent=128 // loop_pre_header
                _
              $region131: #{custom-call.22} parent=128 // loop_header
                %s233 = sphi 0, %s237
                %p234 = scmp.ge.s32.totalorder %s233, 1
                %s238 = sphi %s209, %s209
                %s239 = sphi %s207, %s207
              $region132: #{custom-call.22} parent=128 // loop_header_branch
                %236 = sbr.rel (%p234) target = $region136
              $region133: #{custom-call.22} parent=128 // loop_body
                %v240 = vld [vmem:[%s238] sm:%s231]
                %241 = vst [vmem:[%s239] sm:%s231] %v240
              $region134: #{custom-call.22} parent=128 // loop_footer
                %s237 = sadd.s32 1, %s233
              $region135: #{custom-call.22} parent=128 // loop_footer_branch
                %232 = sbr.rel target = $region131
              $region136: #{custom-call.22} parent=128 // loop_exit
                _
            $region129: #{custom-call.22} parent=113 // pred_fallthru
              _
          $region114: #{custom-call.22} parent=109 // pred_fallthru
            _
          // Predicated region
          $region115: #{custom-call.22} parent=109 // pred_check
            _
          $region116: #{custom-call.22} parent=109 // pred_check_branch
            %215 = sbr.rel (0) target = $region118
          $region117: #{custom-call.22} parent=109 // pred_region
            %s217 = ssub.s32 4, 1
            loop: start=0, step=1, limit=1
            $region119: #{custom-call.22} parent=117 // loop_pre_header
              _
            $region120: #{custom-call.22} parent=117 // loop_header
              %s219 = sphi 0, %s223
              %p220 = scmp.ge.s32.totalorder %s219, 1
              %s224 = sphi %s209, %s209
              %s225 = sphi %s207, %s207
            $region121: #{custom-call.22} parent=117 // loop_header_branch
              %222 = sbr.rel (%p220) target = $region125
            $region122: #{custom-call.22} parent=117 // loop_body
              %v226 = vld [vmem:[%s224] sm:%s217]
              %227 = vst [vmem:[%s225] sm:%s217] %v226
            $region123: #{custom-call.22} parent=117 // loop_footer
              %s223 = sadd.s32 1, %s219
            $region124: #{custom-call.22} parent=117 // loop_footer_branch
              %218 = sbr.rel target = $region120
            $region125: #{custom-call.22} parent=117 // loop_exit
              _
          $region118: #{custom-call.22} parent=109 // pred_fallthru
            _
        $region110: #{custom-call.22} parent=15 // pred_fallthru
          _
        %242 = vnop
      $region16: #{custom-call.22} parent=5 // pred_fallthru
        _
      %p243 = scmp.le.s32.totalorder 1, %s12
      %p244 = scmp.lt.s32.totalorder %s12, 3
      %p245 = pnand %p243, %p244
      %p246 = pneg %p245
      // Predicated region
      $region137: #{custom-call.22} parent=5 // pred_check
        _
      $region138: #{custom-call.22} parent=5 // pred_check_branch
        %248 = sbr.rel (%p245) target = $region140
      $region139: #{custom-call.22} parent=5 // pred_region
        #allocation20 [shape = 'f32[2,2]{1,0}', space=vmem, size = 0x1000, scoped, tag = 'a top-left matrix']
        #allocation21 [shape = 'f32[2,2]{1,0}', space=vmem, size = 0x1000, scoped, tag = 'a top-right matrix']
        #allocation22 [shape = 'f32[2,2]{1,0}', space=vmem, size = 0x1000, scoped, tag = 'a bottom-left matrix']
        #allocation23 [shape = 'f32[2,2]{1,0}', space=vmem, size = 0x1000, scoped, tag = 'a bottom-right matrix']
        %s249 = ssub.s32 %s12, 1
        %s250 = sand.u32 %s17, 1
        %s251 = sand.u32 %s17, 1
        %s252 = smul.addr %s251, 2
        %s253 = scalar_lea.vmem [#allocation1], %s252
        %s254 = sand.u32 %s17, 1
        %s255 = sand.u32 %s17, 1
        %s256 = smul.addr %s255, 2
        %s257 = scalar_lea.vmem [#allocation3], %s256
        %s258 = sand.u32 %s17, 1
        %s259 = sand.u32 %s17, 1
        %s260 = smul.addr %s259, 2
        %s261 = scalar_lea.vmem [#allocation5], %s260
        %s262 = sand.u32 %s17, 1
        %s263 = sand.u32 %s17, 1
        %s264 = smul.addr %s263, 2
        %s265 = scalar_lea.vmem [#allocation7], %s264
        %s266 = sand.u32 %s17, 1
        %s267 = sand.u32 %s17, 1
        %s268 = smul.addr %s267, 2
        %s269 = scalar_lea.vmem [#allocation1], %s268
        %s270 = sand.u32 %s17, 1
        %s271 = sand.u32 %s17, 1
        %s272 = smul.addr %s271, 2
        %s273 = scalar_lea.vmem [#allocation3], %s272
        %s274 = sand.u32 %s17, 1
        %s275 = sand.u32 %s17, 1
        %s276 = smul.addr %s275, 2
        %s277 = scalar_lea.vmem [#allocation5], %s276
        %s278 = sand.u32 %s17, 1
        %s279 = sand.u32 %s17, 1
        %s280 = smul.addr %s279, 2
        %s281 = scalar_lea.vmem [#allocation7], %s280
        %p282 = pneg %p40
        %p283 = pneg %p37
        %s284 = sand.u32 %s27, 1
        %s285 = sand.u32 %s27, 1
        %s286 = smul.addr %s285, 2
        %s287 = scalar_lea.vmem [#allocation9], %s286
        %p288 = pneg %p68
        %p289 = pneg %p65
        %s290 = sand.u32 %s55, 1
        %s291 = sand.u32 %s55, 1
        %s292 = smul.addr %s291, 2
        %s293 = scalar_lea.vmem [#allocation11], %s292
        %s294 = sand.u32 %s17, 1
        %s295 = sand.u32 %s17, 1
        %s296 = smul.addr %s295, 2
        %s297 = scalar_lea.vmem [#allocation13], %s296
        %s298 = sand.u32 %s17, 1
        %s299 = sand.u32 %s17, 1
        %s300 = smul.addr %s299, 2
        %s301 = scalar_lea.vmem [#allocation15], %s300
        %s302 = sand.u32 %s17, 1
        %s303 = sand.u32 %s17, 1
        %s304 = smul.addr %s303, 2
        %s305 = scalar_lea.vmem [#allocation17], %s304
        %s306 = sand.u32 %s17, 1
        %s307 = sand.u32 %s17, 1
        %s308 = smul.addr %s307, 2
        %s309 = scalar_lea.vmem [#allocation19], %s308
        %s311 = ssub.s32 4, 1
        %v312 = vld [vmem:[%s269] sm:%s311]
        %313 = vst [vmem:[#allocation0] sm:%s311] %v312
        %s315 = ssub.s32 4, 1
        %v316 = vld [vmem:[%s273] sm:%s315]
        %317 = vst [vmem:[#allocation2] sm:%s315] %v316
        %s319 = ssub.s32 4, 1
        %v320 = vld [vmem:[%s277] sm:%s319]
        %321 = vst [vmem:[#allocation4] sm:%s319] %v320
        %s323 = ssub.s32 4, 1
        %v324 = vld [vmem:[%s281] sm:%s323]
        %325 = vst [vmem:[#allocation6] sm:%s323] %v324
        %s326 = sshrl.u32 %s17, 3
        %s327 = sshrl.u32 %s17, 3
        %s328 = smov [#allocation20]
        %v329 = vld [vmem:[#allocation0] sm:$0xff]
        %330 = vst [vmem:[%s328] sm:$0xff] %v329
        %s331 = smov [#allocation21]
        %v332 = vld [vmem:[#allocation2] sm:$0xff]
        %333 = vst [vmem:[%s331] sm:$0xff] %v332
        %s334 = smov [#allocation22]
        %v335 = vld [vmem:[#allocation4] sm:$0xff]
        %336 = vst [vmem:[%s334] sm:$0xff] %v335
        %s337 = smov [#allocation23]
        %v338 = vld [vmem:[#allocation6] sm:$0xff]
        %339 = vst [vmem:[%s337] sm:$0xff] %v338
        %340 = vst [vmem:[#allocation12] sm:$0xff] 0.0
        %341 = vst [vmem:[#allocation14] sm:$0xff] 0.0
        %342 = vst [vmem:[#allocation16] sm:$0xff] 0.0
        %343 = vst [vmem:[#allocation18] sm:$0xff] 0.0
        %s344 = smov [#allocation12]
        %v345 = vlaneseq
        %v346 = vand.u32 %v345, 127
        %v347 = vmov %v346
        %v348 = vlaneseq
        %v349 = vshrl.u32 %v348, 7
        %v350 = vmov %v349
        %v351 = vld [vmem:[%s344] sm:$0x3]
        %vm354 = vcmp.eq.s32.totalorder %v350, %v347
        %v355 = vsel %vm354, 1.0, %v351
        %356 = vst [vmem:[%s344] sm:$0x3] %v355
        %s357 = smov [#allocation18]
        %v358 = vlaneseq
        %v359 = vand.u32 %v358, 127
        %v360 = vmov %v359
        %v361 = vlaneseq
        %v362 = vshrl.u32 %v361, 7
        %v363 = vmov %v362
        %v364 = vld [vmem:[%s357] sm:$0x3]
        %vm367 = vcmp.eq.s32.totalorder %v363, %v360
        %v368 = vsel %vm367, 1.0, %v364
        %369 = vst [vmem:[%s357] sm:$0x3] %v368
        // While loop
        $region141: #{custom-call.22} parent=139 // loop_pre_header
          _
        $region142: #{custom-call.22} parent=139 // loop_header
          %s371 = sphi 0, %s953
          %v372 = vlaneseq
          %v373 = vand.u32 %v372, 127
          %v374 = vmov %v373
          %v375 = vlaneseq
          %v376 = vshrl.u32 %v375, 7
          %v377 = vmov %v376
          %s378 = smov [#allocation20]
          %v379 = vlaneseq
          %v380 = vand.u32 %v379, 127
          %vm381 = vcmp.ge.s32.totalorder %v380, 0
          %vm382 = vcmp.lt.s32.totalorder %v380, 2
          %vm383 = vmand %vm381, %vm382
          %v384 = vld [vmem:[%s378] sm:$0x3]
          %v385 = vsel %vm383, %v384, 0.0
          %v386 = vmul.f32 %v385, %v385
          %vm389 = vcmp.eq.s32.totalorder %v377, %v374
          %v390 = vsel %vm389, 0.0, %v386
          %v391 = vlaneseq
          %v392 = vand.u32 %v391, 127
          %v393 = vmov %v392
          %v394 = vlaneseq
          %v395 = vshrl.u32 %v394, 7
          %v396 = vmov %v395
          %s397 = smov [#allocation21]
          %v398 = vlaneseq
          %v399 = vand.u32 %v398, 127
          %vm400 = vcmp.ge.s32.totalorder %v399, 0
          %vm401 = vcmp.lt.s32.totalorder %v399, 2
          %vm402 = vmand %vm400, %vm401
          %v403 = vld [vmem:[%s397] sm:$0x3]
          %v404 = vsel %vm402, %v403, 0.0
          %v405 = vmul.f32 %v404, %v404
          %v406 = vadd.f32 %v390, %v405
          %v407 = vadd.f32 %v386, %v405
          %v408 = vlaneseq
          %v409 = vand.u32 %v408, 127
          %v410 = vmov %v409
          %v411 = vlaneseq
          %v412 = vshrl.u32 %v411, 7
          %v413 = vmov %v412
          %s414 = smov [#allocation22]
          %v415 = vlaneseq
          %v416 = vand.u32 %v415, 127
          %vm417 = vcmp.ge.s32.totalorder %v416, 0
          %vm418 = vcmp.lt.s32.totalorder %v416, 2
          %vm419 = vmand %vm417, %vm418
          %v420 = vld [vmem:[%s414] sm:$0x3]
          %v421 = vsel %vm419, %v420, 0.0
          %v422 = vmul.f32 %v421, %v421
          %v423 = vadd.f32 %v406, %v422
          %v424 = vadd.f32 %v407, %v422
          %v425 = vlaneseq
          %v426 = vand.u32 %v425, 127
          %v427 = vmov %v426
          %v428 = vlaneseq
          %v429 = vshrl.u32 %v428, 7
          %v430 = vmov %v429
          %s431 = smov [#allocation23]
          %v432 = vlaneseq
          %v433 = vand.u32 %v432, 127
          %vm434 = vcmp.ge.s32.totalorder %v433, 0
          %vm435 = vcmp.lt.s32.totalorder %v433, 2
          %vm436 = vmand %vm434, %vm435
          %v437 = vld [vmem:[%s431] sm:$0x3]
          %v438 = vsel %vm436, %v437, 0.0
          %v439 = vmul.f32 %v438, %v438
          %vm442 = vcmp.eq.s32.totalorder %v430, %v427
          %v443 = vsel %vm442, 0.0, %v439
          %v444 = vadd.f32 %v423, %v443
          %v445 = vadd.f32 %v424, %v439
          %446 = vadd.xlane.f32.xlu0 %v445
          %v447 = vpop.xlane.xlu0 %446
          %v448 = vrot.slane %v447, 4
          %v449 = vadd.f32 %v447, %v448
          %v450 = vrot.slane %v449, 2
          %v451 = vadd.f32 %v449, %v450
          %v452 = vrot.slane %v451, 1
          %v453 = vadd.f32 %v451, %v452
          %454 = vadd.xlane.f32.xlu0 %v444
          %v455 = vpop.xlane.xlu0 %454
          %v456 = vrot.slane %v455, 4
          %v457 = vadd.f32 %v455, %v456
          %v458 = vrot.slane %v457, 2
          %v459 = vadd.f32 %v457, %v458
          %v460 = vrot.slane %v459, 1
          %v461 = vadd.f32 %v459, %v460
          %s462 = vtos %v461
          %s463 = vtos %v453
          %s464 = smul.f32 1e-10, %s463
          %p465 = scmp.le.f32.partialorder %s462, %s464
          %p466 = scmp.ge.s32.totalorder %s371, 15
          %p467 = por %p465, %p466
        $region143: #{custom-call.22} parent=139 // loop_header_branch
          %955 = sbr.rel (%p467) target = $region147
        $region144: #{custom-call.22} parent=139 // loop_body
          loop: start=0, step=1, limit=3
          $region148: #{custom-call.22} parent=144 // loop_pre_header
            _
          $region149: #{custom-call.22} parent=144 // loop_header
            %s469 = sphi 0, %s473
            %p470 = scmp.ge.s32.totalorder %s469, 3
          $region150: #{custom-call.22} parent=144 // loop_header_branch
            %472 = sbr.rel (%p470) target = $region154
          $region151: #{custom-call.22} parent=144 // loop_body
            #allocation24 [shape = 'f32[1024]{0}', space=vmem, size = 0x1000, scoped, tag = 'a_tl_diag vmem']
            #allocation25 [shape = 'f32[1024]{0}', space=vmem, size = 0x1000, scoped, tag = 'a_tr_diag vmem']
            #allocation26 [shape = 'f32[1024]{0}', space=vmem, size = 0x1000, scoped, tag = 'a_br_diag vmem']
            #allocation27 [shape = 'f32[1024]{0}', space=vmem, size = 0x1000, scoped, tag = 'rt1 vmem']
            #allocation28 [shape = 'f32[1024]{0}', space=vmem, size = 0x1000, scoped, tag = 'rt2 vmem']
            #allocation29 [shape = 'f32[1024]{0}', space=vmem, size = 0x1000, scoped, tag = 'c vmem']
            #allocation30 [shape = 'f32[1024]{0}', space=vmem, size = 0x1000, scoped, tag = 's vmem']
            #allocation31 [shape = 'f32[4096]{0}', space=vmem, size = 0x4000, scoped, tag = 'c broadcast']
            #allocation32 [shape = 'f32[4096]{0}', space=vmem, size = 0x4000, scoped, tag = 's broadcast']
            %s474 = smov [#allocation20]
            %s475 = smov [#allocation24]
            %v476 = vlaneseq
            %v477 = vand.u32 %v476, 127
            %v478 = vmov %v477
            %v479 = vlaneseq
            %v480 = vshrl.u32 %v479, 7
            %v481 = vmov %v480
            %v482 = vld [vmem:[%s474] sm:$0x3]
            %vm485 = vcmp.eq.s32.totalorder %v481, %v478
            %v486 = vsel %vm485, %v482, 0.0
            %v487 = vrot.slane %v486, 4
            %v488 = vadd.f32 %v486, %v487
            %v489 = vrot.slane %v488, 2
            %v490 = vadd.f32 %v488, %v489
            %v491 = vrot.slane %v490, 1
            %v492 = vadd.f32 %v490, %v491
            %493 = vst [vmem:[%s475] sm:$0x1] %v492
            %s494 = smov [#allocation21]
            %s495 = smov [#allocation25]
            %v496 = vlaneseq
            %v497 = vand.u32 %v496, 127
            %v498 = vmov %v497
            %v499 = vlaneseq
            %v500 = vshrl.u32 %v499, 7
            %v501 = vmov %v500
            %v502 = vld [vmem:[%s494] sm:$0x3]
            %vm505 = vcmp.eq.s32.totalorder %v501, %v498
            %v506 = vsel %vm505, %v502, 0.0
            %v507 = vrot.slane %v506, 4
            %v508 = vadd.f32 %v506, %v507
            %v509 = vrot.slane %v508, 2
            %v510 = vadd.f32 %v508, %v509
            %v511 = vrot.slane %v510, 1
            %v512 = vadd.f32 %v510, %v511
            %513 = vst [vmem:[%s495] sm:$0x1] %v512
            %s514 = smov [#allocation23]
            %s515 = smov [#allocation26]
            %v516 = vlaneseq
            %v517 = vand.u32 %v516, 127
            %v518 = vmov %v517
            %v519 = vlaneseq
            %v520 = vshrl.u32 %v519, 7
            %v521 = vmov %v520
            %v522 = vld [vmem:[%s514] sm:$0x3]
            %vm525 = vcmp.eq.s32.totalorder %v521, %v518
            %v526 = vsel %vm525, %v522, 0.0
            %v527 = vrot.slane %v526, 4
            %v528 = vadd.f32 %v526, %v527
            %v529 = vrot.slane %v528, 2
            %v530 = vadd.f32 %v528, %v529
            %v531 = vrot.slane %v530, 1
            %v532 = vadd.f32 %v530, %v531
            %533 = vst [vmem:[%s515] sm:$0x1] %v532
            %s534 = smov [#allocation29]
            %s535 = smov [#allocation30]
            %s536 = smov [#allocation24]
            %v537 = vld [vmem:[%s536] sm:$0xff]
            %s538 = smov [#allocation25]
            %v539 = vld [vmem:[%s538] sm:$0xff]
            %s540 = smov [#allocation26]
            %v541 = vld [vmem:[%s540] sm:$0xff]
            %v542 = vsub.f32 %v541, %v537
            %v543 = vmul.f32 2.0, %v539
            %v544 = vrcp.pop %v543
            %v545 = vmul.f32 %v543, %v544
            %v546 = vsub.f32 1.0, %v545
            %v547 = vmul.f32 %v544, %v546
            %v548 = vadd.f32 %v544, %v547
            %vm549 = vweird.f32 %v543
            %vm550 = vweird.f32 %v544
            %vm551 = vmor %vm549, %vm550
            %v552 = vsel %vm551, %v544, %v548
            %v553 = vand.u32 2147483647, %v543
            %vm554 = vcmp.eq.f32.partialorder %v553, 8.507059e+37
            %v555 = vand.u32 %v543, 2147483648
            %v556 = vor.u32 1.1754944e-38, %v555
            %v557 = vsel %vm554, %v556, %v552
            %v558 = vmul.f32 %v542, %v557
            %vm559 = vcmp.ge.f32.partialorder %v558, 0.0
            %v560 = vmul.f32 %v558, %v558
            %v561 = vadd.f32 1.0, %v560
            %v562 = vrsqrt.pop %v561
            %v563 = vmul.f32 %v562, %v561
            %v564 = vmul.f32 %v563, %v562
            %v565 = vmul.f32 0.5, %v564
            %v566 = vsub.f32 1.5, %v565
            %v567 = vmul.f32 %v562, %v566
            %v568 = vmul.f32 %v561, %v567
            %vm569 = vcmp.eq.f32.partialorder %v561, inf
            %v570 = vsel %vm569, %v561, %v568
            %vm571 = vcmp.eq.f32.partialorder %v561, 0.0
            %v572 = vand.u32 %v561, 2147483648
            %v573 = vsel %vm571, %v572, %v570
            %v574 = vxor.u32 %v573, 2147483648
            %v575 = vsel %vm559, %v573, %v574
            %v576 = vadd.f32 %v558, %v575
            %v577 = vrcp.pop %v576
            %v578 = vmul.f32 %v576, %v577
            %v579 = vsub.f32 1.0, %v578
            %v580 = vmul.f32 %v577, %v579
            %v581 = vadd.f32 %v577, %v580
            %vm582 = vweird.f32 %v576
            %vm583 = vweird.f32 %v577
            %vm584 = vmor %vm582, %vm583
            %v585 = vsel %vm584, %v577, %v581
            %v586 = vand.u32 2147483647, %v576
            %vm587 = vcmp.eq.f32.partialorder %v586, 8.507059e+37
            %v588 = vand.u32 %v576, 2147483648
            %v589 = vor.u32 1.1754944e-38, %v588
            %v590 = vsel %vm587, %v589, %v585
            %v591 = vand.u32 2147483647, %v537
            %v592 = vand.u32 2147483647, %v539
            %v593 = vand.u32 2147483647, %v541
            %v594 = vmin.f32 %v591, %v593
            %v595 = vmul.f32 1.1920929e-08, %v594
            %vm596 = vcmp.le.f32.partialorder %v592, %v595
            %v597 = vsel %vm596, 0.0, %v590
            %v598 = vmul.f32 %v597, %v597
            %v599 = vadd.f32 1.0, %v598
            %v600 = vrsqrt.pop %v599
            %v601 = vmul.f32 %v600, %v599
            %v602 = vmul.f32 %v601, %v600
            %v603 = vmul.f32 0.5, %v602
            %v604 = vsub.f32 1.5, %v603
            %v605 = vmul.f32 %v600, %v604
            %vm606 = vweird.f32 %v599
            %vm607 = vweird.f32 %v600
            %vm608 = vmor %vm606, %vm607
            %v609 = vsel %vm608, %v600, %v605
            %v610 = vmul.f32 %v597, %v609
            %v611 = vmul.f32 %v597, %v539
            %v612 = vsub.f32 %v537, %v611
            %v613 = vmul.f32 %v597, %v539
            %v614 = vadd.f32 %v541, %v613
            %s615 = smov [#allocation27]
            %616 = vst [vmem:[%s615] sm:$0xff] %v612
            %s617 = smov [#allocation28]
            %618 = vst [vmem:[%s617] sm:$0xff] %v614
            %s619 = smov %s534
            %620 = vst [vmem:[%s619] sm:$0xff] %v609
            %s621 = smov %s535
            %622 = vst [vmem:[%s621] sm:$0xff] %v610
            %s623 = smov [#allocation29]
            %v624 = vld [vmem:[%s623] ss:$0 sm:$0xff]
            %v625 = vlaneseq
            %v626 = vand.u32 %v625, 127
            %v627 = vmov %v626
            %v628 = vlaneseq
            %v629 = vshrl.u32 %v628, 7
            %v630 = vmov %v629
            %vm632 = vcmp.eq.s32.totalorder %v630, %v627
            %v633 = vsel %vm632, %v624, 0.0
            %634 = vadd.xlane.f32.xlu0 %v633
            %v635 = vpop.xlane.xlu0 %634
            %s636 = smov [#allocation31]
            %637 = vst [vmem:[%s636] sm:$0xff] %v635
            %s638 = smov [#allocation30]
            %v639 = vld [vmem:[%s638] ss:$0 sm:$0xff]
            %v640 = vlaneseq
            %v641 = vand.u32 %v640, 127
            %v642 = vmov %v641
            %v643 = vlaneseq
            %v644 = vshrl.u32 %v643, 7
            %v645 = vmov %v644
            %vm647 = vcmp.eq.s32.totalorder %v645, %v642
            %v648 = vsel %vm647, %v639, 0.0
            %649 = vadd.xlane.f32.xlu0 %v648
            %v650 = vpop.xlane.xlu0 %649
            %s651 = smov [#allocation32]
            %652 = vst [vmem:[%s651] sm:$0xff] %v650
            %s653 = smov [#allocation31]
            %v654 = vld [vmem:[%s653] sm:$0xff]
            %s655 = smov [#allocation32]
            %v656 = vld [vmem:[%s655] sm:$0xff]
            %s657 = smov [#allocation20]
            %s658 = smov [#allocation21]
            %s659 = smov [#allocation22]
            %s660 = smov [#allocation23]
            %v661 = vld [vmem:[%s657] sm:$0x3]
            %v662 = vld [vmem:[%s658] sm:$0x3]
            %v663 = vld [vmem:[%s659] sm:$0x3]
            %v664 = vld [vmem:[%s660] sm:$0x3]
            %v665 = vmul.f32 %v654, %v661
            %v666 = vmul.f32 %v656, %v663
            %v667 = vsub.f32 %v665, %v666
            %v668 = vmul.f32 %v654, %v662
            %v669 = vmul.f32 %v656, %v664
            %v670 = vsub.f32 %v668, %v669
            %v671 = vmul.f32 %v656, %v661
            %v672 = vmul.f32 %v654, %v663
            %v673 = vadd.f32 %v671, %v672
            %v674 = vmul.f32 %v656, %v662
            %v675 = vmul.f32 %v654, %v664
            %v676 = vadd.f32 %v674, %v675
            %677 = vst [vmem:[%s657] sm:$0x3] %v667
            %678 = vst [vmem:[%s658] sm:$0x3] %v670
            %679 = vst [vmem:[%s659] sm:$0x3] %v673
            %680 = vst [vmem:[%s660] sm:$0x3] %v676
            %s681 = smov [#allocation29]
            %v682 = vld [vmem:[%s681] ss:$0 sm:$0xff]
            %s683 = smov [#allocation30]
            %v684 = vld [vmem:[%s683] ss:$0 sm:$0xff]
            %s685 = smov [#allocation20]
            %s686 = smov [#allocation21]
            %s687 = smov [#allocation22]
            %s688 = smov [#allocation23]
            %v689 = vld [vmem:[%s685] sm:$0x3]
            %v690 = vld [vmem:[%s686] sm:$0x3]
            %v691 = vld [vmem:[%s687] sm:$0x3]
            %v692 = vld [vmem:[%s688] sm:$0x3]
            %v693 = vmul.f32 %v682, %v689
            %v694 = vmul.f32 %v684, %v690
            %v695 = vsub.f32 %v693, %v694
            %v696 = vmul.f32 %v684, %v689
            %v697 = vmul.f32 %v682, %v690
            %v698 = vadd.f32 %v696, %v697
            %v699 = vmul.f32 %v682, %v691
            %v700 = vmul.f32 %v684, %v692
            %v701 = vsub.f32 %v699, %v700
            %v702 = vmul.f32 %v684, %v691
            %v703 = vmul.f32 %v682, %v692
            %v704 = vadd.f32 %v702, %v703
            %705 = vst [vmem:[%s685] sm:$0x3] %v695
            %706 = vst [vmem:[%s686] sm:$0x3] %v698
            %707 = vst [vmem:[%s687] sm:$0x3] %v701
            %708 = vst [vmem:[%s688] sm:$0x3] %v704
            %s709 = smov [#allocation20]
            %s710 = smov [#allocation27]
            %v711 = vlaneseq
            %v712 = vand.u32 %v711, 127
            %v713 = vmov %v712
            %v714 = vlaneseq
            %v715 = vshrl.u32 %v714, 7
            %v716 = vmov %v715
            %v717 = vld [vmem:[%s710] ss:$0 sm:$0xff]
            %v718 = vld [vmem:[%s709] sm:$0x3]
            %vm721 = vcmp.eq.s32.totalorder %v716, %v713
            %v722 = vsel %vm721, %v717, %v718
            %723 = vst [vmem:[%s709] sm:$0x3] %v722
            %s724 = smov [#allocation21]
            %v725 = vlaneseq
            %v726 = vand.u32 %v725, 127
            %v727 = vmov %v726
            %v728 = vlaneseq
            %v729 = vshrl.u32 %v728, 7
            %v730 = vmov %v729
            %v731 = vld [vmem:[%s724] sm:$0x3]
            %vm734 = vcmp.eq.s32.totalorder %v730, %v727
            %v735 = vsel %vm734, 0.0, %v731
            %736 = vst [vmem:[%s724] sm:$0x3] %v735
            %s737 = smov [#allocation22]
            %v738 = vlaneseq
            %v739 = vand.u32 %v738, 127
            %v740 = vmov %v739
            %v741 = vlaneseq
            %v742 = vshrl.u32 %v741, 7
            %v743 = vmov %v742
            %v744 = vld [vmem:[%s737] sm:$0x3]
            %vm747 = vcmp.eq.s32.totalorder %v743, %v740
            %v748 = vsel %vm747, 0.0, %v744
            %749 = vst [vmem:[%s737] sm:$0x3] %v748
            %s750 = smov [#allocation23]
            %s751 = smov [#allocation28]
            %v752 = vlaneseq
            %v753 = vand.u32 %v752, 127
            %v754 = vmov %v753
            %v755 = vlaneseq
            %v756 = vshrl.u32 %v755, 7
            %v757 = vmov %v756
            %v758 = vld [vmem:[%s751] ss:$0 sm:$0xff]
            %v759 = vld [vmem:[%s750] sm:$0x3]
            %vm762 = vcmp.eq.s32.totalorder %v757, %v754
            %v763 = vsel %vm762, %v758, %v759
            %764 = vst [vmem:[%s750] sm:$0x3] %v763
            %s765 = smov [#allocation20]
            %s766 = smov [#allocation21]
            %v767 = vld [vmem:[%s766] sm:$0x3]
            %768 = vrot.lane.b32.xlu0 %v767, 1
            %v769 = vpop.permute.xlu0 %768
            %v770 = vld [vmem:[%s765] sm:$0x3]
            %v771 = vld [vmem:[%s765] sm:$0x3]
            %772 = vrot.lane.b32.xlu0 %v771, 1
            %v773 = vpop.permute.xlu0 %772
            %v774 = vlaneseq
            %v775 = vand.u32 %v774, 127
            %vm776 = vcmp.eq.s32.totalorder %v775, 0
            %v777 = vsel %vm776, %v771, %v773
            %v778 = vlaneseq
            %v779 = vand.u32 %v778, 127
            %vm780 = vcmp.eq.s32.totalorder %v779, 1
            %v781 = vsel %vm780, %v769, %v777
            %v782 = vlaneseq
            %v783 = vand.u32 %v782, 127
            %vm784 = vcmp.ge.s32.totalorder %v783, 0
            %vm785 = vcmp.lt.s32.totalorder %v783, 2
            %vm786 = vmand %vm784, %vm785
            %v787 = vsel %vm786, %v781, 0.0
            %v788 = vld [vmem:[%s766] sm:$0x3]
            %789 = vrot.lane.b32.xlu0 %v788, 127
            %v790 = vpop.permute.xlu0 %789
            %v791 = vlaneseq
            %v792 = vand.u32 %v791, 127
            %vm793 = vcmp.eq.s32.totalorder %v792, 1
            %v794 = vsel %vm793, %v770, %v790
            %795 = vst [vmem:[%s765] sm:$0x3] %v787
            %796 = vst [vmem:[%s766] sm:$0x3] %v794
            %s797 = smov [#allocation22]
            %s798 = smov [#allocation23]
            %v799 = vld [vmem:[%s798] sm:$0x3]
            %800 = vrot.lane.b32.xlu0 %v799, 1
            %v801 = vpop.permute.xlu0 %800
            %v802 = vld [vmem:[%s797] sm:$0x3]
            %v803 = vld [vmem:[%s797] sm:$0x3]
            %804 = vrot.lane.b32.xlu0 %v803, 1
            %v805 = vpop.permute.xlu0 %804
            %v806 = vlaneseq
            %v807 = vand.u32 %v806, 127
            %vm808 = vcmp.eq.s32.totalorder %v807, 0
            %v809 = vsel %vm808, %v803, %v805
            %v810 = vlaneseq
            %v811 = vand.u32 %v810, 127
            %vm812 = vcmp.eq.s32.totalorder %v811, 1
            %v813 = vsel %vm812, %v801, %v809
            %v814 = vlaneseq
            %v815 = vand.u32 %v814, 127
            %vm816 = vcmp.ge.s32.totalorder %v815, 0
            %vm817 = vcmp.lt.s32.totalorder %v815, 2
            %vm818 = vmand %vm816, %vm817
            %v819 = vsel %vm818, %v813, 0.0
            %v820 = vld [vmem:[%s798] sm:$0x3]
            %821 = vrot.lane.b32.xlu0 %v820, 127
            %v822 = vpop.permute.xlu0 %821
            %v823 = vlaneseq
            %v824 = vand.u32 %v823, 127
            %vm825 = vcmp.eq.s32.totalorder %v824, 1
            %v826 = vsel %vm825, %v802, %v822
            %827 = vst [vmem:[%s797] sm:$0x3] %v819
            %828 = vst [vmem:[%s798] sm:$0x3] %v826
            %s829 = smov [#allocation20]
            %s830 = smov [#allocation22]
            %v831 = vld [vmem:[%s829] ss:$0 sm:$0xff]
            %s833 = scalar_lea.vmem %s829, 4294967295
            %v834 = vld [vmem:[%s833] sm:$0x2]
            %v835 = vlaneseq
            %v836 = vshrl.u32 %v835, 7
            %vm837 = vcmp.eq.s32.totalorder %v836, 0
            %v838 = vsel %vm837, %v831, %v834
            %s839 = scalar_lea.vmem %s829, 1
            %v840 = vld [vmem:[%s839] ss:$0 sm:$0xff]
            %841 = vst [vmem:[%s829] sm:$0x3] %v838
            %v842 = vld [vmem:[%s830] ss:$0 sm:$0xff]
            %s843 = scalar_lea.vmem %s829, 1
            %844 = vst [vmem:[%s843] sm:$0x1] %v842
            %s845 = scalar_lea.vmem %s830, 1
            %v846 = vld [vmem:[%s845] sm:$0x1]
            %v847 = vlaneseq
            %v848 = vshrl.u32 %v847, 7
            %vm849 = vcmp.eq.s32.totalorder %v848, 1
            %v850 = vsel %vm849, %v840, %v846
            %v851 = vld [vmem:[%s830] ss:$0 sm:$0xff]
            %852 = vst [vmem:[%s830] sm:$0x3] %v850
            %s853 = smov [#allocation21]
            %s854 = smov [#allocation23]
            %v855 = vld [vmem:[%s853] ss:$0 sm:$0xff]
            %s857 = scalar_lea.vmem %s853, 4294967295
            %v858 = vld [vmem:[%s857] sm:$0x2]
            %v859 = vlaneseq
            %v860 = vshrl.u32 %v859, 7
            %vm861 = vcmp.eq.s32.totalorder %v860, 0
            %v862 = vsel %vm861, %v855, %v858
            %s863 = scalar_lea.vmem %s853, 1
            %v864 = vld [vmem:[%s863] ss:$0 sm:$0xff]
            %865 = vst [vmem:[%s853] sm:$0x3] %v862
            %v866 = vld [vmem:[%s854] ss:$0 sm:$0xff]
            %s867 = scalar_lea.vmem %s853, 1
            %868 = vst [vmem:[%s867] sm:$0x1] %v866
            %s869 = scalar_lea.vmem %s854, 1
            %v870 = vld [vmem:[%s869] sm:$0x1]
            %v871 = vlaneseq
            %v872 = vshrl.u32 %v871, 7
            %vm873 = vcmp.eq.s32.totalorder %v872, 1
            %v874 = vsel %vm873, %v864, %v870
            %v875 = vld [vmem:[%s854] ss:$0 sm:$0xff]
            %876 = vst [vmem:[%s854] sm:$0x3] %v874
            %s877 = smov [#allocation31]
            %v878 = vld [vmem:[%s877] sm:$0xff]
            %s879 = smov [#allocation32]
            %v880 = vld [vmem:[%s879] sm:$0xff]
            %s881 = smov [#allocation12]
            %s882 = smov [#allocation14]
            %s883 = smov [#allocation16]
            %s884 = smov [#allocation18]
            %v885 = vld [vmem:[%s881] sm:$0x3]
            %v886 = vld [vmem:[%s882] sm:$0x3]
            %v887 = vld [vmem:[%s883] sm:$0x3]
            %v888 = vld [vmem:[%s884] sm:$0x3]
            %v889 = vmul.f32 %v878, %v885
            %v890 = vmul.f32 %v880, %v887
            %v891 = vsub.f32 %v889, %v890
            %v892 = vmul.f32 %v878, %v886
            %v893 = vmul.f32 %v880, %v888
            %v894 = vsub.f32 %v892, %v893
            %v895 = vmul.f32 %v880, %v885
            %v896 = vmul.f32 %v878, %v887
            %v897 = vadd.f32 %v895, %v896
            %v898 = vmul.f32 %v880, %v886
            %v899 = vmul.f32 %v878, %v888
            %v900 = vadd.f32 %v898, %v899
            %901 = vst [vmem:[%s881] sm:$0x3] %v891
            %902 = vst [vmem:[%s882] sm:$0x3] %v894
            %903 = vst [vmem:[%s883] sm:$0x3] %v897
            %904 = vst [vmem:[%s884] sm:$0x3] %v900
            %s905 = smov [#allocation12]
            %s906 = smov [#allocation16]
            %v907 = vld [vmem:[%s905] ss:$0 sm:$0xff]
            %s909 = scalar_lea.vmem %s905, 4294967295
            %v910 = vld [vmem:[%s909] sm:$0x2]
            %v911 = vlaneseq
            %v912 = vshrl.u32 %v911, 7
            %vm913 = vcmp.eq.s32.totalorder %v912, 0
            %v914 = vsel %vm913, %v907, %v910
            %s915 = scalar_lea.vmem %s905, 1
            %v916 = vld [vmem:[%s915] ss:$0 sm:$0xff]
            %917 = vst [vmem:[%s905] sm:$0x3] %v914
            %v918 = vld [vmem:[%s906] ss:$0 sm:$0xff]
            %s919 = scalar_lea.vmem %s905, 1
            %920 = vst [vmem:[%s919] sm:$0x1] %v918
            %s921 = scalar_lea.vmem %s906, 1
            %v922 = vld [vmem:[%s921] sm:$0x1]
            %v923 = vlaneseq
            %v924 = vshrl.u32 %v923, 7
            %vm925 = vcmp.eq.s32.totalorder %v924, 1
            %v926 = vsel %vm925, %v916, %v922
            %v927 = vld [vmem:[%s906] ss:$0 sm:$0xff]
            %928 = vst [vmem:[%s906] sm:$0x3] %v926
            %s929 = smov [#allocation14]
            %s930 = smov [#allocation18]
            %v931 = vld [vmem:[%s929] ss:$0 sm:$0xff]
            %s933 = scalar_lea.vmem %s929, 4294967295
            %v934 = vld [vmem:[%s933] sm:$0x2]
            %v935 = vlaneseq
            %v936 = vshrl.u32 %v935, 7
            %vm937 = vcmp.eq.s32.totalorder %v936, 0
            %v938 = vsel %vm937, %v931, %v934
            %s939 = scalar_lea.vmem %s929, 1
            %v940 = vld [vmem:[%s939] ss:$0 sm:$0xff]
            %941 = vst [vmem:[%s929] sm:$0x3] %v938
            %v942 = vld [vmem:[%s930] ss:$0 sm:$0xff]
            %s943 = scalar_lea.vmem %s929, 1
            %944 = vst [vmem:[%s943] sm:$0x1] %v942
            %s945 = scalar_lea.vmem %s930, 1
            %v946 = vld [vmem:[%s945] sm:$0x1]
            %v947 = vlaneseq
            %v948 = vshrl.u32 %v947, 7
            %vm949 = vcmp.eq.s32.totalorder %v948, 1
            %v950 = vsel %vm949, %v940, %v946
            %v951 = vld [vmem:[%s930] ss:$0 sm:$0xff]
            %952 = vst [vmem:[%s930] sm:$0x3] %v950
          $region152: #{custom-call.22} parent=144 // loop_footer
            %s473 = sadd.s32 1, %s469
          $region153: #{custom-call.22} parent=144 // loop_footer_branch
            %468 = sbr.rel target = $region149
          $region154: #{custom-call.22} parent=144 // loop_exit
            _
          %s953 = sadd.s32 %s371, 1
        $region145: #{custom-call.22} parent=139 // loop_footer
          _
        $region146: #{custom-call.22} parent=139 // loop_footer_branch
          %370 = sbr.rel target = $region142
        $region147: #{custom-call.22} parent=139 // loop_exit
          _
        %s956 = sand.u32 %s17, 7
        %s957 = scalar_lea.vmem [#allocation8], %s956
        %s958 = sand.u32 %s17, 7
        %s959 = scalar_lea.vmem [#allocation10], %s958
        %s960 = smov [#allocation20]
        %s961 = smov %s957
        %v962 = vlaneseq
        %v963 = vand.u32 %v962, 127
        %v964 = vmov %v963
        %v965 = vlaneseq
        %v966 = vshrl.u32 %v965, 7
        %v967 = vmov %v966
        %v968 = vld [vmem:[%s960] sm:$0x3]
        %vm971 = vcmp.eq.s32.totalorder %v967, %v964
        %v972 = vsel %vm971, %v968, 0.0
        %v973 = vrot.slane %v972, 4
        %v974 = vadd.f32 %v972, %v973
        %v975 = vrot.slane %v974, 2
        %v976 = vadd.f32 %v974, %v975
        %v977 = vrot.slane %v976, 1
        %v978 = vadd.f32 %v976, %v977
        %979 = vst [vmem:[%s961] sm:$0x1] %v978
        %s980 = smov [#allocation23]
        %s981 = smov %s959
        %v982 = vlaneseq
        %v983 = vand.u32 %v982, 127
        %v984 = vmov %v983
        %v985 = vlaneseq
        %v986 = vshrl.u32 %v985, 7
        %v987 = vmov %v986
        %v988 = vld [vmem:[%s980] sm:$0x3]
        %vm991 = vcmp.eq.s32.totalorder %v987, %v984
        %v992 = vsel %vm991, %v988, 0.0
        %v993 = vrot.slane %v992, 4
        %v994 = vadd.f32 %v992, %v993
        %v995 = vrot.slane %v994, 2
        %v996 = vadd.f32 %v994, %v995
        %v997 = vrot.slane %v996, 1
        %v998 = vadd.f32 %v996, %v997
        %999 = vst [vmem:[%s981] sm:$0x1] %v998
        %s1001 = ssub.s32 4, 1
        %v1002 = vld [vmem:[#allocation8] sm:%s1001]
        %s1004 = ssub.s32 4, 1
        %1005 = vst [vmem:[%s287] sm:%s1004] %v1002
        %s1007 = ssub.s32 4, 1
        %v1008 = vld [vmem:[#allocation10] sm:%s1007]
        %s1010 = ssub.s32 4, 1
        %1011 = vst [vmem:[%s293] sm:%s1010] %v1008
        %s1013 = ssub.s32 4, 1
        %v1014 = vld [vmem:[#allocation12] sm:%s1013]
        %s1016 = ssub.s32 4, 1
        %1017 = vst [vmem:[%s297] sm:%s1016] %v1014
        %s1019 = ssub.s32 4, 1
        %v1020 = vld [vmem:[#allocation14] sm:%s1019]
        %s1022 = ssub.s32 4, 1
        %1023 = vst [vmem:[%s301] sm:%s1022] %v1020
        %s1025 = ssub.s32 4, 1
        %v1026 = vld [vmem:[#allocation16] sm:%s1025]
        %s1028 = ssub.s32 4, 1
        %1029 = vst [vmem:[%s305] sm:%s1028] %v1026
        %s1031 = ssub.s32 4, 1
        %v1032 = vld [vmem:[#allocation18] sm:%s1031]
        %s1034 = ssub.s32 4, 1
        %1035 = vst [vmem:[%s309] sm:%s1034] %v1032
        %s1036 = sand.u32 %s27, 1
        %s1037 = sand.u32 %s27, 1
        %s1038 = smul.addr %s1037, 2
        %s1039 = scalar_lea.vmem [#allocation9], %s1038
        %s1040 = sand.u32 %s55, 1
        %s1041 = sand.u32 %s55, 1
        %s1042 = smul.addr %s1041, 2
        %s1043 = scalar_lea.vmem [#allocation11], %s1042
        %s1044 = sand.u32 %s17, 1
        %s1045 = sand.u32 %s17, 1
        %s1046 = smul.addr %s1045, 2
        %s1047 = scalar_lea.vmem [#allocation13], %s1046
        %s1048 = sand.u32 %s17, 1
        %s1049 = sand.u32 %s17, 1
        %s1050 = smul.addr %s1049, 2
        %s1051 = scalar_lea.vmem [#allocation15], %s1050
        %s1052 = sand.u32 %s17, 1
        %s1053 = sand.u32 %s17, 1
        %s1054 = smul.addr %s1053, 2
        %s1055 = scalar_lea.vmem [#allocation17], %s1054
        %s1056 = sand.u32 %s17, 1
        %s1057 = sand.u32 %s17, 1
        %s1058 = smul.addr %s1057, 2
        %s1059 = scalar_lea.vmem [#allocation19], %s1058
        // Predicated region
        $region155: #{custom-call.22} parent=139 // pred_check
          %p1060 = pneg %p37
        $region156: #{custom-call.22} parent=139 // pred_check_branch
          %1062 = sbr.rel (%p1060) target = $region158
        $region157: #{custom-call.22} parent=139 // pred_region
          %s1063 = sshrl.u32 %s17, 3
          %s1064 = smul.addr %s1063, 2
          %s1065 = scalar_lea.vmem %s4, %s1064
          // Predicated region
          $region159: #{custom-call.22} parent=157 // pred_check
            _
          $region160: #{custom-call.22} parent=157 // pred_check_branch
            %1067 = sbr.rel (0) target = $region162
          $region161: #{custom-call.22} parent=157 // pred_region
            // Predicated region
            $region163: #{custom-call.22} parent=161 // pred_check
              _
            $region164: #{custom-call.22} parent=161 // pred_check_branch
              %1069 = sbr.rel target = $region166
            $region165: #{custom-call.22} parent=161 // pred_region
              // Predicated region
              $region178: #{custom-call.22} parent=165 // pred_check
                _
              $region179: #{custom-call.22} parent=165 // pred_check_branch
                %1085 = sbr.rel (0) target = $region181
              $region180: #{custom-call.22} parent=165 // pred_region
                %s1087 = ssub.s32 4, 1
                loop: start=0, step=1, limit=1
                $region182: #{custom-call.22} parent=180 // loop_pre_header
                  _
                $region183: #{custom-call.22} parent=180 // loop_header
                  %s1089 = sphi 0, %s1093
                  %p1090 = scmp.ge.s32.totalorder %s1089, 1
                  %s1094 = sphi %s1039, %s1039
                  %s1095 = sphi %s1065, %s1065
                $region184: #{custom-call.22} parent=180 // loop_header_branch
                  %1092 = sbr.rel (%p1090) target = $region188
                $region185: #{custom-call.22} parent=180 // loop_body
                  %v1096 = vld [vmem:[%s1094] sm:%s1087]
                  %1097 = vst [vmem:[%s1095] sm:%s1087] %v1096
                $region186: #{custom-call.22} parent=180 // loop_footer
                  %s1093 = sadd.s32 1, %s1089
                $region187: #{custom-call.22} parent=180 // loop_footer_branch
                  %1088 = sbr.rel target = $region183
                $region188: #{custom-call.22} parent=180 // loop_exit
                  _
              $region181: #{custom-call.22} parent=165 // pred_fallthru
                _
            $region166: #{custom-call.22} parent=161 // pred_fallthru
              _
            // Predicated region
            $region167: #{custom-call.22} parent=161 // pred_check
              _
            $region168: #{custom-call.22} parent=161 // pred_check_branch
              %1071 = sbr.rel (0) target = $region170
            $region169: #{custom-call.22} parent=161 // pred_region
              %s1073 = ssub.s32 4, 1
              loop: start=0, step=1, limit=1
              $region171: #{custom-call.22} parent=169 // loop_pre_header
                _
              $region172: #{custom-call.22} parent=169 // loop_header
                %s1075 = sphi 0, %s1079
                %p1076 = scmp.ge.s32.totalorder %s1075, 1
                %s1080 = sphi %s1039, %s1039
                %s1081 = sphi %s1065, %s1065
              $region173: #{custom-call.22} parent=169 // loop_header_branch
                %1078 = sbr.rel (%p1076) target = $region177
              $region174: #{custom-call.22} parent=169 // loop_body
                %v1082 = vld [vmem:[%s1080] sm:%s1073]
                %1083 = vst [vmem:[%s1081] sm:%s1073] %v1082
              $region175: #{custom-call.22} parent=169 // loop_footer
                %s1079 = sadd.s32 1, %s1075
              $region176: #{custom-call.22} parent=169 // loop_footer_branch
                %1074 = sbr.rel target = $region172
              $region177: #{custom-call.22} parent=169 // loop_exit
                _
            $region170: #{custom-call.22} parent=161 // pred_fallthru
              _
          $region162: #{custom-call.22} parent=157 // pred_fallthru
            _
          %1098 = vnop
        $region158: #{custom-call.22} parent=139 // pred_fallthru
          _
        // Predicated region
        $region189: #{custom-call.22} parent=139 // pred_check
          %p1099 = pneg %p65
        $region190: #{custom-call.22} parent=139 // pred_check_branch
          %1101 = sbr.rel (%p1099) target = $region192
        $region191: #{custom-call.22} parent=139 // pred_region
          %s1102 = sshrl.u32 %s17, 3
          %s1103 = smul.addr %s1102, 2
          %s1104 = scalar_lea.vmem %s5, %s1103
          // Predicated region
          $region193: #{custom-call.22} parent=191 // pred_check
            _
          $region194: #{custom-call.22} parent=191 // pred_check_branch
            %1106 = sbr.rel (0) target = $region196
          $region195: #{custom-call.22} parent=191 // pred_region
            // Predicated region
            $region197: #{custom-call.22} parent=195 // pred_check
              _
            $region198: #{custom-call.22} parent=195 // pred_check_branch
              %1108 = sbr.rel target = $region200
            $region199: #{custom-call.22} parent=195 // pred_region
              // Predicated region
              $region212: #{custom-call.22} parent=199 // pred_check
                _
              $region213: #{custom-call.22} parent=199 // pred_check_branch
                %1124 = sbr.rel (0) target = $region215
              $region214: #{custom-call.22} parent=199 // pred_region
                %s1126 = ssub.s32 4, 1
                loop: start=0, step=1, limit=1
                $region216: #{custom-call.22} parent=214 // loop_pre_header
                  _
                $region217: #{custom-call.22} parent=214 // loop_header
                  %s1128 = sphi 0, %s1132
                  %p1129 = scmp.ge.s32.totalorder %s1128, 1
                  %s1133 = sphi %s1043, %s1043
                  %s1134 = sphi %s1104, %s1104
                $region218: #{custom-call.22} parent=214 // loop_header_branch
                  %1131 = sbr.rel (%p1129) target = $region222
                $region219: #{custom-call.22} parent=214 // loop_body
                  %v1135 = vld [vmem:[%s1133] sm:%s1126]
                  %1136 = vst [vmem:[%s1134] sm:%s1126] %v1135
                $region220: #{custom-call.22} parent=214 // loop_footer
                  %s1132 = sadd.s32 1, %s1128
                $region221: #{custom-call.22} parent=214 // loop_footer_branch
                  %1127 = sbr.rel target = $region217
                $region222: #{custom-call.22} parent=214 // loop_exit
                  _
              $region215: #{custom-call.22} parent=199 // pred_fallthru
                _
            $region200: #{custom-call.22} parent=195 // pred_fallthru
              _
            // Predicated region
            $region201: #{custom-call.22} parent=195 // pred_check
              _
            $region202: #{custom-call.22} parent=195 // pred_check_branch
              %1110 = sbr.rel (0) target = $region204
            $region203: #{custom-call.22} parent=195 // pred_region
              %s1112 = ssub.s32 4, 1
              loop: start=0, step=1, limit=1
              $region205: #{custom-call.22} parent=203 // loop_pre_header
                _
              $region206: #{custom-call.22} parent=203 // loop_header
                %s1114 = sphi 0, %s1118
                %p1115 = scmp.ge.s32.totalorder %s1114, 1
                %s1119 = sphi %s1043, %s1043
                %s1120 = sphi %s1104, %s1104
              $region207: #{custom-call.22} parent=203 // loop_header_branch
                %1117 = sbr.rel (%p1115) target = $region211
              $region208: #{custom-call.22} parent=203 // loop_body
                %v1121 = vld [vmem:[%s1119] sm:%s1112]
                %1122 = vst [vmem:[%s1120] sm:%s1112] %v1121
              $region209: #{custom-call.22} parent=203 // loop_footer
                %s1118 = sadd.s32 1, %s1114
              $region210: #{custom-call.22} parent=203 // loop_footer_branch
                %1113 = sbr.rel target = $region206
              $region211: #{custom-call.22} parent=203 // loop_exit
                _
            $region204: #{custom-call.22} parent=195 // pred_fallthru
              _
          $region196: #{custom-call.22} parent=191 // pred_fallthru
            _
          %1137 = vnop
        $region192: #{custom-call.22} parent=139 // pred_fallthru
          _
        %s1138 = smul.addr %s17, 2
        %s1139 = scalar_lea.vmem %s6, %s1138
        // Predicated region
        $region223: #{custom-call.22} parent=139 // pred_check
          _
        $region224: #{custom-call.22} parent=139 // pred_check_branch
          %1141 = sbr.rel (0) target = $region226
        $region225: #{custom-call.22} parent=139 // pred_region
          // Predicated region
          $region227: #{custom-call.22} parent=225 // pred_check
            _
          $region228: #{custom-call.22} parent=225 // pred_check_branch
            %1143 = sbr.rel target = $region230
          $region229: #{custom-call.22} parent=225 // pred_region
            // Predicated region
            $region242: #{custom-call.22} parent=229 // pred_check
              _
            $region243: #{custom-call.22} parent=229 // pred_check_branch
              %1159 = sbr.rel (0) target = $region245
            $region244: #{custom-call.22} parent=229 // pred_region
              %s1161 = ssub.s32 4, 1
              loop: start=0, step=1, limit=1
              $region246: #{custom-call.22} parent=244 // loop_pre_header
                _
              $region247: #{custom-call.22} parent=244 // loop_header
                %s1163 = sphi 0, %s1167
                %p1164 = scmp.ge.s32.totalorder %s1163, 1
                %s1168 = sphi %s1047, %s1047
                %s1169 = sphi %s1139, %s1139
              $region248: #{custom-call.22} parent=244 // loop_header_branch
                %1166 = sbr.rel (%p1164) target = $region252
              $region249: #{custom-call.22} parent=244 // loop_body
                %v1170 = vld [vmem:[%s1168] sm:%s1161]
                %1171 = vst [vmem:[%s1169] sm:%s1161] %v1170
              $region250: #{custom-call.22} parent=244 // loop_footer
                %s1167 = sadd.s32 1, %s1163
              $region251: #{custom-call.22} parent=244 // loop_footer_branch
                %1162 = sbr.rel target = $region247
              $region252: #{custom-call.22} parent=244 // loop_exit
                _
            $region245: #{custom-call.22} parent=229 // pred_fallthru
              _
          $region230: #{custom-call.22} parent=225 // pred_fallthru
            _
          // Predicated region
          $region231: #{custom-call.22} parent=225 // pred_check
            _
          $region232: #{custom-call.22} parent=225 // pred_check_branch
            %1145 = sbr.rel (0) target = $region234
          $region233: #{custom-call.22} parent=225 // pred_region
            %s1147 = ssub.s32 4, 1
            loop: start=0, step=1, limit=1
            $region235: #{custom-call.22} parent=233 // loop_pre_header
              _
            $region236: #{custom-call.22} parent=233 // loop_header
              %s1149 = sphi 0, %s1153
              %p1150 = scmp.ge.s32.totalorder %s1149, 1
              %s1154 = sphi %s1047, %s1047
              %s1155 = sphi %s1139, %s1139
            $region237: #{custom-call.22} parent=233 // loop_header_branch
              %1152 = sbr.rel (%p1150) target = $region241
            $region238: #{custom-call.22} parent=233 // loop_body
              %v1156 = vld [vmem:[%s1154] sm:%s1147]
              %1157 = vst [vmem:[%s1155] sm:%s1147] %v1156
            $region239: #{custom-call.22} parent=233 // loop_footer
              %s1153 = sadd.s32 1, %s1149
            $region240: #{custom-call.22} parent=233 // loop_footer_branch
              %1148 = sbr.rel target = $region236
            $region241: #{custom-call.22} parent=233 // loop_exit
              _
          $region234: #{custom-call.22} parent=225 // pred_fallthru
            _
        $region226: #{custom-call.22} parent=139 // pred_fallthru
          _
        %1172 = vnop
        %s1173 = smul.addr %s17, 2
        %s1174 = scalar_lea.vmem %s7, %s1173
        // Predicated region
        $region253: #{custom-call.22} parent=139 // pred_check
          _
        $region254: #{custom-call.22} parent=139 // pred_check_branch
          %1176 = sbr.rel (0) target = $region256
        $region255: #{custom-call.22} parent=139 // pred_region
          // Predicated region
          $region257: #{custom-call.22} parent=255 // pred_check
            _
          $region258: #{custom-call.22} parent=255 // pred_check_branch
            %1178 = sbr.rel target = $region260
          $region259: #{custom-call.22} parent=255 // pred_region
            // Predicated region
            $region272: #{custom-call.22} parent=259 // pred_check
              _
            $region273: #{custom-call.22} parent=259 // pred_check_branch
              %1194 = sbr.rel (0) target = $region275
            $region274: #{custom-call.22} parent=259 // pred_region
              %s1196 = ssub.s32 4, 1
              loop: start=0, step=1, limit=1
              $region276: #{custom-call.22} parent=274 // loop_pre_header
                _
              $region277: #{custom-call.22} parent=274 // loop_header
                %s1198 = sphi 0, %s1202
                %p1199 = scmp.ge.s32.totalorder %s1198, 1
                %s1203 = sphi %s1051, %s1051
                %s1204 = sphi %s1174, %s1174
              $region278: #{custom-call.22} parent=274 // loop_header_branch
                %1201 = sbr.rel (%p1199) target = $region282
              $region279: #{custom-call.22} parent=274 // loop_body
                %v1205 = vld [vmem:[%s1203] sm:%s1196]
                %1206 = vst [vmem:[%s1204] sm:%s1196] %v1205
              $region280: #{custom-call.22} parent=274 // loop_footer
                %s1202 = sadd.s32 1, %s1198
              $region281: #{custom-call.22} parent=274 // loop_footer_branch
                %1197 = sbr.rel target = $region277
              $region282: #{custom-call.22} parent=274 // loop_exit
                _
            $region275: #{custom-call.22} parent=259 // pred_fallthru
              _
          $region260: #{custom-call.22} parent=255 // pred_fallthru
            _
          // Predicated region
          $region261: #{custom-call.22} parent=255 // pred_check
            _
          $region262: #{custom-call.22} parent=255 // pred_check_branch
            %1180 = sbr.rel (0) target = $region264
          $region263: #{custom-call.22} parent=255 // pred_region
            %s1182 = ssub.s32 4, 1
            loop: start=0, step=1, limit=1
            $region265: #{custom-call.22} parent=263 // loop_pre_header
              _
            $region266: #{custom-call.22} parent=263 // loop_header
              %s1184 = sphi 0, %s1188
              %p1185 = scmp.ge.s32.totalorder %s1184, 1
              %s1189 = sphi %s1051, %s1051
              %s1190 = sphi %s1174, %s1174
            $region267: #{custom-call.22} parent=263 // loop_header_branch
              %1187 = sbr.rel (%p1185) target = $region271
            $region268: #{custom-call.22} parent=263 // loop_body
              %v1191 = vld [vmem:[%s1189] sm:%s1182]
              %1192 = vst [vmem:[%s1190] sm:%s1182] %v1191
            $region269: #{custom-call.22} parent=263 // loop_footer
              %s1188 = sadd.s32 1, %s1184
            $region270: #{custom-call.22} parent=263 // loop_footer_branch
              %1183 = sbr.rel target = $region266
            $region271: #{custom-call.22} parent=263 // loop_exit
              _
          $region264: #{custom-call.22} parent=255 // pred_fallthru
            _
        $region256: #{custom-call.22} parent=139 // pred_fallthru
          _
        %1207 = vnop
        %s1208 = smul.addr %s17, 2
        %s1209 = scalar_lea.vmem %s8, %s1208
        // Predicated region
        $region283: #{custom-call.22} parent=139 // pred_check
          _
        $region284: #{custom-call.22} parent=139 // pred_check_branch
          %1211 = sbr.rel (0) target = $region286
        $region285: #{custom-call.22} parent=139 // pred_region
          // Predicated region
          $region287: #{custom-call.22} parent=285 // pred_check
            _
          $region288: #{custom-call.22} parent=285 // pred_check_branch
            %1213 = sbr.rel target = $region290
          $region289: #{custom-call.22} parent=285 // pred_region
            // Predicated region
            $region302: #{custom-call.22} parent=289 // pred_check
              _
            $region303: #{custom-call.22} parent=289 // pred_check_branch
              %1229 = sbr.rel (0) target = $region305
            $region304: #{custom-call.22} parent=289 // pred_region
              %s1231 = ssub.s32 4, 1
              loop: start=0, step=1, limit=1
              $region306: #{custom-call.22} parent=304 // loop_pre_header
                _
              $region307: #{custom-call.22} parent=304 // loop_header
                %s1233 = sphi 0, %s1237
                %p1234 = scmp.ge.s32.totalorder %s1233, 1
                %s1238 = sphi %s1055, %s1055
                %s1239 = sphi %s1209, %s1209
              $region308: #{custom-call.22} parent=304 // loop_header_branch
                %1236 = sbr.rel (%p1234) target = $region312
              $region309: #{custom-call.22} parent=304 // loop_body
                %v1240 = vld [vmem:[%s1238] sm:%s1231]
                %1241 = vst [vmem:[%s1239] sm:%s1231] %v1240
              $region310: #{custom-call.22} parent=304 // loop_footer
                %s1237 = sadd.s32 1, %s1233
              $region311: #{custom-call.22} parent=304 // loop_footer_branch
                %1232 = sbr.rel target = $region307
              $region312: #{custom-call.22} parent=304 // loop_exit
                _
            $region305: #{custom-call.22} parent=289 // pred_fallthru
              _
          $region290: #{custom-call.22} parent=285 // pred_fallthru
            _
          // Predicated region
          $region291: #{custom-call.22} parent=285 // pred_check
            _
          $region292: #{custom-call.22} parent=285 // pred_check_branch
            %1215 = sbr.rel (0) target = $region294
          $region293: #{custom-call.22} parent=285 // pred_region
            %s1217 = ssub.s32 4, 1
            loop: start=0, step=1, limit=1
            $region295: #{custom-call.22} parent=293 // loop_pre_header
              _
            $region296: #{custom-call.22} parent=293 // loop_header
              %s1219 = sphi 0, %s1223
              %p1220 = scmp.ge.s32.totalorder %s1219, 1
              %s1224 = sphi %s1055, %s1055
              %s1225 = sphi %s1209, %s1209
            $region297: #{custom-call.22} parent=293 // loop_header_branch
              %1222 = sbr.rel (%p1220) target = $region301
            $region298: #{custom-call.22} parent=293 // loop_body
              %v1226 = vld [vmem:[%s1224] sm:%s1217]
              %1227 = vst [vmem:[%s1225] sm:%s1217] %v1226
            $region299: #{custom-call.22} parent=293 // loop_footer
              %s1223 = sadd.s32 1, %s1219
            $region300: #{custom-call.22} parent=293 // loop_footer_branch
              %1218 = sbr.rel target = $region296
            $region301: #{custom-call.22} parent=293 // loop_exit
              _
          $region294: #{custom-call.22} parent=285 // pred_fallthru
            _
        $region286: #{custom-call.22} parent=139 // pred_fallthru
          _
        %1242 = vnop
        %s1243 = smul.addr %s17, 2
        %s1244 = scalar_lea.vmem %s9, %s1243
        // Predicated region
        $region313: #{custom-call.22} parent=139 // pred_check
          _
        $region314: #{custom-call.22} parent=139 // pred_check_branch
          %1246 = sbr.rel (0) target = $region316
        $region315: #{custom-call.22} parent=139 // pred_region
          // Predicated region
          $region317: #{custom-call.22} parent=315 // pred_check
            _
          $region318: #{custom-call.22} parent=315 // pred_check_branch
            %1248 = sbr.rel target = $region320
          $region319: #{custom-call.22} parent=315 // pred_region
            // Predicated region
            $region332: #{custom-call.22} parent=319 // pred_check
              _
            $region333: #{custom-call.22} parent=319 // pred_check_branch
              %1264 = sbr.rel (0) target = $region335
            $region334: #{custom-call.22} parent=319 // pred_region
              %s1266 = ssub.s32 4, 1
              loop: start=0, step=1, limit=1
              $region336: #{custom-call.22} parent=334 // loop_pre_header
                _
              $region337: #{custom-call.22} parent=334 // loop_header
                %s1268 = sphi 0, %s1272
                %p1269 = scmp.ge.s32.totalorder %s1268, 1
                %s1273 = sphi %s1059, %s1059
                %s1274 = sphi %s1244, %s1244
              $region338: #{custom-call.22} parent=334 // loop_header_branch
                %1271 = sbr.rel (%p1269) target = $region342
              $region339: #{custom-call.22} parent=334 // loop_body
                %v1275 = vld [vmem:[%s1273] sm:%s1266]
                %1276 = vst [vmem:[%s1274] sm:%s1266] %v1275
              $region340: #{custom-call.22} parent=334 // loop_footer
                %s1272 = sadd.s32 1, %s1268
              $region341: #{custom-call.22} parent=334 // loop_footer_branch
                %1267 = sbr.rel target = $region337
              $region342: #{custom-call.22} parent=334 // loop_exit
                _
            $region335: #{custom-call.22} parent=319 // pred_fallthru
              _
          $region320: #{custom-call.22} parent=315 // pred_fallthru
            _
          // Predicated region
          $region321: #{custom-call.22} parent=315 // pred_check
            _
          $region322: #{custom-call.22} parent=315 // pred_check_branch
            %1250 = sbr.rel (0) target = $region324
          $region323: #{custom-call.22} parent=315 // pred_region
            %s1252 = ssub.s32 4, 1
            loop: start=0, step=1, limit=1
            $region325: #{custom-call.22} parent=323 // loop_pre_header
              _
            $region326: #{custom-call.22} parent=323 // loop_header
              %s1254 = sphi 0, %s1258
              %p1255 = scmp.ge.s32.totalorder %s1254, 1
              %s1259 = sphi %s1059, %s1059
              %s1260 = sphi %s1244, %s1244
            $region327: #{custom-call.22} parent=323 // loop_header_branch
              %1257 = sbr.rel (%p1255) target = $region331
            $region328: #{custom-call.22} parent=323 // loop_body
              %v1261 = vld [vmem:[%s1259] sm:%s1252]
              %1262 = vst [vmem:[%s1260] sm:%s1252] %v1261
            $region329: #{custom-call.22} parent=323 // loop_footer
              %s1258 = sadd.s32 1, %s1254
            $region330: #{custom-call.22} parent=323 // loop_footer_branch
              %1253 = sbr.rel target = $region326
            $region331: #{custom-call.22} parent=323 // loop_exit
              _
          $region324: #{custom-call.22} parent=315 // pred_fallthru
            _
        $region316: #{custom-call.22} parent=139 // pred_fallthru
          _
        %1277 = vnop
      $region140: #{custom-call.22} parent=5 // pred_fallthru
        _
      %p1278 = scmp.le.s32.totalorder 2, %s12
      // Predicated region
      $region343: #{custom-call.22} parent=5 // pred_check
        %p1279 = pneg %p1278
      $region344: #{custom-call.22} parent=5 // pred_check_branch
        %1281 = sbr.rel (%p1279) target = $region346
      $region345: #{custom-call.22} parent=5 // pred_region
        %s1282 = ssub.s32 %s12, 2
        // Predicated region
        $region347: #{custom-call.22} parent=345 // pred_check
          %p1283 = pneg %p43
        $region348: #{custom-call.22} parent=345 // pred_check_branch
          %1285 = sbr.rel (%p1283) target = $region350
        $region349: #{custom-call.22} parent=345 // pred_region
          %s1286 = sand.u32 %s28, 1
          %s1287 = sand.u32 %s28, 1
          %s1288 = smul.addr %s1287, 2
          %s1289 = scalar_lea.vmem [#allocation9], %s1288
        $region350: #{custom-call.22} parent=345 // pred_fallthru
          _
        // Predicated region
        $region351: #{custom-call.22} parent=345 // pred_check
          %p1290 = pneg %p71
        $region352: #{custom-call.22} parent=345 // pred_check_branch
          %1292 = sbr.rel (%p1290) target = $region354
        $region353: #{custom-call.22} parent=345 // pred_region
          %s1293 = sand.u32 %s56, 1
          %s1294 = sand.u32 %s56, 1
          %s1295 = smul.addr %s1294, 2
          %s1296 = scalar_lea.vmem [#allocation11], %s1295
        $region354: #{custom-call.22} parent=345 // pred_fallthru
          _
        %s1297 = sand.u32 %s18, 1
        %s1298 = sand.u32 %s18, 1
        %s1299 = smul.addr %s1298, 2
        %s1300 = scalar_lea.vmem [#allocation13], %s1299
        %s1301 = sand.u32 %s18, 1
        %s1302 = sand.u32 %s18, 1
        %s1303 = smul.addr %s1302, 2
        %s1304 = scalar_lea.vmem [#allocation15], %s1303
        %s1305 = sand.u32 %s18, 1
        %s1306 = sand.u32 %s18, 1
        %s1307 = smul.addr %s1306, 2
        %s1308 = scalar_lea.vmem [#allocation17], %s1307
        %s1309 = sand.u32 %s18, 1
        %s1310 = sand.u32 %s18, 1
        %s1311 = smul.addr %s1310, 2
        %s1312 = scalar_lea.vmem [#allocation19], %s1311
      $region346: #{custom-call.22} parent=5 // pred_fallthru
        _
    $region6: #{custom-call.22} parent=1 // loop_footer
      %s16 = sadd.s32 1, %s12
    $region7: #{custom-call.22} parent=1 // loop_footer_branch
      %11 = sbr.rel target = $region3
    $region8: #{custom-call.22} parent=1 // loop_exit
      _

// kernel: custom-call.16
$region0: #{custom-call.16}
  %s0 = inlined_call_operand.vmem [shape: f32[2,3,3], index: 0, kind: input, shape index: {}]
  %s1 = inlined_call_operand.vmem [shape: f32[2,3,3], index: 1, kind: output, shape index: {0}]
  %s2 = inlined_call_operand.vmem [shape: f32[2,3], index: 2, kind: output, shape index: {1}]
  %3 = xla_tuple %s1, %s2
  $region1: #{custom-call.16} parent=0
    #allocation0 [shape = 'u8[4096]{0}', space=vmem, size = 0x1000, scoped, tag = 'operand span for operand 0']
    #allocation1 [shape = 'u8[4096]{0}', space=vmem, size = 0x1000, scoped, tag = 'packed  for operand 0']
    #allocation2 [shape = 'u8[4096]{0}', space=vmem, size = 0x1000, scoped, tag = 'operand span for operand 1']
    #allocation3 [shape = 'u8[4096]{0}', space=vmem, size = 0x1000, scoped, tag = 'packed  for operand 1']
    #allocation4 [shape = 'u8[4096]{0}', space=vmem, size = 0x1000, scoped, tag = 'operand span for operand 2']
    #allocation5 [shape = 'u8[2048]{0}', space=vmem, size = 0x800, scoped, tag = 'packed  for operand 2']
    loop: start=0, step=1, limit=4
    $region2: #{custom-call.16} parent=1 // loop_pre_header
      _
    $region3: #{custom-call.16} parent=1 // loop_header
      %s5 = sphi 0, %s9
      %p6 = scmp.ge.s32.totalorder %s5, 4
      %s12 = sphi 0, %s31
      %s13 = sphi 0, %s27
      %s14 = sphi 0, %s23
      %s15 = sphi 0, %s12
      %s16 = sphi 0, %s13
      %s17 = sphi 0, %s14
      %s18 = sphi 0, %s15
      %s19 = sphi 0, %s16
      %s20 = sphi 0, %s17
      %s46 = sphi 0, %s48
      %s49 = sphi 0, %s46
      %s50 = sphi 0, %s49
      %s66 = sphi 0, %s50
    $region4: #{custom-call.16} parent=1 // loop_header_branch
      %8 = sbr.rel (%p6) target = $region8
    $region5: #{custom-call.16} parent=1 // loop_body
      %s10 = ssub.s32 %s5, 1
      %s11 = ssub.s32 %s5, 2
      %s21 = sadd.s32 1, %s14
      %p22 = scmp.ge.s32.totalorder %s21, 1
      %s23 = scalar_select %p22, 0, %s21
      %s24 = sadd.s32 1, %s13
      %s25 = scalar_select %p22, %s24, %s13
      %p26 = scmp.ge.s32.totalorder %s25, 1
      %s27 = scalar_select %p26, 0, %s25
      %s28 = sadd.s32 1, %s12
      %s29 = scalar_select %p26, %s28, %s12
      %p30 = scmp.ge.s32.totalorder %s29, 2
      %s31 = scalar_select %p30, 0, %s29
      %p32 = scmp.lt.s32.totalorder %s12, 0
      %s33 = ssub.s32 0, %s12
      %s34 = scalar_select %p32, %s33, %s12
      %s35 = sshrl.u32 %s34, 3
      %s36 = ssub.s32 0, %s35
      %s37 = scalar_select %p32, %s36, %s35
      %p38 = scmp.lt.s32.totalorder %s31, 0
      %s39 = ssub.s32 0, %s31
      %s40 = scalar_select %p38, %s39, %s31
      %s41 = sshrl.u32 %s40, 3
      %s42 = ssub.s32 0, %s41
      %s43 = scalar_select %p38, %s42, %s41
      %s44 = ssub.s32 %s37, %s43
      %p45 = scmp.eq.s32.totalorder %s44, 0
      %s47 = sadd.s32 %s46, 1
      %s48 = scalar_select %p45, %s46, %s47
      %p51 = pneg %p45
      %p52 = scmp.eq.s32.totalorder %s5, 1
      %p53 = por %p51, %p52
      %p54 = scmp.ne.s32.totalorder %s46, %s49
      %p55 = scmp.eq.s32.totalorder %s5, 0
      %p56 = por %p54, %p55
      %p57 = scmp.ne.s32.totalorder %s46, %s49
      %p58 = scmp.eq.s32.totalorder %s10, 1
      %p59 = por %p57, %p58
      %p60 = scmp.ne.s32.totalorder %s49, %s50
      %p61 = scmp.eq.s32.totalorder %s10, 0
      %p62 = por %p60, %p61
      %p63 = scmp.ne.s32.totalorder %s49, %s50
      %p64 = scmp.eq.s32.totalorder %s11, 1
      %p65 = por %p63, %p64
      %p67 = scmp.ne.s32.totalorder %s50, %s66
      %p68 = scmp.eq.s32.totalorder %s11, 0
      %p69 = por %p67, %p68
      %p70 = scmp.le.s32.totalorder 1, %s5
      %p71 = scmp.lt.s32.totalorder %s5, 3
      %p72 = pnand %p70, %p71
      %p73 = pneg %p72
      // Predicated region
      $region9: #{custom-call.16} parent=5 // pred_check
        _
      $region10: #{custom-call.16} parent=5 // pred_check_branch
        %75 = sbr.rel (%p72) target = $region12
      $region11: #{custom-call.16} parent=5 // pred_region
        %s76 = ssub.s32 %s5, 1
      $region12: #{custom-call.16} parent=5 // pred_fallthru
        _
      %p77 = scmp.lt.s32.totalorder %s5, 2
      // Predicated region
      $region13: #{custom-call.16} parent=5 // pred_check
        %p78 = pneg %p77
      $region14: #{custom-call.16} parent=5 // pred_check_branch
        %80 = sbr.rel (%p78) target = $region16
      $region15: #{custom-call.16} parent=5 // pred_region
        %s81 = sand.u32 %s5, 1
        %s82 = sand.u32 %s5, 1
        %s83 = smul.addr %s82, 4
        %s84 = scalar_lea.vmem [#allocation1], %s83
        %s85 = sadd.s32 %s14, %s13
        %s86 = sadd.s32 %s85, %s12
        %s87 = smul.addr %s86, 4
        %s88 = scalar_lea.vmem %s0, %s87
        // Predicated region
        $region17: #{custom-call.16} parent=15 // pred_check
          _
        $region18: #{custom-call.16} parent=15 // pred_check_branch
          %90 = sbr.rel (0) target = $region20
        $region19: #{custom-call.16} parent=15 // pred_region
          // Predicated region
          $region21: #{custom-call.16} parent=19 // pred_check
            _
          $region22: #{custom-call.16} parent=19 // pred_check_branch
            %92 = sbr.rel target = $region24
          $region23: #{custom-call.16} parent=19 // pred_region
            // Predicated region
            $region36: #{custom-call.16} parent=23 // pred_check
              _
            $region37: #{custom-call.16} parent=23 // pred_check_branch
              %108 = sbr.rel (0) target = $region39
            $region38: #{custom-call.16} parent=23 // pred_region
              %s110 = ssub.s32 16, 1
              loop: start=0, step=1, limit=1
              $region40: #{custom-call.16} parent=38 // loop_pre_header
                _
              $region41: #{custom-call.16} parent=38 // loop_header
                %s112 = sphi 0, %s116
                %p113 = scmp.ge.s32.totalorder %s112, 1
                %s117 = sphi %s88, %s88
                %s118 = sphi %s84, %s84
              $region42: #{custom-call.16} parent=38 // loop_header_branch
                %115 = sbr.rel (%p113) target = $region46
              $region43: #{custom-call.16} parent=38 // loop_body
                %v119 = vld [vmem:[%s117] sm:%s110]
                %120 = vst [vmem:[%s118] sm:%s110] %v119
              $region44: #{custom-call.16} parent=38 // loop_footer
                %s116 = sadd.s32 1, %s112
              $region45: #{custom-call.16} parent=38 // loop_footer_branch
                %111 = sbr.rel target = $region41
              $region46: #{custom-call.16} parent=38 // loop_exit
                _
            $region39: #{custom-call.16} parent=23 // pred_fallthru
              _
          $region24: #{custom-call.16} parent=19 // pred_fallthru
            _
          // Predicated region
          $region25: #{custom-call.16} parent=19 // pred_check
            _
          $region26: #{custom-call.16} parent=19 // pred_check_branch
            %94 = sbr.rel (0) target = $region28
          $region27: #{custom-call.16} parent=19 // pred_region
            %s96 = ssub.s32 16, 1
            loop: start=0, step=1, limit=1
            $region29: #{custom-call.16} parent=27 // loop_pre_header
              _
            $region30: #{custom-call.16} parent=27 // loop_header
              %s98 = sphi 0, %s102
              %p99 = scmp.ge.s32.totalorder %s98, 1
              %s103 = sphi %s88, %s88
              %s104 = sphi %s84, %s84
            $region31: #{custom-call.16} parent=27 // loop_header_branch
              %101 = sbr.rel (%p99) target = $region35
            $region32: #{custom-call.16} parent=27 // loop_body
              %v105 = vld [vmem:[%s103] sm:%s96]
              %106 = vst [vmem:[%s104] sm:%s96] %v105
            $region33: #{custom-call.16} parent=27 // loop_footer
              %s102 = sadd.s32 1, %s98
            $region34: #{custom-call.16} parent=27 // loop_footer_branch
              %97 = sbr.rel target = $region30
            $region35: #{custom-call.16} parent=27 // loop_exit
              _
          $region28: #{custom-call.16} parent=19 // pred_fallthru
            _
        $region20: #{custom-call.16} parent=15 // pred_fallthru
          _
        %121 = vnop
      $region16: #{custom-call.16} parent=5 // pred_fallthru
        _
      %p122 = scmp.le.s32.totalorder 1, %s5
      %p123 = scmp.lt.s32.totalorder %s5, 3
      %p124 = pnand %p122, %p123
      %p125 = pneg %p124
      // Predicated region
      $region47: #{custom-call.16} parent=5 // pred_check
        _
      $region48: #{custom-call.16} parent=5 // pred_check_branch
        %127 = sbr.rel (%p124) target = $region50
      $region49: #{custom-call.16} parent=5 // pred_region
        #allocation6 [shape = 'f32[3,128]{1,0}', space=vmem, size = 0x1000, scoped, tag = 'scratch for Householder reflectors']
        %s128 = ssub.s32 %s5, 1
        %s129 = sand.u32 %s10, 1
        %s130 = sand.u32 %s10, 1
        %s131 = smul.addr %s130, 4
        %s132 = scalar_lea.vmem [#allocation1], %s131
        %s133 = sand.u32 %s10, 1
        %s134 = sand.u32 %s10, 1
        %s135 = smul.addr %s134, 4
        %s136 = scalar_lea.vmem [#allocation1], %s135
        %s137 = sand.u32 %s10, 1
        %s138 = sand.u32 %s10, 1
        %s139 = smul.addr %s138, 4
        %s140 = scalar_lea.vmem [#allocation3], %s139
        %p141 = pneg %p62
        %p142 = pneg %p59
        %s143 = sand.u32 %s49, 1
        %s144 = sand.u32 %s49, 1
        %s145 = smul.addr %s144, 2
        %s146 = scalar_lea.vmem [#allocation5], %s145
        %s148 = ssub.s32 16, 1
        %v149 = vld [vmem:[%s136] sm:%s148]
        %150 = vst [vmem:[#allocation0] sm:%s148] %v149
        %p151 = scmp.lt.s32.totalorder %s15, 0
        %s152 = ssub.s32 0, %s15
        %s153 = scalar_select %p151, %s152, %s15
        %s154 = sshrl.u32 %s153, 3
        %s155 = ssub.s32 0, %s154
        %s156 = scalar_select %p151, %s155, %s154
        %s157 = sand.u32 %s15, 7
        %s158 = scalar_lea.vmem [#allocation4], %s157
        %v159 = vld [vmem:[#allocation0] sm:$0xff]
        %160 = vst [vmem:[#allocation2] sm:$0xff] %v159
        %161 = vst [vmem:[%s158] sm:$0x1] 0.0
        loop: start=0, step=1, limit=3
        $region51: #{custom-call.16} parent=49 // loop_pre_header
          _
        $region52: #{custom-call.16} parent=49 // loop_header
          %s163 = sphi 0, %s167
          %p164 = scmp.ge.s32.totalorder %s163, 3
        $region53: #{custom-call.16} parent=49 // loop_header_branch
          %166 = sbr.rel (%p164) target = $region57
        $region54: #{custom-call.16} parent=49 // loop_body
          %v168 = vld [vmem:[#allocation2] sm:$0xff]
          %v169 = vlaneseq
          %v170 = vshrl.u32 %v169, 7
          %v172 = vstv %s163
          %vm173 = vcmp.gt.s32.totalorder %v170, %v172
          %vm174 = vcmp.lt.s32.totalorder %v170, 3
          %vm175 = vmand %vm173, %vm174
          %v176 = vsel %vm175, %v168, 0.0
          %v177 = vmul.f32 %v176, %v176
          %v178 = vrot.slane %v177, 4
          %v179 = vadd.f32 %v177, %v178
          %v180 = vrot.slane %v179, 2
          %v181 = vadd.f32 %v179, %v180
          %v182 = vrot.slane %v181, 1
          %v183 = vadd.f32 %v181, %v182
          %v184 = vrsqrt.pop %v183
          %v185 = vmul.f32 %v184, %v183
          %v186 = vmul.f32 %v185, %v184
          %v187 = vmul.f32 0.5, %v186
          %v188 = vsub.f32 1.5, %v187
          %v189 = vmul.f32 %v184, %v188
          %v190 = vmul.f32 %v183, %v189
          %vm191 = vcmp.eq.f32.partialorder %v183, inf
          %v192 = vsel %vm191, %v183, %v190
          %vm193 = vcmp.eq.f32.partialorder %v183, 0.0
          %v194 = vand.u32 %v183, 2147483648
          %v195 = vsel %vm193, %v194, %v192
          %vm196 = vcmp.eq.f32.partialorder %v183, 0.0
          %s197 = sshrl.u32 %s163, 3
          %s198 = sand.u32 %s163, 7
          %s199 = smul.addr %s197, 8
          %s200 = sadd.s32 %s198, %s199
          %s201 = scalar_lea.vmem [#allocation2], %s200
          %v202 = vld [vmem:[%s201] ss:$0 sm:$0xff]
          %v203 = vand.u32 2147483647, %v202
          %v204 = vmax.f32 %v203, 0.0
          %v205 = vand.u32 2147483647, %v195
          %v206 = vmax.f32 %v204, %v205
          %v207 = vrcp.pop %v206
          %v208 = vmul.f32 %v206, %v207
          %v209 = vsub.f32 1.0, %v208
          %v210 = vmul.f32 %v207, %v209
          %v211 = vadd.f32 %v207, %v210
          %vm212 = vweird.f32 %v206
          %vm213 = vweird.f32 %v207
          %vm214 = vmor %vm212, %vm213
          %v215 = vsel %vm214, %v207, %v211
          %v216 = vand.u32 2147483647, %v206
          %vm217 = vcmp.eq.f32.partialorder %v216, 8.507059e+37
          %v218 = vand.u32 %v206, 2147483648
          %v219 = vor.u32 1.1754944e-38, %v218
          %v220 = vsel %vm217, %v219, %v215
          %v221 = vmul.f32 %v203, %v220
          %v222 = vmul.f32 %v221, %v221
          %v223 = vrcp.pop %v206
          %v224 = vmul.f32 %v206, %v223
          %v225 = vsub.f32 1.0, %v224
          %v226 = vmul.f32 %v223, %v225
          %v227 = vadd.f32 %v223, %v226
          %vm228 = vweird.f32 %v206
          %vm229 = vweird.f32 %v223
          %vm230 = vmor %vm228, %vm229
          %v231 = vsel %vm230, %v223, %v227
          %v232 = vand.u32 2147483647, %v206
          %vm233 = vcmp.eq.f32.partialorder %v232, 8.507059e+37
          %v234 = vand.u32 %v206, 2147483648
          %v235 = vor.u32 1.1754944e-38, %v234
          %v236 = vsel %vm233, %v235, %v231
          %v237 = vmul.f32 0.0, %v236
          %v238 = vmul.f32 %v237, %v237
          %v239 = vadd.f32 %v222, %v238
          %v240 = vrcp.pop %v206
          %v241 = vmul.f32 %v206, %v240
          %v242 = vsub.f32 1.0, %v241
          %v243 = vmul.f32 %v240, %v242
          %v244 = vadd.f32 %v240, %v243
          %vm245 = vweird.f32 %v206
          %vm246 = vweird.f32 %v240
          %vm247 = vmor %vm245, %vm246
          %v248 = vsel %vm247, %v240, %v244
          %v249 = vand.u32 2147483647, %v206
          %vm250 = vcmp.eq.f32.partialorder %v249, 8.507059e+37
          %v251 = vand.u32 %v206, 2147483648
          %v252 = vor.u32 1.1754944e-38, %v251
          %v253 = vsel %vm250, %v252, %v248
          %v254 = vmul.f32 %v205, %v253
          %v255 = vmul.f32 %v254, %v254
          %v256 = vadd.f32 %v239, %v255
          %vm257 = vcmp.eq.f32.partialorder %v206, 0.0
          %v258 = vrsqrt.pop %v256
          %v259 = vmul.f32 %v258, %v256
          %v260 = vmul.f32 %v259, %v258
          %v261 = vmul.f32 0.5, %v260
          %v262 = vsub.f32 1.5, %v261
          %v263 = vmul.f32 %v258, %v262
          %v264 = vmul.f32 %v256, %v263
          %vm265 = vcmp.eq.f32.partialorder %v256, inf
          %v266 = vsel %vm265, %v256, %v264
          %vm267 = vcmp.eq.f32.partialorder %v256, 0.0
          %v268 = vand.u32 %v256, 2147483648
          %v269 = vsel %vm267, %v268, %v266
          %v270 = vmul.f32 %v206, %v269
          %v271 = vsel %vm257, 0.0, %v270
          %vm272 = vcmp.lt.f32.partialorder %v202, 0.0
          %v273 = vxor.u32 %v271, 2147483648
          %v274 = vsel %vm272, %v271, %v273
          %v275 = vsub.f32 %v274, %v202
          %v276 = vrcp.pop %v274
          %v277 = vmul.f32 %v274, %v276
          %v278 = vsub.f32 1.0, %v277
          %v279 = vmul.f32 %v276, %v278
          %v280 = vadd.f32 %v276, %v279
          %vm281 = vweird.f32 %v274
          %vm282 = vweird.f32 %v276
          %vm283 = vmor %vm281, %vm282
          %v284 = vsel %vm283, %v276, %v280
          %v285 = vand.u32 2147483647, %v274
          %vm286 = vcmp.eq.f32.partialorder %v285, 8.507059e+37
          %v287 = vand.u32 %v274, 2147483648
          %v288 = vor.u32 1.1754944e-38, %v287
          %v289 = vsel %vm286, %v288, %v284
          %v290 = vmul.f32 %v275, %v289
          %v291 = vsel %vm196, %v202, %v274
          %v292 = vsel %vm196, 0.0, %v290
          %v293 = vsub.f32 %v202, %v291
          %s294 = smov [#allocation2]
          %v295 = vlaneseq
          %v296 = vshrl.u32 %v295, 7
          %v297 = vmov %v296
          %v298 = vld [vmem:[%s294] sm:$0xff]
          %v300 = vstv %s163
          %vm301 = vcmp.gt.s32.totalorder %v297, %v300
          %vm302 = vcmp.lt.s32.totalorder %v297, 3
          %vm303 = vmand %vm301, %vm302
          %v304 = vsel %vm303, %v298, 0.0
          %v305 = vrcp.pop %v293
          %v306 = vmul.f32 %v293, %v305
          %v307 = vsub.f32 1.0, %v306
          %v308 = vmul.f32 %v305, %v307
          %v309 = vadd.f32 %v305, %v308
          %vm310 = vweird.f32 %v293
          %vm311 = vweird.f32 %v305
          %vm312 = vmor %vm310, %vm311
          %v313 = vsel %vm312, %v305, %v309
          %v314 = vand.u32 2147483647, %v293
          %vm315 = vcmp.eq.f32.partialorder %v314, 8.507059e+37
          %v316 = vand.u32 %v293, 2147483648
          %v317 = vor.u32 1.1754944e-38, %v316
          %v318 = vsel %vm315, %v317, %v313
          %v319 = vmul.f32 %v304, %v318
          %v320 = vsel %vm196, 0.0, %v319
          %v321 = vstv %s163
          %v322 = vlaneseq
          %v323 = vand.u32 %v322, 127
          %vm324 = vcmp.eq.s32.totalorder %v323, %v321
          %v325 = vsel %vm324, %v320, 0.0
          %326 = vadd.xlane.f32.xlu0 %v325
          %v327 = vpop.xlane.xlu0 %326
          %328 = vst [vmem:[#allocation6] sm:$0xff] %v327
          %s329 = scalar_lea.vmem [#allocation6], %s163
          %330 = vst [vmem:[%s329] sm:$0x1] 1.0
          %v331 = vstv %s163
          %v332 = vlaneseq
          %v333 = vand.u32 %v332, 127
          %vm334 = vcmp.eq.s32.totalorder %v333, %v331
          %v335 = vsel %vm334, %v292, 0.0
          %336 = vadd.xlane.f32.xlu0 %v335
          %v337 = vpop.xlane.xlu0 %336
          %v338 = vstv %s163
          %v339 = vlaneseq
          %v340 = vand.u32 %v339, 127
          %vm341 = vcmp.eq.s32.totalorder %v340, %v338
          %v342 = vld [vmem:[%s158] ss:$0 sm:$0xff]
          %v343 = vsel %vm341, %v337, %v342
          %344 = vst [vmem:[%s158] sm:$0x1] %v343
          %s345 = smov [#allocation2]
          %s346 = smov [#allocation6]
          %v347 = vlaneseq
          %v348 = vshrl.u32 %v347, 7
          %v349 = vmov %v348
          %v351 = vld [vmem:[%s346] sm:$0xff]
          %v352 = vld [vmem:[%s345] sm:$0xff]
          %v353 = vmul.f32 %v351, %v352
          %vm354 = vcmp.lt.s32.totalorder %v349, 3
          %v355 = vsel %vm354, %v353, 0.0
          %v356 = vrot.slane %v355, 4
          %v357 = vadd.f32 %v355, %v356
          %v358 = vrot.slane %v357, 2
          %v359 = vadd.f32 %v357, %v358
          %v360 = vrot.slane %v359, 1
          %v361 = vadd.f32 %v359, %v360
          %s362 = smov %s345
          %s363 = smov %s346
          %v364 = vlaneseq
          %v365 = vshrl.u32 %v364, 7
          %v366 = vmov %v365
          %v367 = vmul.f32 %v361, %v337
          %v369 = vlaneseq
          %v370 = vand.u32 %v369, 127
          %v371 = vld [vmem:[%s363] sm:$0xff]
          %v372 = vmul.f32 %v371, %v367
          %v373 = vld [vmem:[%s362] sm:$0xff]
          %v374 = vstv %s163
          %vm375 = vcmp.gt.s32.totalorder %v370, %v374
          %v376 = vsub.f32 %v373, %v372
          %v377 = vsel %vm375, %v376, %v373
          %v378 = vstv %s163
          %v379 = vlaneseq
          %v380 = vand.u32 %v379, 127
          %vm381 = vcmp.eq.s32.totalorder %v380, %v378
          %v382 = vstv %s163
          %vm383 = vcmp.ge.s32.totalorder %v366, %v382
          %vm384 = vmand %vm381, %vm383
          %v385 = vsel %vm384, %v371, %v377
          %386 = vst [vmem:[%s362] sm:$0xff] %v385
          %s387 = scalar_lea.vmem %s362, %s163
          %v388 = vld [vmem:[%s387] ss:$0 sm:$0xff]
          %v389 = vstv %s163
          %v390 = vlaneseq
          %v391 = vand.u32 %v390, 127
          %vm392 = vcmp.eq.s32.totalorder %v391, %v389
          %v393 = vsel %vm392, %v291, %v388
          %394 = vst [vmem:[%s387] sm:$0x1] %v393
        $region55: #{custom-call.16} parent=49 // loop_footer
          %s167 = sadd.s32 1, %s163
        $region56: #{custom-call.16} parent=49 // loop_footer_branch
          %162 = sbr.rel target = $region52
        $region57: #{custom-call.16} parent=49 // loop_exit
          _
        %s396 = ssub.s32 16, 1
        %v397 = vld [vmem:[#allocation2] sm:%s396]
        %s399 = ssub.s32 16, 1
        %400 = vst [vmem:[%s140] sm:%s399] %v397
        %s402 = ssub.s32 4, 1
        %v403 = vld [vmem:[#allocation4] sm:%s402]
        %s405 = ssub.s32 4, 1
        %406 = vst [vmem:[%s146] sm:%s405] %v403
        %s407 = sand.u32 %s10, 1
        %s408 = sand.u32 %s10, 1
        %s409 = smul.addr %s408, 4
        %s410 = scalar_lea.vmem [#allocation3], %s409
        %s411 = sand.u32 %s49, 1
        %s412 = sand.u32 %s49, 1
        %s413 = smul.addr %s412, 2
        %s414 = scalar_lea.vmem [#allocation5], %s413
        %s415 = sadd.s32 %s17, %s16
        %s416 = sadd.s32 %s415, %s15
        %s417 = smul.addr %s416, 4
        %s418 = scalar_lea.vmem %s1, %s417
        // Predicated region
        $region58: #{custom-call.16} parent=49 // pred_check
          _
        $region59: #{custom-call.16} parent=49 // pred_check_branch
          %420 = sbr.rel (0) target = $region61
        $region60: #{custom-call.16} parent=49 // pred_region
          // Predicated region
          $region62: #{custom-call.16} parent=60 // pred_check
            _
          $region63: #{custom-call.16} parent=60 // pred_check_branch
            %422 = sbr.rel target = $region65
          $region64: #{custom-call.16} parent=60 // pred_region
            // Predicated region
            $region77: #{custom-call.16} parent=64 // pred_check
              _
            $region78: #{custom-call.16} parent=64 // pred_check_branch
              %438 = sbr.rel (0) target = $region80
            $region79: #{custom-call.16} parent=64 // pred_region
              %s440 = ssub.s32 16, 1
              loop: start=0, step=1, limit=1
              $region81: #{custom-call.16} parent=79 // loop_pre_header
                _
              $region82: #{custom-call.16} parent=79 // loop_header
                %s442 = sphi 0, %s446
                %p443 = scmp.ge.s32.totalorder %s442, 1
                %s447 = sphi %s410, %s410
                %s448 = sphi %s418, %s418
              $region83: #{custom-call.16} parent=79 // loop_header_branch
                %445 = sbr.rel (%p443) target = $region87
              $region84: #{custom-call.16} parent=79 // loop_body
                %v449 = vld [vmem:[%s447] sm:%s440]
                %450 = vst [vmem:[%s448] sm:%s440] %v449
              $region85: #{custom-call.16} parent=79 // loop_footer
                %s446 = sadd.s32 1, %s442
              $region86: #{custom-call.16} parent=79 // loop_footer_branch
                %441 = sbr.rel target = $region82
              $region87: #{custom-call.16} parent=79 // loop_exit
                _
            $region80: #{custom-call.16} parent=64 // pred_fallthru
              _
          $region65: #{custom-call.16} parent=60 // pred_fallthru
            _
          // Predicated region
          $region66: #{custom-call.16} parent=60 // pred_check
            _
          $region67: #{custom-call.16} parent=60 // pred_check_branch
            %424 = sbr.rel (0) target = $region69
          $region68: #{custom-call.16} parent=60 // pred_region
            %s426 = ssub.s32 16, 1
            loop: start=0, step=1, limit=1
            $region70: #{custom-call.16} parent=68 // loop_pre_header
              _
            $region71: #{custom-call.16} parent=68 // loop_header
              %s428 = sphi 0, %s432
              %p429 = scmp.ge.s32.totalorder %s428, 1
              %s433 = sphi %s410, %s410
              %s434 = sphi %s418, %s418
            $region72: #{custom-call.16} parent=68 // loop_header_branch
              %431 = sbr.rel (%p429) target = $region76
            $region73: #{custom-call.16} parent=68 // loop_body
              %v435 = vld [vmem:[%s433] sm:%s426]
              %436 = vst [vmem:[%s434] sm:%s426] %v435
            $region74: #{custom-call.16} parent=68 // loop_footer
              %s432 = sadd.s32 1, %s428
            $region75: #{custom-call.16} parent=68 // loop_footer_branch
              %427 = sbr.rel target = $region71
            $region76: #{custom-call.16} parent=68 // loop_exit
              _
          $region69: #{custom-call.16} parent=60 // pred_fallthru
            _
        $region61: #{custom-call.16} parent=49 // pred_fallthru
          _
        %451 = vnop
        // Predicated region
        $region88: #{custom-call.16} parent=49 // pred_check
          %p452 = pneg %p59
        $region89: #{custom-call.16} parent=49 // pred_check_branch
          %454 = sbr.rel (%p452) target = $region91
        $region90: #{custom-call.16} parent=49 // pred_region
          %p455 = scmp.lt.s32.totalorder %s15, 0
          %s456 = ssub.s32 0, %s15
          %s457 = scalar_select %p455, %s456, %s15
          %s458 = sshrl.u32 %s457, 3
          %s459 = ssub.s32 0, %s458
          %s460 = scalar_select %p455, %s459, %s458
          %s461 = smul.addr %s460, 2
          %s462 = scalar_lea.vmem %s2, %s461
          // Predicated region
          $region92: #{custom-call.16} parent=90 // pred_check
            _
          $region93: #{custom-call.16} parent=90 // pred_check_branch
            %464 = sbr.rel (0) target = $region95
          $region94: #{custom-call.16} parent=90 // pred_region
            // Predicated region
            $region96: #{custom-call.16} parent=94 // pred_check
              _
            $region97: #{custom-call.16} parent=94 // pred_check_branch
              %466 = sbr.rel target = $region99
            $region98: #{custom-call.16} parent=94 // pred_region
              // Predicated region
              $region111: #{custom-call.16} parent=98 // pred_check
                _
              $region112: #{custom-call.16} parent=98 // pred_check_branch
                %482 = sbr.rel (0) target = $region114
              $region113: #{custom-call.16} parent=98 // pred_region
                %s484 = ssub.s32 4, 1
                loop: start=0, step=1, limit=1
                $region115: #{custom-call.16} parent=113 // loop_pre_header
                  _
                $region116: #{custom-call.16} parent=113 // loop_header
                  %s486 = sphi 0, %s490
                  %p487 = scmp.ge.s32.totalorder %s486, 1
                  %s491 = sphi %s414, %s414
                  %s492 = sphi %s462, %s462
                $region117: #{custom-call.16} parent=113 // loop_header_branch
                  %489 = sbr.rel (%p487) target = $region121
                $region118: #{custom-call.16} parent=113 // loop_body
                  %v493 = vld [vmem:[%s491] sm:%s484]
                  %494 = vst [vmem:[%s492] sm:%s484] %v493
                $region119: #{custom-call.16} parent=113 // loop_footer
                  %s490 = sadd.s32 1, %s486
                $region120: #{custom-call.16} parent=113 // loop_footer_branch
                  %485 = sbr.rel target = $region116
                $region121: #{custom-call.16} parent=113 // loop_exit
                  _
              $region114: #{custom-call.16} parent=98 // pred_fallthru
                _
            $region99: #{custom-call.16} parent=94 // pred_fallthru
              _
            // Predicated region
            $region100: #{custom-call.16} parent=94 // pred_check
              _
            $region101: #{custom-call.16} parent=94 // pred_check_branch
              %468 = sbr.rel (0) target = $region103
            $region102: #{custom-call.16} parent=94 // pred_region
              %s470 = ssub.s32 4, 1
              loop: start=0, step=1, limit=1
              $region104: #{custom-call.16} parent=102 // loop_pre_header
                _
              $region105: #{custom-call.16} parent=102 // loop_header
                %s472 = sphi 0, %s476
                %p473 = scmp.ge.s32.totalorder %s472, 1
                %s477 = sphi %s414, %s414
                %s478 = sphi %s462, %s462
              $region106: #{custom-call.16} parent=102 // loop_header_branch
                %475 = sbr.rel (%p473) target = $region110
              $region107: #{custom-call.16} parent=102 // loop_body
                %v479 = vld [vmem:[%s477] sm:%s470]
                %480 = vst [vmem:[%s478] sm:%s470] %v479
              $region108: #{custom-call.16} parent=102 // loop_footer
                %s476 = sadd.s32 1, %s472
              $region109: #{custom-call.16} parent=102 // loop_footer_branch
                %471 = sbr.rel target = $region105
              $region110: #{custom-call.16} parent=102 // loop_exit
                _
            $region103: #{custom-call.16} parent=94 // pred_fallthru
              _
          $region95: #{custom-call.16} parent=90 // pred_fallthru
            _
          %495 = vnop
        $region91: #{custom-call.16} parent=49 // pred_fallthru
          _
      $region50: #{custom-call.16} parent=5 // pred_fallthru
        _
      %p496 = scmp.le.s32.totalorder 2, %s5
      // Predicated region
      $region122: #{custom-call.16} parent=5 // pred_check
        %p497 = pneg %p496
      $region123: #{custom-call.16} parent=5 // pred_check_branch
        %499 = sbr.rel (%p497) target = $region125
      $region124: #{custom-call.16} parent=5 // pred_region
        %s500 = ssub.s32 %s5, 2
        %s501 = sand.u32 %s11, 1
        %s502 = sand.u32 %s11, 1
        %s503 = smul.addr %s502, 4
        %s504 = scalar_lea.vmem [#allocation3], %s503
        // Predicated region
        $region126: #{custom-call.16} parent=124 // pred_check
          %p505 = pneg %p65
        $region127: #{custom-call.16} parent=124 // pred_check_branch
          %507 = sbr.rel (%p505) target = $region129
        $region128: #{custom-call.16} parent=124 // pred_region
          %s508 = sand.u32 %s50, 1
          %s509 = sand.u32 %s50, 1
          %s510 = smul.addr %s509, 2
          %s511 = scalar_lea.vmem [#allocation5], %s510
        $region129: #{custom-call.16} parent=124 // pred_fallthru
          _
      $region125: #{custom-call.16} parent=5 // pred_fallthru
        _
    $region6: #{custom-call.16} parent=1 // loop_footer
      %s9 = sadd.s32 1, %s5
    $region7: #{custom-call.16} parent=1 // loop_footer_branch
      %4 = sbr.rel target = $region3
    $region8: #{custom-call.16} parent=1 // loop_exit
      _

// kernel: mul.81
$region0: #{mul.81}
  #allocation0 [shape = 's32[1]{0}', space=sflag, size = 0x4, scoped, tag = 'scoped memory for mul.81']
  %s0 = inlined_call_operand.vmem [shape: f32[2], index: 0, kind: input, shape index: {}]
  %s1 = inlined_call_operand.vmem [shape: f32[2], index: 1, kind: input, shape index: {}]
  %s2 = inlined_call_operand.vmem [shape: f32[2], index: 2, kind: output, shape index: {}]
  %v3 = vld [vmem:[%s0] sm:$0x1]
  %v4 = vld [vmem:[%s1] sm:$0x1]
  %5 = xla_tuple %v3, %v4
  %6 = xla_tuple %5
  %v7 = vmul.f32 %v3, %v4
  %8 = xla_tuple %v7
  %9 = vst [vmem:[%s2] sm:$0x1] %v7

</llo_original>
